<compile_context>
chip_gen: v5e
topology: v5e:2x2
jax: 0.10.0
libtpu: 0.0.40
codegen_flags: <defaults>
</compile_context>

<pallas_src>
import functools

import jax
import jax.numpy as jnp
import numpy as np
from jax.experimental import pallas as pl
from jax.experimental.pallas import tpu as pltpu


# ----------------------------------------------------------------------------
# Fused kernel: QKV projection + attention + output projection
# ----------------------------------------------------------------------------
def _fused_mha_kernel(*refs, num_heads, head_dim, time_block, compute_dtype,
                      return_attention):
    """Processes one (batch, time-block) slice entirely in VMEM."""
    (xq_ref, xk_ref, xv_ref,
     wq_ref, wk_ref, wv_ref, wo_ref,
     bq_ref, bk_ref, bv_ref, bo_ref) = refs[:11]
    out_ref = refs[11]
    attn_ref = refs[12] if return_attention else None
    vals_scratch = refs[-1]                    # VMEM (E, S) f32

    H, D = num_heads, head_dim
    cd = compute_dtype
    scale = 1.0 / float(D) ** 0.5

    # Weights are grid-resident (constant index_map); load/cast once per step.
    wq = wq_ref[...].astype(cd)
    wk = wk_ref[...].astype(cd)
    wv = wv_ref[...].astype(cd)
    wo = wo_ref[...].astype(cd)
    bq = bq_ref[...]                           # (E, 1) f32
    bk = bk_ref[...]
    bv = bv_ref[...]
    bo = bo_ref[...]

    for tt in range(time_block):               # static unroll, time_block small
        xq = xq_ref[0, :, tt, :].astype(cd)    # (E, S) channel-major tile
        xk = xk_ref[0, :, tt, :].astype(cd)
        xv = xv_ref[0, :, tt, :].astype(cd)

        # Grouped 1x1 conv == channel matmul; torch (E_out, E_in) layout is
        # consumed as-is (out = W @ x + b); f32 accumulation on the MXU.
        q = jnp.dot(wq, xq, preferred_element_type=jnp.float32) + bq   # (E, S)
        k = jnp.dot(wk, xk, preferred_element_type=jnp.float32) + bk
        v = jnp.dot(wv, xv, preferred_element_type=jnp.float32) + bv

        for h in range(H):
            qh = q[h * D:(h + 1) * D, :].astype(cd)    # (D, S)
            kh = k[h * D:(h + 1) * D, :].astype(cd)
            vh = v[h * D:(h + 1) * D, :].astype(cd)

            # logits[q_idx, k_idx] = <q[:, q_idx], k[:, k_idx]> / sqrt(D)
            logits = jnp.dot(qh.T, kh,
                             preferred_element_type=jnp.float32) * scale  # (S,S)
            m = jnp.max(logits, axis=-1, keepdims=True)
            e = jnp.exp(logits - m)                     # softmax kept in f32
            attn = e * pl.reciprocal(jnp.sum(e, axis=-1, keepdims=True),
                                     approx=False)
            if attn_ref is not None:
                attn_ref[0, h, tt, :, :] = attn.astype(attn_ref.dtype)

            # values[d, q_idx] = sum_k v[d, k] * attn[q_idx, k]
            vals_scratch[h * D:(h + 1) * D, :] = jnp.dot(
                vh, attn.astype(cd).T, preferred_element_type=jnp.float32)

        out = jnp.dot(wo, vals_scratch[...].astype(cd),
                      preferred_element_type=jnp.float32) + bo
        out_ref[0, :, tt, :] = out.astype(out_ref.dtype)


# ----------------------------------------------------------------------------
# Tiling choice
# ----------------------------------------------------------------------------
def _choose_time_block(embed_dim, time_length, seq_length, num_heads,
                       return_attention, budget_bytes=4 * 1024 * 1024):
    """Time slices per grid step: amortize the ~0.35us per-step overhead while
    keeping the double-buffered working set well under VMEM (incl. v7x 64 MiB).
    Must divide time_length (avoids partial second-minor blocks)."""
    s_pad = -(-seq_length // 128) * 128                  # lane padding
    per_t = 2 * 4 * embed_dim * s_pad * 4                # q/k/v in + out, 2x buffered
    if return_attention:
        per_t += 2 * num_heads * max(seq_length, 8) * s_pad * 4
    tb = int(max(1, min(time_length, budget_bytes // max(per_t, 1), 8)))
    while time_length % tb:
        tb -= 1
    return tb


# ----------------------------------------------------------------------------
# Forward pass (single fused pallas_call, no XLA-side relayouts)
# ----------------------------------------------------------------------------
@functools.partial(
    jax.jit, static_argnames=("num_heads", "compute_dtype", "return_attention"))
def multihead_attention_forward(key_x, query_x, value_x, params, num_heads,
                                compute_dtype=jnp.float32,
                                return_attention=True):
    B, E, T, S = value_x.shape
    H = num_heads
    D = E // H
    TB = _choose_time_block(E, T, S, H, return_attention)

    kernel = functools.partial(
        _fused_mha_kernel, num_heads=H, head_dim=D, time_block=TB,
        compute_dtype=compute_dtype, return_attention=return_attention)

    x_spec = pl.BlockSpec((1, E, TB, S), lambda b, t: (b, 0, t, 0))
    w_spec = pl.BlockSpec((E, E), lambda b, t: (0, 0))
    bias_spec = pl.BlockSpec((E, 1), lambda b, t: (0, 0))
    out_spec = pl.BlockSpec((1, E, TB, S), lambda b, t: (b, 0, t, 0))

    if return_attention:
        out_shape = (jax.ShapeDtypeStruct((B, E, T, S), value_x.dtype),
                     jax.ShapeDtypeStruct((B, H, T, S, S), jnp.float32))
        out_specs = (out_spec,
                     pl.BlockSpec((1, H, TB, S, S),
                                  lambda b, t: (b, 0, t, 0, 0)))
    else:
        out_shape = jax.ShapeDtypeStruct((B, E, T, S), value_x.dtype)
        out_specs = out_spec

    return pl.pallas_call(
        kernel,
        out_shape=out_shape,
        grid_spec=pltpu.PrefetchScalarGridSpec(
            num_scalar_prefetch=0,
            grid=(B, T // TB),
            in_specs=[x_spec, x_spec, x_spec,
                      w_spec, w_spec, w_spec, w_spec,
                      bias_spec, bias_spec, bias_spec, bias_spec],
            out_specs=out_specs,
            scratch_shapes=[pltpu.VMEM((E, S), jnp.float32)]),
        compiler_params=pltpu.CompilerParams(
            dimension_semantics=("parallel", "parallel"),
            vmem_limit_bytes=32 * 1024 * 1024),
    )(query_x, key_x, value_x,
      params["wq"], params["wk"], params["wv"], params["wo"],
      params["bq"].reshape(E, 1), params["bk"].reshape(E, 1),
      params["bv"].reshape(E, 1), params["bo"].reshape(E, 1))


# ----------------------------------------------------------------------------
# Deterministic parameter init (mimics xavier_uniform_ + zero bias)
# ----------------------------------------------------------------------------
def init_params(rng, embed_dim):
    E = embed_dim

    def xavier(key, shape, fan_in, fan_out):
        bound = (6.0 / (fan_in + fan_out)) ** 0.5
        return jax.random.uniform(key, shape, jnp.float32, -bound, bound)

    k1, k2 = jax.random.split(rng)
    # qkv_proj: Conv2d(3E, 3E, 1, groups=3) -> weight (3E, E, 1, 1)
    w_qkv = xavier(k1, (3 * E, E), fan_in=E, fan_out=3 * E)
    # output_proj: Conv2d(E, E, 1) -> weight (E, E, 1, 1)
    w_o = xavier(k2, (E, E), fan_in=E, fan_out=E)
    return {
        "wq": w_qkv[0:E],
        "wk": w_qkv[E:2 * E],
        "wv": w_qkv[2 * E:3 * E],
        "bq": jnp.zeros((E,), jnp.float32),
        "bk": jnp.zeros((E,), jnp.float32),
        "bv": jnp.zeros((E,), jnp.float32),
        "wo": w_o,
        "bo": jnp.zeros((E,), jnp.float32),
    }


# ----------------------------------------------------------------------------
# Pure-JAX reference (mirrors the PyTorch forward) for verification
# ----------------------------------------------------------------------------
def reference_forward(key_x, query_x, value_x, params, num_heads):
    B, E, T, S = value_x.shape
    H = num_heads
    D = E // H

    def conv1x1(x, w, b):
        return jnp.einsum("oc,bcts->bots", w, x) + b[None, :, None, None]

    q = conv1x1(query_x, params["wq"], params["bq"])
    k = conv1x1(key_x, params["wk"], params["bk"])
    v = conv1x1(value_x, params["wv"], params["bv"])

    def split(x):
        return x.reshape(B, H, D, T, S).transpose(0, 1, 3, 4, 2)

    q, k, v = split(q), split(k), split(v)
    logits = jnp.einsum("bhtqd,bhtkd->bhtqk", q, k) / (D ** 0.5)
    attn = jax.nn.softmax(logits, axis=-1)
    vals = jnp.einsum("bhtqk,bhtkd->bhtqd", attn, v)
    vals = vals.transpose(0, 1, 4, 2, 3).reshape(B, E, T, S)
    out = conv1x1(vals, params["wo"], params["bo"])
    return out, attn


# ----------------------------------------------------------------------------
if __name__ == "__main__":
    B, E, H, T, S = 2, 32, 4, 4, 8  # embed_dim=32, num_heads=4 -> head_dim=8

    root = jax.random.PRNGKey(0)
    kp, kq, kk, kv, kc = jax.random.split(root, 5)

    params = init_params(kp, E)
    query = jax.random.normal(kq, (B, E, T, S), jnp.float32)
    key_in = jax.random.normal(kk, (B, E, T, S), jnp.float32)
    value = jax.random.normal(kv, (B, E, T, S), jnp.float32)
    coord = jax.random.normal(kc, (B, 2, T, S), jnp.float32)  # unused by forward

    ref_out, ref_attn = reference_forward(key_in, query, value, params, H)

    # Full-precision path (f32 everywhere).
    out, attn = multihead_attention_forward(key_in, query, value, params, H)
    out = jax.block_until_ready(out)
    attn = jax.block_until_ready(attn)
    assert out.shape == (B, E, T, S)
    assert attn.shape == (B, H, T, S, S)
    np.testing.assert_allclose(np.asarray(out), np.asarray(ref_out),
                               rtol=1e-5, atol=1e-5)
    np.testing.assert_allclose(np.asarray(attn), np.asarray(ref_attn),
                               rtol=1e-5, atol=1e-5)

    # bf16 MXU operands, f32 accumulation + f32 softmax (v6e/v7x perf path).
    out_bf, attn_bf = multihead_attention_forward(
        key_in, query, value, params, H, compute_dtype=jnp.bfloat16)
    out_bf = jax.block_until_ready(out_bf)
    np.testing.assert_allclose(np.asarray(out_bf), np.asarray(ref_out),
                               rtol=5e-2, atol=5e-2)
    np.testing.assert_allclose(np.asarray(attn_bf), np.asarray(ref_attn),
                               rtol=5e-2, atol=5e-2)

    # Attention-matrix writeback disabled (skips the O(S^2) HBM store).
    out_only = multihead_attention_forward(
        key_in, query, value, params, H, return_attention=False)
    out_only = jax.block_until_ready(out_only)
    np.testing.assert_allclose(np.asarray(out_only), np.asarray(ref_out),
                               rtol=1e-5, atol=1e-5)

    print("KERNEL_OK")
</pallas_src>

<mosaic_0001>
module attributes {stable_mosaic.version = 11 : i64} {
  func.func @_fused_mha_kernel(%arg0: i32, %arg1: i32, %arg2: memref<1x32x4x8xf32, #tpu.memory_space<vmem>>, %arg3: memref<1x32x4x8xf32, #tpu.memory_space<vmem>>, %arg4: memref<1x32x4x8xf32, #tpu.memory_space<vmem>>, %arg5: memref<32x32xf32, #tpu.memory_space<vmem>>, %arg6: memref<32x32xf32, #tpu.memory_space<vmem>>, %arg7: memref<32x32xf32, #tpu.memory_space<vmem>>, %arg8: memref<32x32xf32, #tpu.memory_space<vmem>>, %arg9: memref<32x1xf32, #tpu.memory_space<vmem>>, %arg10: memref<32x1xf32, #tpu.memory_space<vmem>>, %arg11: memref<32x1xf32, #tpu.memory_space<vmem>>, %arg12: memref<32x1xf32, #tpu.memory_space<vmem>>, %arg13: memref<1x32x4x8xf32, #tpu.memory_space<vmem>>, %arg14: memref<1x4x4x8x8xf32, #tpu.memory_space<vmem>>, %arg15: memref<32x8xf32, #tpu.memory_space<vmem>>) attributes {dimension_semantics = [#tpu.dimension_semantics<parallel>, #tpu.dimension_semantics<parallel>], iteration_bounds = array<i64: 2, 1>, scalar_prefetch = 0 : i64, scratch_operands = 1 : i64, tpu.core_type = #tpu.core_type<tc>, window_params = [{transform_indices = @transform_0, window_bounds = array<i64: 1, 32, 4, 8>}, {transform_indices = @transform_1, window_bounds = array<i64: 1, 32, 4, 8>}, {transform_indices = @transform_2, window_bounds = array<i64: 1, 32, 4, 8>}, {pipeline_mode = #tpu.pipeline_mode<synchronous>, transform_indices = @transform_3, window_bounds = array<i64: 32, 32>}, {pipeline_mode = #tpu.pipeline_mode<synchronous>, transform_indices = @transform_4, window_bounds = array<i64: 32, 32>}, {pipeline_mode = #tpu.pipeline_mode<synchronous>, transform_indices = @transform_5, window_bounds = array<i64: 32, 32>}, {pipeline_mode = #tpu.pipeline_mode<synchronous>, transform_indices = @transform_6, window_bounds = array<i64: 32, 32>}, {pipeline_mode = #tpu.pipeline_mode<synchronous>, transform_indices = @transform_7, window_bounds = array<i64: 32, 1>}, {pipeline_mode = #tpu.pipeline_mode<synchronous>, transform_indices = @transform_8, window_bounds = array<i64: 32, 1>}, {pipeline_mode = #tpu.pipeline_mode<synchronous>, transform_indices = @transform_9, window_bounds = array<i64: 32, 1>}, {pipeline_mode = #tpu.pipeline_mode<synchronous>, transform_indices = @transform_10, window_bounds = array<i64: 32, 1>}, {transform_indices = @transform_11, window_bounds = array<i64: 1, 32, 4, 8>}, {transform_indices = @transform_12, window_bounds = array<i64: 1, 4, 4, 8, 8>}]} {
    %c0 = arith.constant 0 : index
    %c0_0 = arith.constant 0 : index
    %0 = vector.load %arg5[%c0, %c0_0] : memref<32x32xf32, #tpu.memory_space<vmem>>, vector<32x32xf32>
    %c0_1 = arith.constant 0 : index
    %c0_2 = arith.constant 0 : index
    %1 = vector.load %arg6[%c0_1, %c0_2] : memref<32x32xf32, #tpu.memory_space<vmem>>, vector<32x32xf32>
    %c0_3 = arith.constant 0 : index
    %c0_4 = arith.constant 0 : index
    %2 = vector.load %arg7[%c0_3, %c0_4] : memref<32x32xf32, #tpu.memory_space<vmem>>, vector<32x32xf32>
    %c0_5 = arith.constant 0 : index
    %c0_6 = arith.constant 0 : index
    %3 = vector.load %arg8[%c0_5, %c0_6] : memref<32x32xf32, #tpu.memory_space<vmem>>, vector<32x32xf32>
    %c0_7 = arith.constant 0 : index
    %c0_8 = arith.constant 0 : index
    %4 = vector.load %arg9[%c0_7, %c0_8] : memref<32x1xf32, #tpu.memory_space<vmem>>, vector<32x1xf32>
    %c0_9 = arith.constant 0 : index
    %c0_10 = arith.constant 0 : index
    %5 = vector.load %arg10[%c0_9, %c0_10] : memref<32x1xf32, #tpu.memory_space<vmem>>, vector<32x1xf32>
    %c0_11 = arith.constant 0 : index
    %c0_12 = arith.constant 0 : index
    %6 = vector.load %arg11[%c0_11, %c0_12] : memref<32x1xf32, #tpu.memory_space<vmem>>, vector<32x1xf32>
    %c0_13 = arith.constant 0 : index
    %c0_14 = arith.constant 0 : index
    %7 = vector.load %arg12[%c0_13, %c0_14] : memref<32x1xf32, #tpu.memory_space<vmem>>, vector<32x1xf32>
    %c0_15 = arith.constant 0 : index
    %c0_16 = arith.constant 0 : index
    %c0_17 = arith.constant 0 : index
    %c0_18 = arith.constant 0 : index
    %8 = vector.load %arg2[%c0_15, %c0_16, %c0_17, %c0_18] : memref<1x32x4x8xf32, #tpu.memory_space<vmem>>, vector<1x32x1x8xf32>
    %9 = vector.shape_cast %8 : vector<1x32x1x8xf32> to vector<32x8xf32>
    %c0_19 = arith.constant 0 : index
    %c0_20 = arith.constant 0 : index
    %c0_21 = arith.constant 0 : index
    %c0_22 = arith.constant 0 : index
    %10 = vector.load %arg3[%c0_19, %c0_20, %c0_21, %c0_22] : memref<1x32x4x8xf32, #tpu.memory_space<vmem>>, vector<1x32x1x8xf32>
    %11 = vector.shape_cast %10 : vector<1x32x1x8xf32> to vector<32x8xf32>
    %c0_23 = arith.constant 0 : index
    %c0_24 = arith.constant 0 : index
    %c0_25 = arith.constant 0 : index
    %c0_26 = arith.constant 0 : index
    %12 = vector.load %arg4[%c0_23, %c0_24, %c0_25, %c0_26] : memref<1x32x4x8xf32, #tpu.memory_space<vmem>>, vector<1x32x1x8xf32>
    %13 = vector.shape_cast %12 : vector<1x32x1x8xf32> to vector<32x8xf32>
    %cst = arith.constant dense<0.000000e+00> : vector<32x8xf32>
    %14 = tpu.matmul %0, %9, %cst {dimension_numbers = #tpu.dot_dimension_numbers<[1], [0], [0], [1], [0, 0, 1, 1], [], []>} : vector<32x32xf32>, vector<32x8xf32>, vector<32x8xf32> -> vector<32x8xf32>
    %15 = vector.broadcast %4 : vector<32x1xf32> to vector<32x8xf32>
    %16 = arith.addf %14, %15 : vector<32x8xf32>
    %cst_27 = arith.constant dense<0.000000e+00> : vector<32x8xf32>
    %17 = tpu.matmul %1, %11, %cst_27 {dimension_numbers = #tpu.dot_dimension_numbers<[1], [0], [0], [1], [0, 0, 1, 1], [], []>} : vector<32x32xf32>, vector<32x8xf32>, vector<32x8xf32> -> vector<32x8xf32>
    %18 = vector.broadcast %5 : vector<32x1xf32> to vector<32x8xf32>
    %19 = arith.addf %17, %18 : vector<32x8xf32>
    %cst_28 = arith.constant dense<0.000000e+00> : vector<32x8xf32>
    %20 = tpu.matmul %2, %13, %cst_28 {dimension_numbers = #tpu.dot_dimension_numbers<[1], [0], [0], [1], [0, 0, 1, 1], [], []>} : vector<32x32xf32>, vector<32x8xf32>, vector<32x8xf32> -> vector<32x8xf32>
    %21 = vector.broadcast %6 : vector<32x1xf32> to vector<32x8xf32>
    %22 = arith.addf %20, %21 : vector<32x8xf32>
    %23 = vector.extract_strided_slice %16 {offsets = [0, 0], sizes = [8, 8], strides = [1, 1]} : vector<32x8xf32> to vector<8x8xf32>
    %24 = vector.extract_strided_slice %19 {offsets = [0, 0], sizes = [8, 8], strides = [1, 1]} : vector<32x8xf32> to vector<8x8xf32>
    %25 = vector.extract_strided_slice %22 {offsets = [0, 0], sizes = [8, 8], strides = [1, 1]} : vector<32x8xf32> to vector<8x8xf32>
    %26 = tpu.transpose %23, [1, 0] : vector<8x8xf32> -> vector<8x8xf32>
    %cst_29 = arith.constant dense<0.000000e+00> : vector<8x8xf32>
    %27 = tpu.matmul %26, %24, %cst_29 {dimension_numbers = #tpu.dot_dimension_numbers<[1], [0], [0], [1], [0, 0, 1, 1], [], []>} : vector<8x8xf32>, vector<8x8xf32>, vector<8x8xf32> -> vector<8x8xf32>
    %cst_30 = arith.constant 0.353553385 : f32
    %28 = vector.broadcast %cst_30 : f32 to vector<8x8xf32>
    %29 = arith.mulf %27, %28 : vector<8x8xf32>
    %cst_31 = arith.constant dense<0xFF800000> : vector<8xf32>
    %30 = vector.multi_reduction <maximumf>, %29, %cst_31 [1] : vector<8x8xf32> to vector<8xf32>
    %31 = vector.shape_cast %30 : vector<8xf32> to vector<8x1xf32>
    %32 = vector.broadcast %31 : vector<8x1xf32> to vector<8x8xf32>
    %33 = arith.subf %29, %32 : vector<8x8xf32>
    %34 = math.exp %33 : vector<8x8xf32>
    %cst_32 = arith.constant dense<0.000000e+00> : vector<8xf32>
    %35 = vector.multi_reduction <add>, %34, %cst_32 [1] : vector<8x8xf32> to vector<8xf32>
    %36 = vector.shape_cast %35 : vector<8xf32> to vector<8x1xf32>
    %37 = tpu.reciprocal %36 : vector<8x1xf32> -> vector<8x1xf32>
    %38 = vector.broadcast %37 : vector<8x1xf32> to vector<8x8xf32>
    %39 = arith.mulf %34, %38 : vector<8x8xf32>
    %c0_33 = arith.constant 0 : index
    %c0_34 = arith.constant 0 : index
    %c0_35 = arith.constant 0 : index
    %c0_36 = arith.constant 0 : index
    %c0_37 = arith.constant 0 : index
    %40 = vector.load %arg14[%c0_33, %c0_34, %c0_35, %c0_36, %c0_37] : memref<1x4x4x8x8xf32, #tpu.memory_space<vmem>>, vector<1x1x1x8x8xf32>
    %41 = vector.shape_cast %40 : vector<1x1x1x8x8xf32> to vector<8x8xf32>
    %42 = vector.shape_cast %39 : vector<8x8xf32> to vector<1x1x1x8x8xf32>
    tpu.vector_store %arg14[%c0_33, %c0_34, %c0_35, %c0_36, %c0_37], %42 {strides = array<i32>} : memref<1x4x4x8x8xf32, #tpu.memory_space<vmem>>, vector<1x1x1x8x8xf32>,
    %43 = tpu.transpose %39, [1, 0] : vector<8x8xf32> -> vector<8x8xf32>
    %cst_38 = arith.constant dense<0.000000e+00> : vector<8x8xf32>
    %44 = tpu.matmul %25, %43, %cst_38 {dimension_numbers = #tpu.dot_dimension_numbers<[1], [0], [0], [1], [0, 0, 1, 1], [], []>} : vector<8x8xf32>, vector<8x8xf32>, vector<8x8xf32> -> vector<8x8xf32>
    %c0_39 = arith.constant 0 : index
    %c0_40 = arith.constant 0 : index
    %45 = vector.load %arg15[%c0_39, %c0_40] : memref<32x8xf32, #tpu.memory_space<vmem>>, vector<8x8xf32>
    tpu.vector_store %arg15[%c0_39, %c0_40], %44 {strides = array<i32>} : memref<32x8xf32, #tpu.memory_space<vmem>>, vector<8x8xf32>,
    %46 = vector.extract_strided_slice %16 {offsets = [8, 0], sizes = [8, 8], strides = [1, 1]} : vector<32x8xf32> to vector<8x8xf32>
    %47 = vector.extract_strided_slice %19 {offsets = [8, 0], sizes = [8, 8], strides = [1, 1]} : vector<32x8xf32> to vector<8x8xf32>
    %48 = vector.extract_strided_slice %22 {offsets = [8, 0], sizes = [8, 8], strides = [1, 1]} : vector<32x8xf32> to vector<8x8xf32>
    %49 = tpu.transpose %46, [1, 0] : vector<8x8xf32> -> vector<8x8xf32>
    %cst_41 = arith.constant dense<0.000000e+00> : vector<8x8xf32>
    %50 = tpu.matmul %49, %47, %cst_41 {dimension_numbers = #tpu.dot_dimension_numbers<[1], [0], [0], [1], [0, 0, 1, 1], [], []>} : vector<8x8xf32>, vector<8x8xf32>, vector<8x8xf32> -> vector<8x8xf32>
    %cst_42 = arith.constant 0.353553385 : f32
    %51 = vector.broadcast %cst_42 : f32 to vector<8x8xf32>
    %52 = arith.mulf %50, %51 : vector<8x8xf32>
    %cst_43 = arith.constant dense<0xFF800000> : vector<8xf32>
    %53 = vector.multi_reduction <maximumf>, %52, %cst_43 [1] : vector<8x8xf32> to vector<8xf32>
    %54 = vector.shape_cast %53 : vector<8xf32> to vector<8x1xf32>
    %55 = vector.broadcast %54 : vector<8x1xf32> to vector<8x8xf32>
    %56 = arith.subf %52, %55 : vector<8x8xf32>
    %57 = math.exp %56 : vector<8x8xf32>
    %cst_44 = arith.constant dense<0.000000e+00> : vector<8xf32>
    %58 = vector.multi_reduction <add>, %57, %cst_44 [1] : vector<8x8xf32> to vector<8xf32>
    %59 = vector.shape_cast %58 : vector<8xf32> to vector<8x1xf32>
    %60 = tpu.reciprocal %59 : vector<8x1xf32> -> vector<8x1xf32>
    %61 = vector.broadcast %60 : vector<8x1xf32> to vector<8x8xf32>
    %62 = arith.mulf %57, %61 : vector<8x8xf32>
    %c0_45 = arith.constant 0 : index
    %c1 = arith.constant 1 : index
    %c0_46 = arith.constant 0 : index
    %c0_47 = arith.constant 0 : index
    %c0_48 = arith.constant 0 : index
    %63 = vector.load %arg14[%c0_45, %c1, %c0_46, %c0_47, %c0_48] : memref<1x4x4x8x8xf32, #tpu.memory_space<vmem>>, vector<1x1x1x8x8xf32>
    %64 = vector.shape_cast %63 : vector<1x1x1x8x8xf32> to vector<8x8xf32>
    %65 = vector.shape_cast %62 : vector<8x8xf32> to vector<1x1x1x8x8xf32>
    tpu.vector_store %arg14[%c0_45, %c1, %c0_46, %c0_47, %c0_48], %65 {strides = array<i32>} : memref<1x4x4x8x8xf32, #tpu.memory_space<vmem>>, vector<1x1x1x8x8xf32>,
    %66 = tpu.transpose %62, [1, 0] : vector<8x8xf32> -> vector<8x8xf32>
    %cst_49 = arith.constant dense<0.000000e+00> : vector<8x8xf32>
    %67 = tpu.matmul %48, %66, %cst_49 {dimension_numbers = #tpu.dot_dimension_numbers<[1], [0], [0], [1], [0, 0, 1, 1], [], []>} : vector<8x8xf32>, vector<8x8xf32>, vector<8x8xf32> -> vector<8x8xf32>
    %c8 = arith.constant 8 : index
    %c0_50 = arith.constant 0 : index
    %68 = vector.load %arg15[%c8, %c0_50] : memref<32x8xf32, #tpu.memory_space<vmem>>, vector<8x8xf32>
    tpu.vector_store %arg15[%c8, %c0_50], %67 {strides = array<i32>} : memref<32x8xf32, #tpu.memory_space<vmem>>, vector<8x8xf32>,
    %69 = vector.extract_strided_slice %16 {offsets = [16, 0], sizes = [8, 8], strides = [1, 1]} : vector<32x8xf32> to vector<8x8xf32>
    %70 = vector.extract_strided_slice %19 {offsets = [16, 0], sizes = [8, 8], strides = [1, 1]} : vector<32x8xf32> to vector<8x8xf32>
    %71 = vector.extract_strided_slice %22 {offsets = [16, 0], sizes = [8, 8], strides = [1, 1]} : vector<32x8xf32> to vector<8x8xf32>
    %72 = tpu.transpose %69, [1, 0] : vector<8x8xf32> -> vector<8x8xf32>
    %cst_51 = arith.constant dense<0.000000e+00> : vector<8x8xf32>
    %73 = tpu.matmul %72, %70, %cst_51 {dimension_numbers = #tpu.dot_dimension_numbers<[1], [0], [0], [1], [0, 0, 1, 1], [], []>} : vector<8x8xf32>, vector<8x8xf32>, vector<8x8xf32> -> vector<8x8xf32>
    %cst_52 = arith.constant 0.353553385 : f32
    %74 = vector.broadcast %cst_52 : f32 to vector<8x8xf32>
    %75 = arith.mulf %73, %74 : vector<8x8xf32>
    %cst_53 = arith.constant dense<0xFF800000> : vector<8xf32>
    %76 = vector.multi_reduction <maximumf>, %75, %cst_53 [1] : vector<8x8xf32> to vector<8xf32>
    %77 = vector.shape_cast %76 : vector<8xf32> to vector<8x1xf32>
    %78 = vector.broadcast %77 : vector<8x1xf32> to vector<8x8xf32>
    %79 = arith.subf %75, %78 : vector<8x8xf32>
    %80 = math.exp %79 : vector<8x8xf32>
    %cst_54 = arith.constant dense<0.000000e+00> : vector<8xf32>
    %81 = vector.multi_reduction <add>, %80, %cst_54 [1] : vector<8x8xf32> to vector<8xf32>
    %82 = vector.shape_cast %81 : vector<8xf32> to vector<8x1xf32>
    %83 = tpu.reciprocal %82 : vector<8x1xf32> -> vector<8x1xf32>
    %84 = vector.broadcast %83 : vector<8x1xf32> to vector<8x8xf32>
    %85 = arith.mulf %80, %84 : vector<8x8xf32>
    %c0_55 = arith.constant 0 : index
    %c2 = arith.constant 2 : index
    %c0_56 = arith.constant 0 : index
    %c0_57 = arith.constant 0 : index
    %c0_58 = arith.constant 0 : index
    %86 = vector.load %arg14[%c0_55, %c2, %c0_56, %c0_57, %c0_58] : memref<1x4x4x8x8xf32, #tpu.memory_space<vmem>>, vector<1x1x1x8x8xf32>
    %87 = vector.shape_cast %86 : vector<1x1x1x8x8xf32> to vector<8x8xf32>
    %88 = vector.shape_cast %85 : vector<8x8xf32> to vector<1x1x1x8x8xf32>
    tpu.vector_store %arg14[%c0_55, %c2, %c0_56, %c0_57, %c0_58], %88 {strides = array<i32>} : memref<1x4x4x8x8xf32, #tpu.memory_space<vmem>>, vector<1x1x1x8x8xf32>,
    %89 = tpu.transpose %85, [1, 0] : vector<8x8xf32> -> vector<8x8xf32>
    %cst_59 = arith.constant dense<0.000000e+00> : vector<8x8xf32>
    %90 = tpu.matmul %71, %89, %cst_59 {dimension_numbers = #tpu.dot_dimension_numbers<[1], [0], [0], [1], [0, 0, 1, 1], [], []>} : vector<8x8xf32>, vector<8x8xf32>, vector<8x8xf32> -> vector<8x8xf32>
    %c16 = arith.constant 16 : index
    %c0_60 = arith.constant 0 : index
    %91 = vector.load %arg15[%c16, %c0_60] : memref<32x8xf32, #tpu.memory_space<vmem>>, vector<8x8xf32>
    tpu.vector_store %arg15[%c16, %c0_60], %90 {strides = array<i32>} : memref<32x8xf32, #tpu.memory_space<vmem>>, vector<8x8xf32>,
    %92 = vector.extract_strided_slice %16 {offsets = [24, 0], sizes = [8, 8], strides = [1, 1]} : vector<32x8xf32> to vector<8x8xf32>
    %93 = vector.extract_strided_slice %19 {offsets = [24, 0], sizes = [8, 8], strides = [1, 1]} : vector<32x8xf32> to vector<8x8xf32>
    %94 = vector.extract_strided_slice %22 {offsets = [24, 0], sizes = [8, 8], strides = [1, 1]} : vector<32x8xf32> to vector<8x8xf32>
    %95 = tpu.transpose %92, [1, 0] : vector<8x8xf32> -> vector<8x8xf32>
    %cst_61 = arith.constant dense<0.000000e+00> : vector<8x8xf32>
    %96 = tpu.matmul %95, %93, %cst_61 {dimension_numbers = #tpu.dot_dimension_numbers<[1], [0], [0], [1], [0, 0, 1, 1], [], []>} : vector<8x8xf32>, vector<8x8xf32>, vector<8x8xf32> -> vector<8x8xf32>
    %cst_62 = arith.constant 0.353553385 : f32
    %97 = vector.broadcast %cst_62 : f32 to vector<8x8xf32>
    %98 = arith.mulf %96, %97 : vector<8x8xf32>
    %cst_63 = arith.constant dense<0xFF800000> : vector<8xf32>
    %99 = vector.multi_reduction <maximumf>, %98, %cst_63 [1] : vector<8x8xf32> to vector<8xf32>
    %100 = vector.shape_cast %99 : vector<8xf32> to vector<8x1xf32>
    %101 = vector.broadcast %100 : vector<8x1xf32> to vector<8x8xf32>
    %102 = arith.subf %98, %101 : vector<8x8xf32>
    %103 = math.exp %102 : vector<8x8xf32>
    %cst_64 = arith.constant dense<0.000000e+00> : vector<8xf32>
    %104 = vector.multi_reduction <add>, %103, %cst_64 [1] : vector<8x8xf32> to vector<8xf32>
    %105 = vector.shape_cast %104 : vector<8xf32> to vector<8x1xf32>
    %106 = tpu.reciprocal %105 : vector<8x1xf32> -> vector<8x1xf32>
    %107 = vector.broadcast %106 : vector<8x1xf32> to vector<8x8xf32>
    %108 = arith.mulf %103, %107 : vector<8x8xf32>
    %c0_65 = arith.constant 0 : index
    %c3 = arith.constant 3 : index
    %c0_66 = arith.constant 0 : index
    %c0_67 = arith.constant 0 : index
    %c0_68 = arith.constant 0 : index
    %109 = vector.load %arg14[%c0_65, %c3, %c0_66, %c0_67, %c0_68] : memref<1x4x4x8x8xf32, #tpu.memory_space<vmem>>, vector<1x1x1x8x8xf32>
    %110 = vector.shape_cast %109 : vector<1x1x1x8x8xf32> to vector<8x8xf32>
    %111 = vector.shape_cast %108 : vector<8x8xf32> to vector<1x1x1x8x8xf32>
    tpu.vector_store %arg14[%c0_65, %c3, %c0_66, %c0_67, %c0_68], %111 {strides = array<i32>} : memref<1x4x4x8x8xf32, #tpu.memory_space<vmem>>, vector<1x1x1x8x8xf32>,
    %112 = tpu.transpose %108, [1, 0] : vector<8x8xf32> -> vector<8x8xf32>
    %cst_69 = arith.constant dense<0.000000e+00> : vector<8x8xf32>
    %113 = tpu.matmul %94, %112, %cst_69 {dimension_numbers = #tpu.dot_dimension_numbers<[1], [0], [0], [1], [0, 0, 1, 1], [], []>} : vector<8x8xf32>, vector<8x8xf32>, vector<8x8xf32> -> vector<8x8xf32>
    %c24 = arith.constant 24 : index
    %c0_70 = arith.constant 0 : index
    %114 = vector.load %arg15[%c24, %c0_70] : memref<32x8xf32, #tpu.memory_space<vmem>>, vector<8x8xf32>
    tpu.vector_store %arg15[%c24, %c0_70], %113 {strides = array<i32>} : memref<32x8xf32, #tpu.memory_space<vmem>>, vector<8x8xf32>,
    %c0_71 = arith.constant 0 : index
    %c0_72 = arith.constant 0 : index
    %115 = vector.load %arg15[%c0_71, %c0_72] : memref<32x8xf32, #tpu.memory_space<vmem>>, vector<32x8xf32>
    %cst_73 = arith.constant dense<0.000000e+00> : vector<32x8xf32>
    %116 = tpu.matmul %3, %115, %cst_73 {dimension_numbers = #tpu.dot_dimension_numbers<[1], [0], [0], [1], [0, 0, 1, 1], [], []>} : vector<32x32xf32>, vector<32x8xf32>, vector<32x8xf32> -> vector<32x8xf32>
    %117 = vector.broadcast %7 : vector<32x1xf32> to vector<32x8xf32>
    %118 = arith.addf %116, %117 : vector<32x8xf32>
    %c0_74 = arith.constant 0 : index
    %c0_75 = arith.constant 0 : index
    %c0_76 = arith.constant 0 : index
    %c0_77 = arith.constant 0 : index
    %119 = vector.load %arg13[%c0_74, %c0_75, %c0_76, %c0_77] : memref<1x32x4x8xf32, #tpu.memory_space<vmem>>, vector<1x32x1x8xf32>
    %120 = vector.shape_cast %119 : vector<1x32x1x8xf32> to vector<32x8xf32>
    %121 = vector.shape_cast %118 : vector<32x8xf32> to vector<1x32x1x8xf32>
    tpu.vector_store %arg13[%c0_74, %c0_75, %c0_76, %c0_77], %121 {strides = array<i32>} : memref<1x32x4x8xf32, #tpu.memory_space<vmem>>, vector<1x32x1x8xf32>,
    %c0_78 = arith.constant 0 : index
    %c0_79 = arith.constant 0 : index
    %c1_80 = arith.constant 1 : index
    %c0_81 = arith.constant 0 : index
    %122 = vector.load %arg2[%c0_78, %c0_79, %c1_80, %c0_81] : memref<1x32x4x8xf32, #tpu.memory_space<vmem>>, vector<1x32x1x8xf32>
    %123 = vector.shape_cast %122 : vector<1x32x1x8xf32> to vector<32x8xf32>
    %c0_82 = arith.constant 0 : index
    %c0_83 = arith.constant 0 : index
    %c1_84 = arith.constant 1 : index
    %c0_85 = arith.constant 0 : index
    %124 = vector.load %arg3[%c0_82, %c0_83, %c1_84, %c0_85] : memref<1x32x4x8xf32, #tpu.memory_space<vmem>>, vector<1x32x1x8xf32>
    %125 = vector.shape_cast %124 : vector<1x32x1x8xf32> to vector<32x8xf32>
    %c0_86 = arith.constant 0 : index
    %c0_87 = arith.constant 0 : index
    %c1_88 = arith.constant 1 : index
    %c0_89 = arith.constant 0 : index
    %126 = vector.load %arg4[%c0_86, %c0_87, %c1_88, %c0_89] : memref<1x32x4x8xf32, #tpu.memory_space<vmem>>, vector<1x32x1x8xf32>
    %127 = vector.shape_cast %126 : vector<1x32x1x8xf32> to vector<32x8xf32>
    %cst_90 = arith.constant dense<0.000000e+00> : vector<32x8xf32>
    %128 = tpu.matmul %0, %123, %cst_90 {dimension_numbers = #tpu.dot_dimension_numbers<[1], [0], [0], [1], [0, 0, 1, 1], [], []>} : vector<32x32xf32>, vector<32x8xf32>, vector<32x8xf32> -> vector<32x8xf32>
    %129 = vector.broadcast %4 : vector<32x1xf32> to vector<32x8xf32>
    %130 = arith.addf %128, %129 : vector<32x8xf32>
    %cst_91 = arith.constant dense<0.000000e+00> : vector<32x8xf32>
    %131 = tpu.matmul %1, %125, %cst_91 {dimension_numbers = #tpu.dot_dimension_numbers<[1], [0], [0], [1], [0, 0, 1, 1], [], []>} : vector<32x32xf32>, vector<32x8xf32>, vector<32x8xf32> -> vector<32x8xf32>
    %132 = vector.broadcast %5 : vector<32x1xf32> to vector<32x8xf32>
    %133 = arith.addf %131, %132 : vector<32x8xf32>
    %cst_92 = arith.constant dense<0.000000e+00> : vector<32x8xf32>
    %134 = tpu.matmul %2, %127, %cst_92 {dimension_numbers = #tpu.dot_dimension_numbers<[1], [0], [0], [1], [0, 0, 1, 1], [], []>} : vector<32x32xf32>, vector<32x8xf32>, vector<32x8xf32> -> vector<32x8xf32>
    %135 = vector.broadcast %6 : vector<32x1xf32> to vector<32x8xf32>
    %136 = arith.addf %134, %135 : vector<32x8xf32>
    %137 = vector.extract_strided_slice %130 {offsets = [0, 0], sizes = [8, 8], strides = [1, 1]} : vector<32x8xf32> to vector<8x8xf32>
    %138 = vector.extract_strided_slice %133 {offsets = [0, 0], sizes = [8, 8], strides = [1, 1]} : vector<32x8xf32> to vector<8x8xf32>
    %139 = vector.extract_strided_slice %136 {offsets = [0, 0], sizes = [8, 8], strides = [1, 1]} : vector<32x8xf32> to vector<8x8xf32>
    %140 = tpu.transpose %137, [1, 0] : vector<8x8xf32> -> vector<8x8xf32>
    %cst_93 = arith.constant dense<0.000000e+00> : vector<8x8xf32>
    %141 = tpu.matmul %140, %138, %cst_93 {dimension_numbers = #tpu.dot_dimension_numbers<[1], [0], [0], [1], [0, 0, 1, 1], [], []>} : vector<8x8xf32>, vector<8x8xf32>, vector<8x8xf32> -> vector<8x8xf32>
    %cst_94 = arith.constant 0.353553385 : f32
    %142 = vector.broadcast %cst_94 : f32 to vector<8x8xf32>
    %143 = arith.mulf %141, %142 : vector<8x8xf32>
    %cst_95 = arith.constant dense<0xFF800000> : vector<8xf32>
    %144 = vector.multi_reduction <maximumf>, %143, %cst_95 [1] : vector<8x8xf32> to vector<8xf32>
    %145 = vector.shape_cast %144 : vector<8xf32> to vector<8x1xf32>
    %146 = vector.broadcast %145 : vector<8x1xf32> to vector<8x8xf32>
    %147 = arith.subf %143, %146 : vector<8x8xf32>
    %148 = math.exp %147 : vector<8x8xf32>
    %cst_96 = arith.constant dense<0.000000e+00> : vector<8xf32>
    %149 = vector.multi_reduction <add>, %148, %cst_96 [1] : vector<8x8xf32> to vector<8xf32>
    %150 = vector.shape_cast %149 : vector<8xf32> to vector<8x1xf32>
    %151 = tpu.reciprocal %150 : vector<8x1xf32> -> vector<8x1xf32>
    %152 = vector.broadcast %151 : vector<8x1xf32> to vector<8x8xf32>
    %153 = arith.mulf %148, %152 : vector<8x8xf32>
    %c0_97 = arith.constant 0 : index
    %c0_98 = arith.constant 0 : index
    %c1_99 = arith.constant 1 : index
    %c0_100 = arith.constant 0 : index
    %c0_101 = arith.constant 0 : index
    %154 = vector.load %arg14[%c0_97, %c0_98, %c1_99, %c0_100, %c0_101] : memref<1x4x4x8x8xf32, #tpu.memory_space<vmem>>, vector<1x1x1x8x8xf32>
    %155 = vector.shape_cast %154 : vector<1x1x1x8x8xf32> to vector<8x8xf32>
    %156 = vector.shape_cast %153 : vector<8x8xf32> to vector<1x1x1x8x8xf32>
    tpu.vector_store %arg14[%c0_97, %c0_98, %c1_99, %c0_100, %c0_101], %156 {strides = array<i32>} : memref<1x4x4x8x8xf32, #tpu.memory_space<vmem>>, vector<1x1x1x8x8xf32>,
    %157 = tpu.transpose %153, [1, 0] : vector<8x8xf32> -> vector<8x8xf32>
    %cst_102 = arith.constant dense<0.000000e+00> : vector<8x8xf32>
    %158 = tpu.matmul %139, %157, %cst_102 {dimension_numbers = #tpu.dot_dimension_numbers<[1], [0], [0], [1], [0, 0, 1, 1], [], []>} : vector<8x8xf32>, vector<8x8xf32>, vector<8x8xf32> -> vector<8x8xf32>
    %c0_103 = arith.constant 0 : index
    %c0_104 = arith.constant 0 : index
    %159 = vector.load %arg15[%c0_103, %c0_104] : memref<32x8xf32, #tpu.memory_space<vmem>>, vector<8x8xf32>
    tpu.vector_store %arg15[%c0_103, %c0_104], %158 {strides = array<i32>} : memref<32x8xf32, #tpu.memory_space<vmem>>, vector<8x8xf32>,
    %160 = vector.extract_strided_slice %130 {offsets = [8, 0], sizes = [8, 8], strides = [1, 1]} : vector<32x8xf32> to vector<8x8xf32>
    %161 = vector.extract_strided_slice %133 {offsets = [8, 0], sizes = [8, 8], strides = [1, 1]} : vector<32x8xf32> to vector<8x8xf32>
    %162 = vector.extract_strided_slice %136 {offsets = [8, 0], sizes = [8, 8], strides = [1, 1]} : vector<32x8xf32> to vector<8x8xf32>
    %163 = tpu.transpose %160, [1, 0] : vector<8x8xf32> -> vector<8x8xf32>
    %cst_105 = arith.constant dense<0.000000e+00> : vector<8x8xf32>
    %164 = tpu.matmul %163, %161, %cst_105 {dimension_numbers = #tpu.dot_dimension_numbers<[1], [0], [0], [1], [0, 0, 1, 1], [], []>} : vector<8x8xf32>, vector<8x8xf32>, vector<8x8xf32> -> vector<8x8xf32>
    %cst_106 = arith.constant 0.353553385 : f32
    %165 = vector.broadcast %cst_106 : f32 to vector<8x8xf32>
    %166 = arith.mulf %164, %165 : vector<8x8xf32>
    %cst_107 = arith.constant dense<0xFF800000> : vector<8xf32>
    %167 = vector.multi_reduction <maximumf>, %166, %cst_107 [1] : vector<8x8xf32> to vector<8xf32>
    %168 = vector.shape_cast %167 : vector<8xf32> to vector<8x1xf32>
    %169 = vector.broadcast %168 : vector<8x1xf32> to vector<8x8xf32>
    %170 = arith.subf %166, %169 : vector<8x8xf32>
    %171 = math.exp %170 : vector<8x8xf32>
    %cst_108 = arith.constant dense<0.000000e+00> : vector<8xf32>
    %172 = vector.multi_reduction <add>, %171, %cst_108 [1] : vector<8x8xf32> to vector<8xf32>
    %173 = vector.shape_cast %172 : vector<8xf32> to vector<8x1xf32>
    %174 = tpu.reciprocal %173 : vector<8x1xf32> -> vector<8x1xf32>
    %175 = vector.broadcast %174 : vector<8x1xf32> to vector<8x8xf32>
    %176 = arith.mulf %171, %175 : vector<8x8xf32>
    %c0_109 = arith.constant 0 : index
    %c1_110 = arith.constant 1 : index
    %c1_111 = arith.constant 1 : index
    %c0_112 = arith.constant 0 : index
    %c0_113 = arith.constant 0 : index
    %177 = vector.load %arg14[%c0_109, %c1_110, %c1_111, %c0_112, %c0_113] : memref<1x4x4x8x8xf32, #tpu.memory_space<vmem>>, vector<1x1x1x8x8xf32>
    %178 = vector.shape_cast %177 : vector<1x1x1x8x8xf32> to vector<8x8xf32>
    %179 = vector.shape_cast %176 : vector<8x8xf32> to vector<1x1x1x8x8xf32>
    tpu.vector_store %arg14[%c0_109, %c1_110, %c1_111, %c0_112, %c0_113], %179 {strides = array<i32>} : memref<1x4x4x8x8xf32, #tpu.memory_space<vmem>>, vector<1x1x1x8x8xf32>,
    %180 = tpu.transpose %176, [1, 0] : vector<8x8xf32> -> vector<8x8xf32>
    %cst_114 = arith.constant dense<0.000000e+00> : vector<8x8xf32>
    %181 = tpu.matmul %162, %180, %cst_114 {dimension_numbers = #tpu.dot_dimension_numbers<[1], [0], [0], [1], [0, 0, 1, 1], [], []>} : vector<8x8xf32>, vector<8x8xf32>, vector<8x8xf32> -> vector<8x8xf32>
    %c8_115 = arith.constant 8 : index
    %c0_116 = arith.constant 0 : index
    %182 = vector.load %arg15[%c8_115, %c0_116] : memref<32x8xf32, #tpu.memory_space<vmem>>, vector<8x8xf32>
    tpu.vector_store %arg15[%c8_115, %c0_116], %181 {strides = array<i32>} : memref<32x8xf32, #tpu.memory_space<vmem>>, vector<8x8xf32>,
    %183 = vector.extract_strided_slice %130 {offsets = [16, 0], sizes = [8, 8], strides = [1, 1]} : vector<32x8xf32> to vector<8x8xf32>
    %184 = vector.extract_strided_slice %133 {offsets = [16, 0], sizes = [8, 8], strides = [1, 1]} : vector<32x8xf32> to vector<8x8xf32>
    %185 = vector.extract_strided_slice %136 {offsets = [16, 0], sizes = [8, 8], strides = [1, 1]} : vector<32x8xf32> to vector<8x8xf32>
    %186 = tpu.transpose %183, [1, 0] : vector<8x8xf32> -> vector<8x8xf32>
    %cst_117 = arith.constant dense<0.000000e+00> : vector<8x8xf32>
    %187 = tpu.matmul %186, %184, %cst_117 {dimension_numbers = #tpu.dot_dimension_numbers<[1], [0], [0], [1], [0, 0, 1, 1], [], []>} : vector<8x8xf32>, vector<8x8xf32>, vector<8x8xf32> -> vector<8x8xf32>
    %cst_118 = arith.constant 0.353553385 : f32
    %188 = vector.broadcast %cst_118 : f32 to vector<8x8xf32>
    %189 = arith.mulf %187, %188 : vector<8x8xf32>
    %cst_119 = arith.constant dense<0xFF800000> : vector<8xf32>
    %190 = vector.multi_reduction <maximumf>, %189, %cst_119 [1] : vector<8x8xf32> to vector<8xf32>
    %191 = vector.shape_cast %190 : vector<8xf32> to vector<8x1xf32>
    %192 = vector.broadcast %191 : vector<8x1xf32> to vector<8x8xf32>
    %193 = arith.subf %189, %192 : vector<8x8xf32>
    %194 = math.exp %193 : vector<8x8xf32>
    %cst_120 = arith.constant dense<0.000000e+00> : vector<8xf32>
    %195 = vector.multi_reduction <add>, %194, %cst_120 [1] : vector<8x8xf32> to vector<8xf32>
    %196 = vector.shape_cast %195 : vector<8xf32> to vector<8x1xf32>
    %197 = tpu.reciprocal %196 : vector<8x1xf32> -> vector<8x1xf32>
    %198 = vector.broadcast %197 : vector<8x1xf32> to vector<8x8xf32>
    %199 = arith.mulf %194, %198 : vector<8x8xf32>
    %c0_121 = arith.constant 0 : index
    %c2_122 = arith.constant 2 : index
    %c1_123 = arith.constant 1 : index
    %c0_124 = arith.constant 0 : index
    %c0_125 = arith.constant 0 : index
    %200 = vector.load %arg14[%c0_121, %c2_122, %c1_123, %c0_124, %c0_125] : memref<1x4x4x8x8xf32, #tpu.memory_space<vmem>>, vector<1x1x1x8x8xf32>
    %201 = vector.shape_cast %200 : vector<1x1x1x8x8xf32> to vector<8x8xf32>
    %202 = vector.shape_cast %199 : vector<8x8xf32> to vector<1x1x1x8x8xf32>
    tpu.vector_store %arg14[%c0_121, %c2_122, %c1_123, %c0_124, %c0_125], %202 {strides = array<i32>} : memref<1x4x4x8x8xf32, #tpu.memory_space<vmem>>, vector<1x1x1x8x8xf32>,
    %203 = tpu.transpose %199, [1, 0] : vector<8x8xf32> -> vector<8x8xf32>
    %cst_126 = arith.constant dense<0.000000e+00> : vector<8x8xf32>
    %204 = tpu.matmul %185, %203, %cst_126 {dimension_numbers = #tpu.dot_dimension_numbers<[1], [0], [0], [1], [0, 0, 1, 1], [], []>} : vector<8x8xf32>, vector<8x8xf32>, vector<8x8xf32> -> vector<8x8xf32>
    %c16_127 = arith.constant 16 : index
    %c0_128 = arith.constant 0 : index
    %205 = vector.load %arg15[%c16_127, %c0_128] : memref<32x8xf32, #tpu.memory_space<vmem>>, vector<8x8xf32>
    tpu.vector_store %arg15[%c16_127, %c0_128], %204 {strides = array<i32>} : memref<32x8xf32, #tpu.memory_space<vmem>>, vector<8x8xf32>,
    %206 = vector.extract_strided_slice %130 {offsets = [24, 0], sizes = [8, 8], strides = [1, 1]} : vector<32x8xf32> to vector<8x8xf32>
    %207 = vector.extract_strided_slice %133 {offsets = [24, 0], sizes = [8, 8], strides = [1, 1]} : vector<32x8xf32> to vector<8x8xf32>
    %208 = vector.extract_strided_slice %136 {offsets = [24, 0], sizes = [8, 8], strides = [1, 1]} : vector<32x8xf32> to vector<8x8xf32>
    %209 = tpu.transpose %206, [1, 0] : vector<8x8xf32> -> vector<8x8xf32>
    %cst_129 = arith.constant dense<0.000000e+00> : vector<8x8xf32>
    %210 = tpu.matmul %209, %207, %cst_129 {dimension_numbers = #tpu.dot_dimension_numbers<[1], [0], [0], [1], [0, 0, 1, 1], [], []>} : vector<8x8xf32>, vector<8x8xf32>, vector<8x8xf32> -> vector<8x8xf32>
    %cst_130 = arith.constant 0.353553385 : f32
    %211 = vector.broadcast %cst_130 : f32 to vector<8x8xf32>
    %212 = arith.mulf %210, %211 : vector<8x8xf32>
    %cst_131 = arith.constant dense<0xFF800000> : vector<8xf32>
    %213 = vector.multi_reduction <maximumf>, %212, %cst_131 [1] : vector<8x8xf32> to vector<8xf32>
    %214 = vector.shape_cast %213 : vector<8xf32> to vector<8x1xf32>
    %215 = vector.broadcast %214 : vector<8x1xf32> to vector<8x8xf32>
    %216 = arith.subf %212, %215 : vector<8x8xf32>
    %217 = math.exp %216 : vector<8x8xf32>
    %cst_132 = arith.constant dense<0.000000e+00> : vector<8xf32>
    %218 = vector.multi_reduction <add>, %217, %cst_132 [1] : vector<8x8xf32> to vector<8xf32>
    %219 = vector.shape_cast %218 : vector<8xf32> to vector<8x1xf32>
    %220 = tpu.reciprocal %219 : vector<8x1xf32> -> vector<8x1xf32>
    %221 = vector.broadcast %220 : vector<8x1xf32> to vector<8x8xf32>
    %222 = arith.mulf %217, %221 : vector<8x8xf32>
    %c0_133 = arith.constant 0 : index
    %c3_134 = arith.constant 3 : index
    %c1_135 = arith.constant 1 : index
    %c0_136 = arith.constant 0 : index
    %c0_137 = arith.constant 0 : index
    %223 = vector.load %arg14[%c0_133, %c3_134, %c1_135, %c0_136, %c0_137] : memref<1x4x4x8x8xf32, #tpu.memory_space<vmem>>, vector<1x1x1x8x8xf32>
    %224 = vector.shape_cast %223 : vector<1x1x1x8x8xf32> to vector<8x8xf32>
    %225 = vector.shape_cast %222 : vector<8x8xf32> to vector<1x1x1x8x8xf32>
    tpu.vector_store %arg14[%c0_133, %c3_134, %c1_135, %c0_136, %c0_137], %225 {strides = array<i32>} : memref<1x4x4x8x8xf32, #tpu.memory_space<vmem>>, vector<1x1x1x8x8xf32>,
    %226 = tpu.transpose %222, [1, 0] : vector<8x8xf32> -> vector<8x8xf32>
    %cst_138 = arith.constant dense<0.000000e+00> : vector<8x8xf32>
    %227 = tpu.matmul %208, %226, %cst_138 {dimension_numbers = #tpu.dot_dimension_numbers<[1], [0], [0], [1], [0, 0, 1, 1], [], []>} : vector<8x8xf32>, vector<8x8xf32>, vector<8x8xf32> -> vector<8x8xf32>
    %c24_139 = arith.constant 24 : index
    %c0_140 = arith.constant 0 : index
    %228 = vector.load %arg15[%c24_139, %c0_140] : memref<32x8xf32, #tpu.memory_space<vmem>>, vector<8x8xf32>
    tpu.vector_store %arg15[%c24_139, %c0_140], %227 {strides = array<i32>} : memref<32x8xf32, #tpu.memory_space<vmem>>, vector<8x8xf32>,
    %c0_141 = arith.constant 0 : index
    %c0_142 = arith.constant 0 : index
    %229 = vector.load %arg15[%c0_141, %c0_142] : memref<32x8xf32, #tpu.memory_space<vmem>>, vector<32x8xf32>
    %cst_143 = arith.constant dense<0.000000e+00> : vector<32x8xf32>
    %230 = tpu.matmul %3, %229, %cst_143 {dimension_numbers = #tpu.dot_dimension_numbers<[1], [0], [0], [1], [0, 0, 1, 1], [], []>} : vector<32x32xf32>, vector<32x8xf32>, vector<32x8xf32> -> vector<32x8xf32>
    %231 = vector.broadcast %7 : vector<32x1xf32> to vector<32x8xf32>
    %232 = arith.addf %230, %231 : vector<32x8xf32>
    %c0_144 = arith.constant 0 : index
    %c0_145 = arith.constant 0 : index
    %c1_146 = arith.constant 1 : index
    %c0_147 = arith.constant 0 : index
    %233 = vector.load %arg13[%c0_144, %c0_145, %c1_146, %c0_147] : memref<1x32x4x8xf32, #tpu.memory_space<vmem>>, vector<1x32x1x8xf32>
    %234 = vector.shape_cast %233 : vector<1x32x1x8xf32> to vector<32x8xf32>
    %235 = vector.shape_cast %232 : vector<32x8xf32> to vector<1x32x1x8xf32>
    tpu.vector_store %arg13[%c0_144, %c0_145, %c1_146, %c0_147], %235 {strides = array<i32>} : memref<1x32x4x8xf32, #tpu.memory_space<vmem>>, vector<1x32x1x8xf32>,
    %c0_148 = arith.constant 0 : index
    %c0_149 = arith.constant 0 : index
    %c2_150 = arith.constant 2 : index
    %c0_151 = arith.constant 0 : index
    %236 = vector.load %arg2[%c0_148, %c0_149, %c2_150, %c0_151] : memref<1x32x4x8xf32, #tpu.memory_space<vmem>>, vector<1x32x1x8xf32>
    %237 = vector.shape_cast %236 : vector<1x32x1x8xf32> to vector<32x8xf32>
    %c0_152 = arith.constant 0 : index
    %c0_153 = arith.constant 0 : index
    %c2_154 = arith.constant 2 : index
    %c0_155 = arith.constant 0 : index
    %238 = vector.load %arg3[%c0_152, %c0_153, %c2_154, %c0_155] : memref<1x32x4x8xf32, #tpu.memory_space<vmem>>, vector<1x32x1x8xf32>
    %239 = vector.shape_cast %238 : vector<1x32x1x8xf32> to vector<32x8xf32>
    %c0_156 = arith.constant 0 : index
    %c0_157 = arith.constant 0 : index
    %c2_158 = arith.constant 2 : index
    %c0_159 = arith.constant 0 : index
    %240 = vector.load %arg4[%c0_156, %c0_157, %c2_158, %c0_159] : memref<1x32x4x8xf32, #tpu.memory_space<vmem>>, vector<1x32x1x8xf32>
    %241 = vector.shape_cast %240 : vector<1x32x1x8xf32> to vector<32x8xf32>
    %cst_160 = arith.constant dense<0.000000e+00> : vector<32x8xf32>
    %242 = tpu.matmul %0, %237, %cst_160 {dimension_numbers = #tpu.dot_dimension_numbers<[1], [0], [0], [1], [0, 0, 1, 1], [], []>} : vector<32x32xf32>, vector<32x8xf32>, vector<32x8xf32> -> vector<32x8xf32>
    %243 = vector.broadcast %4 : vector<32x1xf32> to vector<32x8xf32>
    %244 = arith.addf %242, %243 : vector<32x8xf32>
    %cst_161 = arith.constant dense<0.000000e+00> : vector<32x8xf32>
    %245 = tpu.matmul %1, %239, %cst_161 {dimension_numbers = #tpu.dot_dimension_numbers<[1], [0], [0], [1], [0, 0, 1, 1], [], []>} : vector<32x32xf32>, vector<32x8xf32>, vector<32x8xf32> -> vector<32x8xf32>
    %246 = vector.broadcast %5 : vector<32x1xf32> to vector<32x8xf32>
    %247 = arith.addf %245, %246 : vector<32x8xf32>
    %cst_162 = arith.constant dense<0.000000e+00> : vector<32x8xf32>
    %248 = tpu.matmul %2, %241, %cst_162 {dimension_numbers = #tpu.dot_dimension_numbers<[1], [0], [0], [1], [0, 0, 1, 1], [], []>} : vector<32x32xf32>, vector<32x8xf32>, vector<32x8xf32> -> vector<32x8xf32>
    %249 = vector.broadcast %6 : vector<32x1xf32> to vector<32x8xf32>
    %250 = arith.addf %248, %249 : vector<32x8xf32>
    %251 = vector.extract_strided_slice %244 {offsets = [0, 0], sizes = [8, 8], strides = [1, 1]} : vector<32x8xf32> to vector<8x8xf32>
    %252 = vector.extract_strided_slice %247 {offsets = [0, 0], sizes = [8, 8], strides = [1, 1]} : vector<32x8xf32> to vector<8x8xf32>
    %253 = vector.extract_strided_slice %250 {offsets = [0, 0], sizes = [8, 8], strides = [1, 1]} : vector<32x8xf32> to vector<8x8xf32>
    %254 = tpu.transpose %251, [1, 0] : vector<8x8xf32> -> vector<8x8xf32>
    %cst_163 = arith.constant dense<0.000000e+00> : vector<8x8xf32>
    %255 = tpu.matmul %254, %252, %cst_163 {dimension_numbers = #tpu.dot_dimension_numbers<[1], [0], [0], [1], [0, 0, 1, 1], [], []>} : vector<8x8xf32>, vector<8x8xf32>, vector<8x8xf32> -> vector<8x8xf32>
    %cst_164 = arith.constant 0.353553385 : f32
    %256 = vector.broadcast %cst_164 : f32 to vector<8x8xf32>
    %257 = arith.mulf %255, %256 : vector<8x8xf32>
    %cst_165 = arith.constant dense<0xFF800000> : vector<8xf32>
    %258 = vector.multi_reduction <maximumf>, %257, %cst_165 [1] : vector<8x8xf32> to vector<8xf32>
    %259 = vector.shape_cast %258 : vector<8xf32> to vector<8x1xf32>
    %260 = vector.broadcast %259 : vector<8x1xf32> to vector<8x8xf32>
    %261 = arith.subf %257, %260 : vector<8x8xf32>
    %262 = math.exp %261 : vector<8x8xf32>
    %cst_166 = arith.constant dense<0.000000e+00> : vector<8xf32>
    %263 = vector.multi_reduction <add>, %262, %cst_166 [1] : vector<8x8xf32> to vector<8xf32>
    %264 = vector.shape_cast %263 : vector<8xf32> to vector<8x1xf32>
    %265 = tpu.reciprocal %264 : vector<8x1xf32> -> vector<8x1xf32>
    %266 = vector.broadcast %265 : vector<8x1xf32> to vector<8x8xf32>
    %267 = arith.mulf %262, %266 : vector<8x8xf32>
    %c0_167 = arith.constant 0 : index
    %c0_168 = arith.constant 0 : index
    %c2_169 = arith.constant 2 : index
    %c0_170 = arith.constant 0 : index
    %c0_171 = arith.constant 0 : index
    %268 = vector.load %arg14[%c0_167, %c0_168, %c2_169, %c0_170, %c0_171] : memref<1x4x4x8x8xf32, #tpu.memory_space<vmem>>, vector<1x1x1x8x8xf32>
    %269 = vector.shape_cast %268 : vector<1x1x1x8x8xf32> to vector<8x8xf32>
    %270 = vector.shape_cast %267 : vector<8x8xf32> to vector<1x1x1x8x8xf32>
    tpu.vector_store %arg14[%c0_167, %c0_168, %c2_169, %c0_170, %c0_171], %270 {strides = array<i32>} : memref<1x4x4x8x8xf32, #tpu.memory_space<vmem>>, vector<1x1x1x8x8xf32>,
    %271 = tpu.transpose %267, [1, 0] : vector<8x8xf32> -> vector<8x8xf32>
    %cst_172 = arith.constant dense<0.000000e+00> : vector<8x8xf32>
    %272 = tpu.matmul %253, %271, %cst_172 {dimension_numbers = #tpu.dot_dimension_numbers<[1], [0], [0], [1], [0, 0, 1, 1], [], []>} : vector<8x8xf32>, vector<8x8xf32>, vector<8x8xf32> -> vector<8x8xf32>
    %c0_173 = arith.constant 0 : index
    %c0_174 = arith.constant 0 : index
    %273 = vector.load %arg15[%c0_173, %c0_174] : memref<32x8xf32, #tpu.memory_space<vmem>>, vector<8x8xf32>
    tpu.vector_store %arg15[%c0_173, %c0_174], %272 {strides = array<i32>} : memref<32x8xf32, #tpu.memory_space<vmem>>, vector<8x8xf32>,
    %274 = vector.extract_strided_slice %244 {offsets = [8, 0], sizes = [8, 8], strides = [1, 1]} : vector<32x8xf32> to vector<8x8xf32>
    %275 = vector.extract_strided_slice %247 {offsets = [8, 0], sizes = [8, 8], strides = [1, 1]} : vector<32x8xf32> to vector<8x8xf32>
    %276 = vector.extract_strided_slice %250 {offsets = [8, 0], sizes = [8, 8], strides = [1, 1]} : vector<32x8xf32> to vector<8x8xf32>
    %277 = tpu.transpose %274, [1, 0] : vector<8x8xf32> -> vector<8x8xf32>
    %cst_175 = arith.constant dense<0.000000e+00> : vector<8x8xf32>
    %278 = tpu.matmul %277, %275, %cst_175 {dimension_numbers = #tpu.dot_dimension_numbers<[1], [0], [0], [1], [0, 0, 1, 1], [], []>} : vector<8x8xf32>, vector<8x8xf32>, vector<8x8xf32> -> vector<8x8xf32>
    %cst_176 = arith.constant 0.353553385 : f32
    %279 = vector.broadcast %cst_176 : f32 to vector<8x8xf32>
    %280 = arith.mulf %278, %279 : vector<8x8xf32>
    %cst_177 = arith.constant dense<0xFF800000> : vector<8xf32>
    %281 = vector.multi_reduction <maximumf>, %280, %cst_177 [1] : vector<8x8xf32> to vector<8xf32>
    %282 = vector.shape_cast %281 : vector<8xf32> to vector<8x1xf32>
    %283 = vector.broadcast %282 : vector<8x1xf32> to vector<8x8xf32>
    %284 = arith.subf %280, %283 : vector<8x8xf32>
    %285 = math.exp %284 : vector<8x8xf32>
    %cst_178 = arith.constant dense<0.000000e+00> : vector<8xf32>
    %286 = vector.multi_reduction <add>, %285, %cst_178 [1] : vector<8x8xf32> to vector<8xf32>
    %287 = vector.shape_cast %286 : vector<8xf32> to vector<8x1xf32>
    %288 = tpu.reciprocal %287 : vector<8x1xf32> -> vector<8x1xf32>
    %289 = vector.broadcast %288 : vector<8x1xf32> to vector<8x8xf32>
    %290 = arith.mulf %285, %289 : vector<8x8xf32>
    %c0_179 = arith.constant 0 : index
    %c1_180 = arith.constant 1 : index
    %c2_181 = arith.constant 2 : index
    %c0_182 = arith.constant 0 : index
    %c0_183 = arith.constant 0 : index
    %291 = vector.load %arg14[%c0_179, %c1_180, %c2_181, %c0_182, %c0_183] : memref<1x4x4x8x8xf32, #tpu.memory_space<vmem>>, vector<1x1x1x8x8xf32>
    %292 = vector.shape_cast %291 : vector<1x1x1x8x8xf32> to vector<8x8xf32>
    %293 = vector.shape_cast %290 : vector<8x8xf32> to vector<1x1x1x8x8xf32>
    tpu.vector_store %arg14[%c0_179, %c1_180, %c2_181, %c0_182, %c0_183], %293 {strides = array<i32>} : memref<1x4x4x8x8xf32, #tpu.memory_space<vmem>>, vector<1x1x1x8x8xf32>,
    %294 = tpu.transpose %290, [1, 0] : vector<8x8xf32> -> vector<8x8xf32>
    %cst_184 = arith.constant dense<0.000000e+00> : vector<8x8xf32>
    %295 = tpu.matmul %276, %294, %cst_184 {dimension_numbers = #tpu.dot_dimension_numbers<[1], [0], [0], [1], [0, 0, 1, 1], [], []>} : vector<8x8xf32>, vector<8x8xf32>, vector<8x8xf32> -> vector<8x8xf32>
    %c8_185 = arith.constant 8 : index
    %c0_186 = arith.constant 0 : index
    %296 = vector.load %arg15[%c8_185, %c0_186] : memref<32x8xf32, #tpu.memory_space<vmem>>, vector<8x8xf32>
    tpu.vector_store %arg15[%c8_185, %c0_186], %295 {strides = array<i32>} : memref<32x8xf32, #tpu.memory_space<vmem>>, vector<8x8xf32>,
    %297 = vector.extract_strided_slice %244 {offsets = [16, 0], sizes = [8, 8], strides = [1, 1]} : vector<32x8xf32> to vector<8x8xf32>
    %298 = vector.extract_strided_slice %247 {offsets = [16, 0], sizes = [8, 8], strides = [1, 1]} : vector<32x8xf32> to vector<8x8xf32>
    %299 = vector.extract_strided_slice %250 {offsets = [16, 0], sizes = [8, 8], strides = [1, 1]} : vector<32x8xf32> to vector<8x8xf32>
    %300 = tpu.transpose %297, [1, 0] : vector<8x8xf32> -> vector<8x8xf32>
    %cst_187 = arith.constant dense<0.000000e+00> : vector<8x8xf32>
    %301 = tpu.matmul %300, %298, %cst_187 {dimension_numbers = #tpu.dot_dimension_numbers<[1], [0], [0], [1], [0, 0, 1, 1], [], []>} : vector<8x8xf32>, vector<8x8xf32>, vector<8x8xf32> -> vector<8x8xf32>
    %cst_188 = arith.constant 0.353553385 : f32
    %302 = vector.broadcast %cst_188 : f32 to vector<8x8xf32>
    %303 = arith.mulf %301, %302 : vector<8x8xf32>
    %cst_189 = arith.constant dense<0xFF800000> : vector<8xf32>
    %304 = vector.multi_reduction <maximumf>, %303, %cst_189 [1] : vector<8x8xf32> to vector<8xf32>
    %305 = vector.shape_cast %304 : vector<8xf32> to vector<8x1xf32>
    %306 = vector.broadcast %305 : vector<8x1xf32> to vector<8x8xf32>
    %307 = arith.subf %303, %306 : vector<8x8xf32>
    %308 = math.exp %307 : vector<8x8xf32>
    %cst_190 = arith.constant dense<0.000000e+00> : vector<8xf32>
    %309 = vector.multi_reduction <add>, %308, %cst_190 [1] : vector<8x8xf32> to vector<8xf32>
    %310 = vector.shape_cast %309 : vector<8xf32> to vector<8x1xf32>
    %311 = tpu.reciprocal %310 : vector<8x1xf32> -> vector<8x1xf32>
    %312 = vector.broadcast %311 : vector<8x1xf32> to vector<8x8xf32>
    %313 = arith.mulf %308, %312 : vector<8x8xf32>
    %c0_191 = arith.constant 0 : index
    %c2_192 = arith.constant 2 : index
    %c2_193 = arith.constant 2 : index
    %c0_194 = arith.constant 0 : index
    %c0_195 = arith.constant 0 : index
    %314 = vector.load %arg14[%c0_191, %c2_192, %c2_193, %c0_194, %c0_195] : memref<1x4x4x8x8xf32, #tpu.memory_space<vmem>>, vector<1x1x1x8x8xf32>
    %315 = vector.shape_cast %314 : vector<1x1x1x8x8xf32> to vector<8x8xf32>
    %316 = vector.shape_cast %313 : vector<8x8xf32> to vector<1x1x1x8x8xf32>
    tpu.vector_store %arg14[%c0_191, %c2_192, %c2_193, %c0_194, %c0_195], %316 {strides = array<i32>} : memref<1x4x4x8x8xf32, #tpu.memory_space<vmem>>, vector<1x1x1x8x8xf32>,
    %317 = tpu.transpose %313, [1, 0] : vector<8x8xf32> -> vector<8x8xf32>
    %cst_196 = arith.constant dense<0.000000e+00> : vector<8x8xf32>
    %318 = tpu.matmul %299, %317, %cst_196 {dimension_numbers = #tpu.dot_dimension_numbers<[1], [0], [0], [1], [0, 0, 1, 1], [], []>} : vector<8x8xf32>, vector<8x8xf32>, vector<8x8xf32> -> vector<8x8xf32>
    %c16_197 = arith.constant 16 : index
    %c0_198 = arith.constant 0 : index
    %319 = vector.load %arg15[%c16_197, %c0_198] : memref<32x8xf32, #tpu.memory_space<vmem>>, vector<8x8xf32>
    tpu.vector_store %arg15[%c16_197, %c0_198], %318 {strides = array<i32>} : memref<32x8xf32, #tpu.memory_space<vmem>>, vector<8x8xf32>,
    %320 = vector.extract_strided_slice %244 {offsets = [24, 0], sizes = [8, 8], strides = [1, 1]} : vector<32x8xf32> to vector<8x8xf32>
    %321 = vector.extract_strided_slice %247 {offsets = [24, 0], sizes = [8, 8], strides = [1, 1]} : vector<32x8xf32> to vector<8x8xf32>
    %322 = vector.extract_strided_slice %250 {offsets = [24, 0], sizes = [8, 8], strides = [1, 1]} : vector<32x8xf32> to vector<8x8xf32>
    %323 = tpu.transpose %320, [1, 0] : vector<8x8xf32> -> vector<8x8xf32>
    %cst_199 = arith.constant dense<0.000000e+00> : vector<8x8xf32>
    %324 = tpu.matmul %323, %321, %cst_199 {dimension_numbers = #tpu.dot_dimension_numbers<[1], [0], [0], [1], [0, 0, 1, 1], [], []>} : vector<8x8xf32>, vector<8x8xf32>, vector<8x8xf32> -> vector<8x8xf32>
    %cst_200 = arith.constant 0.353553385 : f32
    %325 = vector.broadcast %cst_200 : f32 to vector<8x8xf32>
    %326 = arith.mulf %324, %325 : vector<8x8xf32>
    %cst_201 = arith.constant dense<0xFF800000> : vector<8xf32>
    %327 = vector.multi_reduction <maximumf>, %326, %cst_201 [1] : vector<8x8xf32> to vector<8xf32>
    %328 = vector.shape_cast %327 : vector<8xf32> to vector<8x1xf32>
    %329 = vector.broadcast %328 : vector<8x1xf32> to vector<8x8xf32>
    %330 = arith.subf %326, %329 : vector<8x8xf32>
    %331 = math.exp %330 : vector<8x8xf32>
    %cst_202 = arith.constant dense<0.000000e+00> : vector<8xf32>
    %332 = vector.multi_reduction <add>, %331, %cst_202 [1] : vector<8x8xf32> to vector<8xf32>
    %333 = vector.shape_cast %332 : vector<8xf32> to vector<8x1xf32>
    %334 = tpu.reciprocal %333 : vector<8x1xf32> -> vector<8x1xf32>
    %335 = vector.broadcast %334 : vector<8x1xf32> to vector<8x8xf32>
    %336 = arith.mulf %331, %335 : vector<8x8xf32>
    %c0_203 = arith.constant 0 : index
    %c3_204 = arith.constant 3 : index
    %c2_205 = arith.constant 2 : index
    %c0_206 = arith.constant 0 : index
    %c0_207 = arith.constant 0 : index
    %337 = vector.load %arg14[%c0_203, %c3_204, %c2_205, %c0_206, %c0_207] : memref<1x4x4x8x8xf32, #tpu.memory_space<vmem>>, vector<1x1x1x8x8xf32>
    %338 = vector.shape_cast %337 : vector<1x1x1x8x8xf32> to vector<8x8xf32>
    %339 = vector.shape_cast %336 : vector<8x8xf32> to vector<1x1x1x8x8xf32>
    tpu.vector_store %arg14[%c0_203, %c3_204, %c2_205, %c0_206, %c0_207], %339 {strides = array<i32>} : memref<1x4x4x8x8xf32, #tpu.memory_space<vmem>>, vector<1x1x1x8x8xf32>,
    %340 = tpu.transpose %336, [1, 0] : vector<8x8xf32> -> vector<8x8xf32>
    %cst_208 = arith.constant dense<0.000000e+00> : vector<8x8xf32>
    %341 = tpu.matmul %322, %340, %cst_208 {dimension_numbers = #tpu.dot_dimension_numbers<[1], [0], [0], [1], [0, 0, 1, 1], [], []>} : vector<8x8xf32>, vector<8x8xf32>, vector<8x8xf32> -> vector<8x8xf32>
    %c24_209 = arith.constant 24 : index
    %c0_210 = arith.constant 0 : index
    %342 = vector.load %arg15[%c24_209, %c0_210] : memref<32x8xf32, #tpu.memory_space<vmem>>, vector<8x8xf32>
    tpu.vector_store %arg15[%c24_209, %c0_210], %341 {strides = array<i32>} : memref<32x8xf32, #tpu.memory_space<vmem>>, vector<8x8xf32>,
    %c0_211 = arith.constant 0 : index
    %c0_212 = arith.constant 0 : index
    %343 = vector.load %arg15[%c0_211, %c0_212] : memref<32x8xf32, #tpu.memory_space<vmem>>, vector<32x8xf32>
    %cst_213 = arith.constant dense<0.000000e+00> : vector<32x8xf32>
    %344 = tpu.matmul %3, %343, %cst_213 {dimension_numbers = #tpu.dot_dimension_numbers<[1], [0], [0], [1], [0, 0, 1, 1], [], []>} : vector<32x32xf32>, vector<32x8xf32>, vector<32x8xf32> -> vector<32x8xf32>
    %345 = vector.broadcast %7 : vector<32x1xf32> to vector<32x8xf32>
    %346 = arith.addf %344, %345 : vector<32x8xf32>
    %c0_214 = arith.constant 0 : index
    %c0_215 = arith.constant 0 : index
    %c2_216 = arith.constant 2 : index
    %c0_217 = arith.constant 0 : index
    %347 = vector.load %arg13[%c0_214, %c0_215, %c2_216, %c0_217] : memref<1x32x4x8xf32, #tpu.memory_space<vmem>>, vector<1x32x1x8xf32>
    %348 = vector.shape_cast %347 : vector<1x32x1x8xf32> to vector<32x8xf32>
    %349 = vector.shape_cast %346 : vector<32x8xf32> to vector<1x32x1x8xf32>
    tpu.vector_store %arg13[%c0_214, %c0_215, %c2_216, %c0_217], %349 {strides = array<i32>} : memref<1x32x4x8xf32, #tpu.memory_space<vmem>>, vector<1x32x1x8xf32>,
    %c0_218 = arith.constant 0 : index
    %c0_219 = arith.constant 0 : index
    %c3_220 = arith.constant 3 : index
    %c0_221 = arith.constant 0 : index
    %350 = vector.load %arg2[%c0_218, %c0_219, %c3_220, %c0_221] : memref<1x32x4x8xf32, #tpu.memory_space<vmem>>, vector<1x32x1x8xf32>
    %351 = vector.shape_cast %350 : vector<1x32x1x8xf32> to vector<32x8xf32>
    %c0_222 = arith.constant 0 : index
    %c0_223 = arith.constant 0 : index
    %c3_224 = arith.constant 3 : index
    %c0_225 = arith.constant 0 : index
    %352 = vector.load %arg3[%c0_222, %c0_223, %c3_224, %c0_225] : memref<1x32x4x8xf32, #tpu.memory_space<vmem>>, vector<1x32x1x8xf32>
    %353 = vector.shape_cast %352 : vector<1x32x1x8xf32> to vector<32x8xf32>
    %c0_226 = arith.constant 0 : index
    %c0_227 = arith.constant 0 : index
    %c3_228 = arith.constant 3 : index
    %c0_229 = arith.constant 0 : index
    %354 = vector.load %arg4[%c0_226, %c0_227, %c3_228, %c0_229] : memref<1x32x4x8xf32, #tpu.memory_space<vmem>>, vector<1x32x1x8xf32>
    %355 = vector.shape_cast %354 : vector<1x32x1x8xf32> to vector<32x8xf32>
    %cst_230 = arith.constant dense<0.000000e+00> : vector<32x8xf32>
    %356 = tpu.matmul %0, %351, %cst_230 {dimension_numbers = #tpu.dot_dimension_numbers<[1], [0], [0], [1], [0, 0, 1, 1], [], []>} : vector<32x32xf32>, vector<32x8xf32>, vector<32x8xf32> -> vector<32x8xf32>
    %357 = vector.broadcast %4 : vector<32x1xf32> to vector<32x8xf32>
    %358 = arith.addf %356, %357 : vector<32x8xf32>
    %cst_231 = arith.constant dense<0.000000e+00> : vector<32x8xf32>
    %359 = tpu.matmul %1, %353, %cst_231 {dimension_numbers = #tpu.dot_dimension_numbers<[1], [0], [0], [1], [0, 0, 1, 1], [], []>} : vector<32x32xf32>, vector<32x8xf32>, vector<32x8xf32> -> vector<32x8xf32>
    %360 = vector.broadcast %5 : vector<32x1xf32> to vector<32x8xf32>
    %361 = arith.addf %359, %360 : vector<32x8xf32>
    %cst_232 = arith.constant dense<0.000000e+00> : vector<32x8xf32>
    %362 = tpu.matmul %2, %355, %cst_232 {dimension_numbers = #tpu.dot_dimension_numbers<[1], [0], [0], [1], [0, 0, 1, 1], [], []>} : vector<32x32xf32>, vector<32x8xf32>, vector<32x8xf32> -> vector<32x8xf32>
    %363 = vector.broadcast %6 : vector<32x1xf32> to vector<32x8xf32>
    %364 = arith.addf %362, %363 : vector<32x8xf32>
    %365 = vector.extract_strided_slice %358 {offsets = [0, 0], sizes = [8, 8], strides = [1, 1]} : vector<32x8xf32> to vector<8x8xf32>
    %366 = vector.extract_strided_slice %361 {offsets = [0, 0], sizes = [8, 8], strides = [1, 1]} : vector<32x8xf32> to vector<8x8xf32>
    %367 = vector.extract_strided_slice %364 {offsets = [0, 0], sizes = [8, 8], strides = [1, 1]} : vector<32x8xf32> to vector<8x8xf32>
    %368 = tpu.transpose %365, [1, 0] : vector<8x8xf32> -> vector<8x8xf32>
    %cst_233 = arith.constant dense<0.000000e+00> : vector<8x8xf32>
    %369 = tpu.matmul %368, %366, %cst_233 {dimension_numbers = #tpu.dot_dimension_numbers<[1], [0], [0], [1], [0, 0, 1, 1], [], []>} : vector<8x8xf32>, vector<8x8xf32>, vector<8x8xf32> -> vector<8x8xf32>
    %cst_234 = arith.constant 0.353553385 : f32
    %370 = vector.broadcast %cst_234 : f32 to vector<8x8xf32>
    %371 = arith.mulf %369, %370 : vector<8x8xf32>
    %cst_235 = arith.constant dense<0xFF800000> : vector<8xf32>
    %372 = vector.multi_reduction <maximumf>, %371, %cst_235 [1] : vector<8x8xf32> to vector<8xf32>
    %373 = vector.shape_cast %372 : vector<8xf32> to vector<8x1xf32>
    %374 = vector.broadcast %373 : vector<8x1xf32> to vector<8x8xf32>
    %375 = arith.subf %371, %374 : vector<8x8xf32>
    %376 = math.exp %375 : vector<8x8xf32>
    %cst_236 = arith.constant dense<0.000000e+00> : vector<8xf32>
    %377 = vector.multi_reduction <add>, %376, %cst_236 [1] : vector<8x8xf32> to vector<8xf32>
    %378 = vector.shape_cast %377 : vector<8xf32> to vector<8x1xf32>
    %379 = tpu.reciprocal %378 : vector<8x1xf32> -> vector<8x1xf32>
    %380 = vector.broadcast %379 : vector<8x1xf32> to vector<8x8xf32>
    %381 = arith.mulf %376, %380 : vector<8x8xf32>
    %c0_237 = arith.constant 0 : index
    %c0_238 = arith.constant 0 : index
    %c3_239 = arith.constant 3 : index
    %c0_240 = arith.constant 0 : index
    %c0_241 = arith.constant 0 : index
    %382 = vector.load %arg14[%c0_237, %c0_238, %c3_239, %c0_240, %c0_241] : memref<1x4x4x8x8xf32, #tpu.memory_space<vmem>>, vector<1x1x1x8x8xf32>
    %383 = vector.shape_cast %382 : vector<1x1x1x8x8xf32> to vector<8x8xf32>
    %384 = vector.shape_cast %381 : vector<8x8xf32> to vector<1x1x1x8x8xf32>
    tpu.vector_store %arg14[%c0_237, %c0_238, %c3_239, %c0_240, %c0_241], %384 {strides = array<i32>} : memref<1x4x4x8x8xf32, #tpu.memory_space<vmem>>, vector<1x1x1x8x8xf32>,
    %385 = tpu.transpose %381, [1, 0] : vector<8x8xf32> -> vector<8x8xf32>
    %cst_242 = arith.constant dense<0.000000e+00> : vector<8x8xf32>
    %386 = tpu.matmul %367, %385, %cst_242 {dimension_numbers = #tpu.dot_dimension_numbers<[1], [0], [0], [1], [0, 0, 1, 1], [], []>} : vector<8x8xf32>, vector<8x8xf32>, vector<8x8xf32> -> vector<8x8xf32>
    %c0_243 = arith.constant 0 : index
    %c0_244 = arith.constant 0 : index
    %387 = vector.load %arg15[%c0_243, %c0_244] : memref<32x8xf32, #tpu.memory_space<vmem>>, vector<8x8xf32>
    tpu.vector_store %arg15[%c0_243, %c0_244], %386 {strides = array<i32>} : memref<32x8xf32, #tpu.memory_space<vmem>>, vector<8x8xf32>,
    %388 = vector.extract_strided_slice %358 {offsets = [8, 0], sizes = [8, 8], strides = [1, 1]} : vector<32x8xf32> to vector<8x8xf32>
    %389 = vector.extract_strided_slice %361 {offsets = [8, 0], sizes = [8, 8], strides = [1, 1]} : vector<32x8xf32> to vector<8x8xf32>
    %390 = vector.extract_strided_slice %364 {offsets = [8, 0], sizes = [8, 8], strides = [1, 1]} : vector<32x8xf32> to vector<8x8xf32>
    %391 = tpu.transpose %388, [1, 0] : vector<8x8xf32> -> vector<8x8xf32>
    %cst_245 = arith.constant dense<0.000000e+00> : vector<8x8xf32>
    %392 = tpu.matmul %391, %389, %cst_245 {dimension_numbers = #tpu.dot_dimension_numbers<[1], [0], [0], [1], [0, 0, 1, 1], [], []>} : vector<8x8xf32>, vector<8x8xf32>, vector<8x8xf32> -> vector<8x8xf32>
    %cst_246 = arith.constant 0.353553385 : f32
    %393 = vector.broadcast %cst_246 : f32 to vector<8x8xf32>
    %394 = arith.mulf %392, %393 : vector<8x8xf32>
    %cst_247 = arith.constant dense<0xFF800000> : vector<8xf32>
    %395 = vector.multi_reduction <maximumf>, %394, %cst_247 [1] : vector<8x8xf32> to vector<8xf32>
    %396 = vector.shape_cast %395 : vector<8xf32> to vector<8x1xf32>
    %397 = vector.broadcast %396 : vector<8x1xf32> to vector<8x8xf32>
    %398 = arith.subf %394, %397 : vector<8x8xf32>
    %399 = math.exp %398 : vector<8x8xf32>
    %cst_248 = arith.constant dense<0.000000e+00> : vector<8xf32>
    %400 = vector.multi_reduction <add>, %399, %cst_248 [1] : vector<8x8xf32> to vector<8xf32>
    %401 = vector.shape_cast %400 : vector<8xf32> to vector<8x1xf32>
    %402 = tpu.reciprocal %401 : vector<8x1xf32> -> vector<8x1xf32>
    %403 = vector.broadcast %402 : vector<8x1xf32> to vector<8x8xf32>
    %404 = arith.mulf %399, %403 : vector<8x8xf32>
    %c0_249 = arith.constant 0 : index
    %c1_250 = arith.constant 1 : index
    %c3_251 = arith.constant 3 : index
    %c0_252 = arith.constant 0 : index
    %c0_253 = arith.constant 0 : index
    %405 = vector.load %arg14[%c0_249, %c1_250, %c3_251, %c0_252, %c0_253] : memref<1x4x4x8x8xf32, #tpu.memory_space<vmem>>, vector<1x1x1x8x8xf32>
    %406 = vector.shape_cast %405 : vector<1x1x1x8x8xf32> to vector<8x8xf32>
    %407 = vector.shape_cast %404 : vector<8x8xf32> to vector<1x1x1x8x8xf32>
    tpu.vector_store %arg14[%c0_249, %c1_250, %c3_251, %c0_252, %c0_253], %407 {strides = array<i32>} : memref<1x4x4x8x8xf32, #tpu.memory_space<vmem>>, vector<1x1x1x8x8xf32>,
    %408 = tpu.transpose %404, [1, 0] : vector<8x8xf32> -> vector<8x8xf32>
    %cst_254 = arith.constant dense<0.000000e+00> : vector<8x8xf32>
    %409 = tpu.matmul %390, %408, %cst_254 {dimension_numbers = #tpu.dot_dimension_numbers<[1], [0], [0], [1], [0, 0, 1, 1], [], []>} : vector<8x8xf32>, vector<8x8xf32>, vector<8x8xf32> -> vector<8x8xf32>
    %c8_255 = arith.constant 8 : index
    %c0_256 = arith.constant 0 : index
    %410 = vector.load %arg15[%c8_255, %c0_256] : memref<32x8xf32, #tpu.memory_space<vmem>>, vector<8x8xf32>
    tpu.vector_store %arg15[%c8_255, %c0_256], %409 {strides = array<i32>} : memref<32x8xf32, #tpu.memory_space<vmem>>, vector<8x8xf32>,
    %411 = vector.extract_strided_slice %358 {offsets = [16, 0], sizes = [8, 8], strides = [1, 1]} : vector<32x8xf32> to vector<8x8xf32>
    %412 = vector.extract_strided_slice %361 {offsets = [16, 0], sizes = [8, 8], strides = [1, 1]} : vector<32x8xf32> to vector<8x8xf32>
    %413 = vector.extract_strided_slice %364 {offsets = [16, 0], sizes = [8, 8], strides = [1, 1]} : vector<32x8xf32> to vector<8x8xf32>
    %414 = tpu.transpose %411, [1, 0] : vector<8x8xf32> -> vector<8x8xf32>
    %cst_257 = arith.constant dense<0.000000e+00> : vector<8x8xf32>
    %415 = tpu.matmul %414, %412, %cst_257 {dimension_numbers = #tpu.dot_dimension_numbers<[1], [0], [0], [1], [0, 0, 1, 1], [], []>} : vector<8x8xf32>, vector<8x8xf32>, vector<8x8xf32> -> vector<8x8xf32>
    %cst_258 = arith.constant 0.353553385 : f32
    %416 = vector.broadcast %cst_258 : f32 to vector<8x8xf32>
    %417 = arith.mulf %415, %416 : vector<8x8xf32>
    %cst_259 = arith.constant dense<0xFF800000> : vector<8xf32>
    %418 = vector.multi_reduction <maximumf>, %417, %cst_259 [1] : vector<8x8xf32> to vector<8xf32>
    %419 = vector.shape_cast %418 : vector<8xf32> to vector<8x1xf32>
    %420 = vector.broadcast %419 : vector<8x1xf32> to vector<8x8xf32>
    %421 = arith.subf %417, %420 : vector<8x8xf32>
    %422 = math.exp %421 : vector<8x8xf32>
    %cst_260 = arith.constant dense<0.000000e+00> : vector<8xf32>
    %423 = vector.multi_reduction <add>, %422, %cst_260 [1] : vector<8x8xf32> to vector<8xf32>
    %424 = vector.shape_cast %423 : vector<8xf32> to vector<8x1xf32>
    %425 = tpu.reciprocal %424 : vector<8x1xf32> -> vector<8x1xf32>
    %426 = vector.broadcast %425 : vector<8x1xf32> to vector<8x8xf32>
    %427 = arith.mulf %422, %426 : vector<8x8xf32>
    %c0_261 = arith.constant 0 : index
    %c2_262 = arith.constant 2 : index
    %c3_263 = arith.constant 3 : index
    %c0_264 = arith.constant 0 : index
    %c0_265 = arith.constant 0 : index
    %428 = vector.load %arg14[%c0_261, %c2_262, %c3_263, %c0_264, %c0_265] : memref<1x4x4x8x8xf32, #tpu.memory_space<vmem>>, vector<1x1x1x8x8xf32>
    %429 = vector.shape_cast %428 : vector<1x1x1x8x8xf32> to vector<8x8xf32>
    %430 = vector.shape_cast %427 : vector<8x8xf32> to vector<1x1x1x8x8xf32>
    tpu.vector_store %arg14[%c0_261, %c2_262, %c3_263, %c0_264, %c0_265], %430 {strides = array<i32>} : memref<1x4x4x8x8xf32, #tpu.memory_space<vmem>>, vector<1x1x1x8x8xf32>,
    %431 = tpu.transpose %427, [1, 0] : vector<8x8xf32> -> vector<8x8xf32>
    %cst_266 = arith.constant dense<0.000000e+00> : vector<8x8xf32>
    %432 = tpu.matmul %413, %431, %cst_266 {dimension_numbers = #tpu.dot_dimension_numbers<[1], [0], [0], [1], [0, 0, 1, 1], [], []>} : vector<8x8xf32>, vector<8x8xf32>, vector<8x8xf32> -> vector<8x8xf32>
    %c16_267 = arith.constant 16 : index
    %c0_268 = arith.constant 0 : index
    %433 = vector.load %arg15[%c16_267, %c0_268] : memref<32x8xf32, #tpu.memory_space<vmem>>, vector<8x8xf32>
    tpu.vector_store %arg15[%c16_267, %c0_268], %432 {strides = array<i32>} : memref<32x8xf32, #tpu.memory_space<vmem>>, vector<8x8xf32>,
    %434 = vector.extract_strided_slice %358 {offsets = [24, 0], sizes = [8, 8], strides = [1, 1]} : vector<32x8xf32> to vector<8x8xf32>
    %435 = vector.extract_strided_slice %361 {offsets = [24, 0], sizes = [8, 8], strides = [1, 1]} : vector<32x8xf32> to vector<8x8xf32>
    %436 = vector.extract_strided_slice %364 {offsets = [24, 0], sizes = [8, 8], strides = [1, 1]} : vector<32x8xf32> to vector<8x8xf32>
    %437 = tpu.transpose %434, [1, 0] : vector<8x8xf32> -> vector<8x8xf32>
    %cst_269 = arith.constant dense<0.000000e+00> : vector<8x8xf32>
    %438 = tpu.matmul %437, %435, %cst_269 {dimension_numbers = #tpu.dot_dimension_numbers<[1], [0], [0], [1], [0, 0, 1, 1], [], []>} : vector<8x8xf32>, vector<8x8xf32>, vector<8x8xf32> -> vector<8x8xf32>
    %cst_270 = arith.constant 0.353553385 : f32
    %439 = vector.broadcast %cst_270 : f32 to vector<8x8xf32>
    %440 = arith.mulf %438, %439 : vector<8x8xf32>
    %cst_271 = arith.constant dense<0xFF800000> : vector<8xf32>
    %441 = vector.multi_reduction <maximumf>, %440, %cst_271 [1] : vector<8x8xf32> to vector<8xf32>
    %442 = vector.shape_cast %441 : vector<8xf32> to vector<8x1xf32>
    %443 = vector.broadcast %442 : vector<8x1xf32> to vector<8x8xf32>
    %444 = arith.subf %440, %443 : vector<8x8xf32>
    %445 = math.exp %444 : vector<8x8xf32>
    %cst_272 = arith.constant dense<0.000000e+00> : vector<8xf32>
    %446 = vector.multi_reduction <add>, %445, %cst_272 [1] : vector<8x8xf32> to vector<8xf32>
    %447 = vector.shape_cast %446 : vector<8xf32> to vector<8x1xf32>
    %448 = tpu.reciprocal %447 : vector<8x1xf32> -> vector<8x1xf32>
    %449 = vector.broadcast %448 : vector<8x1xf32> to vector<8x8xf32>
    %450 = arith.mulf %445, %449 : vector<8x8xf32>
    %c0_273 = arith.constant 0 : index
    %c3_274 = arith.constant 3 : index
    %c3_275 = arith.constant 3 : index
    %c0_276 = arith.constant 0 : index
    %c0_277 = arith.constant 0 : index
    %451 = vector.load %arg14[%c0_273, %c3_274, %c3_275, %c0_276, %c0_277] : memref<1x4x4x8x8xf32, #tpu.memory_space<vmem>>, vector<1x1x1x8x8xf32>
    %452 = vector.shape_cast %451 : vector<1x1x1x8x8xf32> to vector<8x8xf32>
    %453 = vector.shape_cast %450 : vector<8x8xf32> to vector<1x1x1x8x8xf32>
    tpu.vector_store %arg14[%c0_273, %c3_274, %c3_275, %c0_276, %c0_277], %453 {strides = array<i32>} : memref<1x4x4x8x8xf32, #tpu.memory_space<vmem>>, vector<1x1x1x8x8xf32>,
    %454 = tpu.transpose %450, [1, 0] : vector<8x8xf32> -> vector<8x8xf32>
    %cst_278 = arith.constant dense<0.000000e+00> : vector<8x8xf32>
    %455 = tpu.matmul %436, %454, %cst_278 {dimension_numbers = #tpu.dot_dimension_numbers<[1], [0], [0], [1], [0, 0, 1, 1], [], []>} : vector<8x8xf32>, vector<8x8xf32>, vector<8x8xf32> -> vector<8x8xf32>
    %c24_279 = arith.constant 24 : index
    %c0_280 = arith.constant 0 : index
    %456 = vector.load %arg15[%c24_279, %c0_280] : memref<32x8xf32, #tpu.memory_space<vmem>>, vector<8x8xf32>
    tpu.vector_store %arg15[%c24_279, %c0_280], %455 {strides = array<i32>} : memref<32x8xf32, #tpu.memory_space<vmem>>, vector<8x8xf32>,
    %c0_281 = arith.constant 0 : index
    %c0_282 = arith.constant 0 : index
    %457 = vector.load %arg15[%c0_281, %c0_282] : memref<32x8xf32, #tpu.memory_space<vmem>>, vector<32x8xf32>
    %cst_283 = arith.constant dense<0.000000e+00> : vector<32x8xf32>
    %458 = tpu.matmul %3, %457, %cst_283 {dimension_numbers = #tpu.dot_dimension_numbers<[1], [0], [0], [1], [0, 0, 1, 1], [], []>} : vector<32x32xf32>, vector<32x8xf32>, vector<32x8xf32> -> vector<32x8xf32>
    %459 = vector.broadcast %7 : vector<32x1xf32> to vector<32x8xf32>
    %460 = arith.addf %458, %459 : vector<32x8xf32>
    %c0_284 = arith.constant 0 : index
    %c0_285 = arith.constant 0 : index
    %c3_286 = arith.constant 3 : index
    %c0_287 = arith.constant 0 : index
    %461 = vector.load %arg13[%c0_284, %c0_285, %c3_286, %c0_287] : memref<1x32x4x8xf32, #tpu.memory_space<vmem>>, vector<1x32x1x8xf32>
    %462 = vector.shape_cast %461 : vector<1x32x1x8xf32> to vector<32x8xf32>
    %463 = vector.shape_cast %460 : vector<32x8xf32> to vector<1x32x1x8xf32>
    tpu.vector_store %arg13[%c0_284, %c0_285, %c3_286, %c0_287], %463 {strides = array<i32>} : memref<1x32x4x8xf32, #tpu.memory_space<vmem>>, vector<1x32x1x8xf32>,
    return
  }
  func.func @transform_0(%arg0: i32, %arg1: i32) -> (i32, i32, i32, i32) {
    %c0_i32 = arith.constant 0 : i32
    %c0_i32_0 = arith.constant 0 : i32
    %c0_i32_1 = arith.constant 0 : i32
    return %arg0, %c0_i32, %arg1, %c0_i32_0 : i32, i32, i32, i32
  }
  func.func @transform_1(%arg0: i32, %arg1: i32) -> (i32, i32, i32, i32) {
    %c0_i32 = arith.constant 0 : i32
    %c0_i32_0 = arith.constant 0 : i32
    %c0_i32_1 = arith.constant 0 : i32
    return %arg0, %c0_i32, %arg1, %c0_i32_0 : i32, i32, i32, i32
  }
  func.func @transform_2(%arg0: i32, %arg1: i32) -> (i32, i32, i32, i32) {
    %c0_i32 = arith.constant 0 : i32
    %c0_i32_0 = arith.constant 0 : i32
    %c0_i32_1 = arith.constant 0 : i32
    return %arg0, %c0_i32, %arg1, %c0_i32_0 : i32, i32, i32, i32
  }
  func.func @transform_3(%arg0: i32, %arg1: i32) -> (i32, i32) {
    %c0_i32 = arith.constant 0 : i32
    %c0_i32_0 = arith.constant 0 : i32
    %c0_i32_1 = arith.constant 0 : i32
    return %c0_i32, %c0_i32_0 : i32, i32
  }
  func.func @transform_4(%arg0: i32, %arg1: i32) -> (i32, i32) {
    %c0_i32 = arith.constant 0 : i32
    %c0_i32_0 = arith.constant 0 : i32
    %c0_i32_1 = arith.constant 0 : i32
    return %c0_i32, %c0_i32_0 : i32, i32
  }
  func.func @transform_5(%arg0: i32, %arg1: i32) -> (i32, i32) {
    %c0_i32 = arith.constant 0 : i32
    %c0_i32_0 = arith.constant 0 : i32
    %c0_i32_1 = arith.constant 0 : i32
    return %c0_i32, %c0_i32_0 : i32, i32
  }
  func.func @transform_6(%arg0: i32, %arg1: i32) -> (i32, i32) {
    %c0_i32 = arith.constant 0 : i32
    %c0_i32_0 = arith.constant 0 : i32
    %c0_i32_1 = arith.constant 0 : i32
    return %c0_i32, %c0_i32_0 : i32, i32
  }
  func.func @transform_7(%arg0: i32, %arg1: i32) -> (i32, i32) {
    %c0_i32 = arith.constant 0 : i32
    %c0_i32_0 = arith.constant 0 : i32
    %c0_i32_1 = arith.constant 0 : i32
    return %c0_i32, %c0_i32_0 : i32, i32
  }
  func.func @transform_8(%arg0: i32, %arg1: i32) -> (i32, i32) {
    %c0_i32 = arith.constant 0 : i32
    %c0_i32_0 = arith.constant 0 : i32
    %c0_i32_1 = arith.constant 0 : i32
    return %c0_i32, %c0_i32_0 : i32, i32
  }
  func.func @transform_9(%arg0: i32, %arg1: i32) -> (i32, i32) {
    %c0_i32 = arith.constant 0 : i32
    %c0_i32_0 = arith.constant 0 : i32
    %c0_i32_1 = arith.constant 0 : i32
    return %c0_i32, %c0_i32_0 : i32, i32
  }
  func.func @transform_10(%arg0: i32, %arg1: i32) -> (i32, i32) {
    %c0_i32 = arith.constant 0 : i32
    %c0_i32_0 = arith.constant 0 : i32
    %c0_i32_1 = arith.constant 0 : i32
    return %c0_i32, %c0_i32_0 : i32, i32
  }
  func.func @transform_11(%arg0: i32, %arg1: i32) -> (i32, i32, i32, i32) {
    %c0_i32 = arith.constant 0 : i32
    %c0_i32_0 = arith.constant 0 : i32
    %c0_i32_1 = arith.constant 0 : i32
    return %arg0, %c0_i32, %arg1, %c0_i32_0 : i32, i32, i32, i32
  }
  func.func @transform_12(%arg0: i32, %arg1: i32) -> (i32, i32, i32, i32, i32) {
    %c0_i32 = arith.constant 0 : i32
    %c0_i32_0 = arith.constant 0 : i32
    %c0_i32_1 = arith.constant 0 : i32
    %c0_i32_2 = arith.constant 0 : i32
    return %arg0, %c0_i32, %arg1, %c0_i32_0, %c0_i32_1 : i32, i32, i32, i32, i32
  }
}

</mosaic_0001>

<llo_original>
// kernel: multihead_attention_forward.1
$region0: #{multihead_attention_forward.1}
  #allocation0 [shape = 'u32[]', space=smem, size = 0x4, offset = 0x4, fixed_abs, tag = 'smem constant byte address 0x4 - core index']
  #allocation1 [shape = 'u32[72,128]{1,0:T(1,128)}', space=vmem, size = 0x9000, scoped, tag = 'internal scratch']
  #allocation2 [shape = 'f32[32,8]{1,0:T(8,128)}', space=vmem, size = 0x4000, scoped, tag = 'scratch operand']
  %s0 = inlined_call_operand.vmem [shape: f32[2,32,4,8], index: 0, kind: input, shape index: {}]
  %s1 = inlined_call_operand.vmem [shape: f32[2,32,4,8], index: 1, kind: input, shape index: {}]
  %s2 = inlined_call_operand.vmem [shape: f32[2,32,4,8], index: 2, kind: input, shape index: {}]
  %s3 = inlined_call_operand.vmem [shape: f32[32,32], index: 3, kind: input, shape index: {}]
  %s4 = inlined_call_operand.vmem [shape: f32[32,32], index: 4, kind: input, shape index: {}]
  %s5 = inlined_call_operand.vmem [shape: f32[32,32], index: 5, kind: input, shape index: {}]
  %s6 = inlined_call_operand.vmem [shape: f32[32,32], index: 6, kind: input, shape index: {}]
  %s7 = inlined_call_operand.vmem [shape: f32[32,1], index: 7, kind: input, shape index: {}]
  %s8 = inlined_call_operand.vmem [shape: f32[32,1], index: 8, kind: input, shape index: {}]
  %s9 = inlined_call_operand.vmem [shape: f32[32,1], index: 9, kind: input, shape index: {}]
  %s10 = inlined_call_operand.vmem [shape: f32[32,1], index: 10, kind: input, shape index: {}]
  %s11 = inlined_call_operand.vmem [shape: f32[2,32,4,8], index: 11, kind: output, shape index: {0}]
  %s12 = inlined_call_operand.hbm [shape: f32[2,4,4,8,8], index: 12, kind: output, shape index: {1}]
  %13 = xla_tuple %s11, %s12
  %s14 = sld [smem:[#allocation0]]
  $region85: #{multihead_attention_forward.1} parent=0
    _
  %s16 = ssub.s32 1, %s14
  %s17 = scalar_select 0, %s16, %s14
  $region1: #{multihead_attention_forward.1} parent=0
    #allocation3 [shape = 'u8[131072]{0}', space=vmem, size = 0x20000, scoped, tag = 'output window, operand 1']
    #allocation4 [shape = 's32[2]{0}', space=sflag, size = 0x8, scoped, tag = 'scoped memory for multihead_attention_forward.1']
    %18 = vsyncpa [#allocation4], 0
    %s19 = scalar_lea.sflag [#allocation4], 1
    %20 = vsyncpa %s19, 0
    loop: start=0, step=1, limit=4
    $region2: #{multihead_attention_forward.1} parent=1 // loop_pre_header
      _
    $region3: #{multihead_attention_forward.1} parent=1 // loop_header
      %s22 = sphi 0, %s26
      %p23 = scmp.ge.s32.totalorder %s22, 4
      %s29 = sphi 0, %s41
      %s30 = sphi 0, %s37
      %s31 = sphi 0, %s29
      %s32 = sphi 0, %s30
      %s33 = sphi 0, %s31
      %s34 = sphi 0, %s32
      %s46 = sphi 0, %s48
      %s49 = sphi 0, %s46
      %s50 = sphi 0, %s49
      %s66 = sphi 0, %s50
      %s74 = sphi 0, %s76
      %s77 = sphi 0, %s74
      %s78 = sphi 0, %s77
      %s94 = sphi 0, %s78
      %s102 = sphi 0, %s104
      %s105 = sphi 0, %s102
      %s106 = sphi 0, %s105
      %s122 = sphi 0, %s106
      %s126 = sphi 0, %s126
      %s128 = sphi 0, %s126
      %s129 = sphi 0, %s128
      %s143 = sphi 0, %s129
      %s147 = sphi 0, %s147
      %s149 = sphi 0, %s147
      %s150 = sphi 0, %s149
      %s164 = sphi 0, %s150
      %s168 = sphi 0, %s168
      %s170 = sphi 0, %s168
      %s171 = sphi 0, %s170
      %s185 = sphi 0, %s171
      %s189 = sphi 0, %s189
      %s191 = sphi 0, %s189
      %s192 = sphi 0, %s191
      %s206 = sphi 0, %s192
      %s210 = sphi 0, %s210
      %s212 = sphi 0, %s210
      %s213 = sphi 0, %s212
      %s227 = sphi 0, %s213
      %s231 = sphi 0, %s231
      %s233 = sphi 0, %s231
      %s234 = sphi 0, %s233
      %s248 = sphi 0, %s234
      %s252 = sphi 0, %s252
      %s254 = sphi 0, %s252
      %s255 = sphi 0, %s254
      %s269 = sphi 0, %s255
      %s273 = sphi 0, %s273
      %s275 = sphi 0, %s273
      %s276 = sphi 0, %s275
      %s290 = sphi 0, %s276
      %s298 = sphi 0, %s300
      %s301 = sphi 0, %s298
      %s302 = sphi 0, %s301
      %s318 = sphi 0, %s302
      %s326 = sphi 0, %s328
      %s329 = sphi 0, %s326
      %s330 = sphi 0, %s329
      %s346 = sphi 0, %s330
    $region4: #{multihead_attention_forward.1} parent=1 // loop_header_branch
      %25 = sbr.rel (%p23) target = $region8
    $region5: #{multihead_attention_forward.1} parent=1 // loop_body
      %s27 = ssub.s32 %s22, 1
      %s28 = ssub.s32 %s22, 2
      %s35 = sadd.s32 1, %s30
      %p36 = scmp.ge.s32.totalorder %s35, 1
      %s37 = scalar_select %p36, 0, %s35
      %s38 = sadd.s32 1, %s29
      %s39 = scalar_select %p36, %s38, %s29
      %p40 = scmp.ge.s32.totalorder %s39, 2
      %s41 = scalar_select %p40, 0, %s39
      %s42 = ssub.s32 %s29, %s41
      %s43 = ssub.s32 %s30, %s37
      %s44 = sor.u32 %s42, %s43
      %p45 = scmp.eq.s32.totalorder %s44, 0
      %s47 = sadd.s32 %s46, 1
      %s48 = scalar_select %p45, %s46, %s47
      %p51 = pneg %p45
      %p52 = scmp.eq.s32.totalorder %s22, 1
      %p53 = por %p51, %p52
      %p54 = scmp.ne.s32.totalorder %s46, %s49
      %p55 = scmp.eq.s32.totalorder %s22, 0
      %p56 = por %p54, %p55
      %p57 = scmp.ne.s32.totalorder %s46, %s49
      %p58 = scmp.eq.s32.totalorder %s27, 1
      %p59 = por %p57, %p58
      %p60 = scmp.ne.s32.totalorder %s49, %s50
      %p61 = scmp.eq.s32.totalorder %s27, 0
      %p62 = por %p60, %p61
      %p63 = scmp.ne.s32.totalorder %s49, %s50
      %p64 = scmp.eq.s32.totalorder %s28, 1
      %p65 = por %p63, %p64
      %p67 = scmp.ne.s32.totalorder %s50, %s66
      %p68 = scmp.eq.s32.totalorder %s28, 0
      %p69 = por %p67, %p68
      %s70 = ssub.s32 %s29, %s41
      %s71 = ssub.s32 %s30, %s37
      %s72 = sor.u32 %s70, %s71
      %p73 = scmp.eq.s32.totalorder %s72, 0
      %s75 = sadd.s32 %s74, 1
      %s76 = scalar_select %p73, %s74, %s75
      %p79 = pneg %p73
      %p80 = scmp.eq.s32.totalorder %s22, 1
      %p81 = por %p79, %p80
      %p82 = scmp.ne.s32.totalorder %s74, %s77
      %p83 = scmp.eq.s32.totalorder %s22, 0
      %p84 = por %p82, %p83
      %p85 = scmp.ne.s32.totalorder %s74, %s77
      %p86 = scmp.eq.s32.totalorder %s27, 1
      %p87 = por %p85, %p86
      %p88 = scmp.ne.s32.totalorder %s77, %s78
      %p89 = scmp.eq.s32.totalorder %s27, 0
      %p90 = por %p88, %p89
      %p91 = scmp.ne.s32.totalorder %s77, %s78
      %p92 = scmp.eq.s32.totalorder %s28, 1
      %p93 = por %p91, %p92
      %p95 = scmp.ne.s32.totalorder %s78, %s94
      %p96 = scmp.eq.s32.totalorder %s28, 0
      %p97 = por %p95, %p96
      %s98 = ssub.s32 %s29, %s41
      %s99 = ssub.s32 %s30, %s37
      %s100 = sor.u32 %s98, %s99
      %p101 = scmp.eq.s32.totalorder %s100, 0
      %s103 = sadd.s32 %s102, 1
      %s104 = scalar_select %p101, %s102, %s103
      %p107 = pneg %p101
      %p108 = scmp.eq.s32.totalorder %s22, 1
      %p109 = por %p107, %p108
      %p110 = scmp.ne.s32.totalorder %s102, %s105
      %p111 = scmp.eq.s32.totalorder %s22, 0
      %p112 = por %p110, %p111
      %p113 = scmp.ne.s32.totalorder %s102, %s105
      %p114 = scmp.eq.s32.totalorder %s27, 1
      %p115 = por %p113, %p114
      %p116 = scmp.ne.s32.totalorder %s105, %s106
      %p117 = scmp.eq.s32.totalorder %s27, 0
      %p118 = por %p116, %p117
      %p119 = scmp.ne.s32.totalorder %s105, %s106
      %p120 = scmp.eq.s32.totalorder %s28, 1
      %p121 = por %p119, %p120
      %p123 = scmp.ne.s32.totalorder %s106, %s122
      %p124 = scmp.eq.s32.totalorder %s28, 0
      %p125 = por %p123, %p124
      %s127 = sadd.s32 %s126, 1
      %p130 = scmp.eq.s32.totalorder %s22, 1
      %p131 = scmp.ne.s32.totalorder %s126, %s128
      %p132 = scmp.eq.s32.totalorder %s22, 0
      %p133 = por %p131, %p132
      %p134 = scmp.ne.s32.totalorder %s126, %s128
      %p135 = scmp.eq.s32.totalorder %s27, 1
      %p136 = por %p134, %p135
      %p137 = scmp.ne.s32.totalorder %s128, %s129
      %p138 = scmp.eq.s32.totalorder %s27, 0
      %p139 = por %p137, %p138
      %p140 = scmp.ne.s32.totalorder %s128, %s129
      %p141 = scmp.eq.s32.totalorder %s28, 1
      %p142 = por %p140, %p141
      %p144 = scmp.ne.s32.totalorder %s129, %s143
      %p145 = scmp.eq.s32.totalorder %s28, 0
      %p146 = por %p144, %p145
      %s148 = sadd.s32 %s147, 1
      %p151 = scmp.eq.s32.totalorder %s22, 1
      %p152 = scmp.ne.s32.totalorder %s147, %s149
      %p153 = scmp.eq.s32.totalorder %s22, 0
      %p154 = por %p152, %p153
      %p155 = scmp.ne.s32.totalorder %s147, %s149
      %p156 = scmp.eq.s32.totalorder %s27, 1
      %p157 = por %p155, %p156
      %p158 = scmp.ne.s32.totalorder %s149, %s150
      %p159 = scmp.eq.s32.totalorder %s27, 0
      %p160 = por %p158, %p159
      %p161 = scmp.ne.s32.totalorder %s149, %s150
      %p162 = scmp.eq.s32.totalorder %s28, 1
      %p163 = por %p161, %p162
      %p165 = scmp.ne.s32.totalorder %s150, %s164
      %p166 = scmp.eq.s32.totalorder %s28, 0
      %p167 = por %p165, %p166
      %s169 = sadd.s32 %s168, 1
      %p172 = scmp.eq.s32.totalorder %s22, 1
      %p173 = scmp.ne.s32.totalorder %s168, %s170
      %p174 = scmp.eq.s32.totalorder %s22, 0
      %p175 = por %p173, %p174
      %p176 = scmp.ne.s32.totalorder %s168, %s170
      %p177 = scmp.eq.s32.totalorder %s27, 1
      %p178 = por %p176, %p177
      %p179 = scmp.ne.s32.totalorder %s170, %s171
      %p180 = scmp.eq.s32.totalorder %s27, 0
      %p181 = por %p179, %p180
      %p182 = scmp.ne.s32.totalorder %s170, %s171
      %p183 = scmp.eq.s32.totalorder %s28, 1
      %p184 = por %p182, %p183
      %p186 = scmp.ne.s32.totalorder %s171, %s185
      %p187 = scmp.eq.s32.totalorder %s28, 0
      %p188 = por %p186, %p187
      %s190 = sadd.s32 %s189, 1
      %p193 = scmp.eq.s32.totalorder %s22, 1
      %p194 = scmp.ne.s32.totalorder %s189, %s191
      %p195 = scmp.eq.s32.totalorder %s22, 0
      %p196 = por %p194, %p195
      %p197 = scmp.ne.s32.totalorder %s189, %s191
      %p198 = scmp.eq.s32.totalorder %s27, 1
      %p199 = por %p197, %p198
      %p200 = scmp.ne.s32.totalorder %s191, %s192
      %p201 = scmp.eq.s32.totalorder %s27, 0
      %p202 = por %p200, %p201
      %p203 = scmp.ne.s32.totalorder %s191, %s192
      %p204 = scmp.eq.s32.totalorder %s28, 1
      %p205 = por %p203, %p204
      %p207 = scmp.ne.s32.totalorder %s192, %s206
      %p208 = scmp.eq.s32.totalorder %s28, 0
      %p209 = por %p207, %p208
      %s211 = sadd.s32 %s210, 1
      %p214 = scmp.eq.s32.totalorder %s22, 1
      %p215 = scmp.ne.s32.totalorder %s210, %s212
      %p216 = scmp.eq.s32.totalorder %s22, 0
      %p217 = por %p215, %p216
      %p218 = scmp.ne.s32.totalorder %s210, %s212
      %p219 = scmp.eq.s32.totalorder %s27, 1
      %p220 = por %p218, %p219
      %p221 = scmp.ne.s32.totalorder %s212, %s213
      %p222 = scmp.eq.s32.totalorder %s27, 0
      %p223 = por %p221, %p222
      %p224 = scmp.ne.s32.totalorder %s212, %s213
      %p225 = scmp.eq.s32.totalorder %s28, 1
      %p226 = por %p224, %p225
      %p228 = scmp.ne.s32.totalorder %s213, %s227
      %p229 = scmp.eq.s32.totalorder %s28, 0
      %p230 = por %p228, %p229
      %s232 = sadd.s32 %s231, 1
      %p235 = scmp.eq.s32.totalorder %s22, 1
      %p236 = scmp.ne.s32.totalorder %s231, %s233
      %p237 = scmp.eq.s32.totalorder %s22, 0
      %p238 = por %p236, %p237
      %p239 = scmp.ne.s32.totalorder %s231, %s233
      %p240 = scmp.eq.s32.totalorder %s27, 1
      %p241 = por %p239, %p240
      %p242 = scmp.ne.s32.totalorder %s233, %s234
      %p243 = scmp.eq.s32.totalorder %s27, 0
      %p244 = por %p242, %p243
      %p245 = scmp.ne.s32.totalorder %s233, %s234
      %p246 = scmp.eq.s32.totalorder %s28, 1
      %p247 = por %p245, %p246
      %p249 = scmp.ne.s32.totalorder %s234, %s248
      %p250 = scmp.eq.s32.totalorder %s28, 0
      %p251 = por %p249, %p250
      %s253 = sadd.s32 %s252, 1
      %p256 = scmp.eq.s32.totalorder %s22, 1
      %p257 = scmp.ne.s32.totalorder %s252, %s254
      %p258 = scmp.eq.s32.totalorder %s22, 0
      %p259 = por %p257, %p258
      %p260 = scmp.ne.s32.totalorder %s252, %s254
      %p261 = scmp.eq.s32.totalorder %s27, 1
      %p262 = por %p260, %p261
      %p263 = scmp.ne.s32.totalorder %s254, %s255
      %p264 = scmp.eq.s32.totalorder %s27, 0
      %p265 = por %p263, %p264
      %p266 = scmp.ne.s32.totalorder %s254, %s255
      %p267 = scmp.eq.s32.totalorder %s28, 1
      %p268 = por %p266, %p267
      %p270 = scmp.ne.s32.totalorder %s255, %s269
      %p271 = scmp.eq.s32.totalorder %s28, 0
      %p272 = por %p270, %p271
      %s274 = sadd.s32 %s273, 1
      %p277 = scmp.eq.s32.totalorder %s22, 1
      %p278 = scmp.ne.s32.totalorder %s273, %s275
      %p279 = scmp.eq.s32.totalorder %s22, 0
      %p280 = por %p278, %p279
      %p281 = scmp.ne.s32.totalorder %s273, %s275
      %p282 = scmp.eq.s32.totalorder %s27, 1
      %p283 = por %p281, %p282
      %p284 = scmp.ne.s32.totalorder %s275, %s276
      %p285 = scmp.eq.s32.totalorder %s27, 0
      %p286 = por %p284, %p285
      %p287 = scmp.ne.s32.totalorder %s275, %s276
      %p288 = scmp.eq.s32.totalorder %s28, 1
      %p289 = por %p287, %p288
      %p291 = scmp.ne.s32.totalorder %s276, %s290
      %p292 = scmp.eq.s32.totalorder %s28, 0
      %p293 = por %p291, %p292
      %s294 = ssub.s32 %s29, %s41
      %s295 = ssub.s32 %s30, %s37
      %s296 = sor.u32 %s294, %s295
      %p297 = scmp.eq.s32.totalorder %s296, 0
      %s299 = sadd.s32 %s298, 1
      %s300 = scalar_select %p297, %s298, %s299
      %p303 = pneg %p297
      %p304 = scmp.eq.s32.totalorder %s22, 1
      %p305 = por %p303, %p304
      %p306 = scmp.ne.s32.totalorder %s298, %s301
      %p307 = scmp.eq.s32.totalorder %s22, 0
      %p308 = por %p306, %p307
      %p309 = scmp.ne.s32.totalorder %s298, %s301
      %p310 = scmp.eq.s32.totalorder %s27, 1
      %p311 = por %p309, %p310
      %p312 = scmp.ne.s32.totalorder %s301, %s302
      %p313 = scmp.eq.s32.totalorder %s27, 0
      %p314 = por %p312, %p313
      %p315 = scmp.ne.s32.totalorder %s301, %s302
      %p316 = scmp.eq.s32.totalorder %s28, 1
      %p317 = por %p315, %p316
      %p319 = scmp.ne.s32.totalorder %s302, %s318
      %p320 = scmp.eq.s32.totalorder %s28, 0
      %p321 = por %p319, %p320
      %s322 = ssub.s32 %s29, %s41
      %s323 = ssub.s32 %s30, %s37
      %s324 = sor.u32 %s322, %s323
      %p325 = scmp.eq.s32.totalorder %s324, 0
      %s327 = sadd.s32 %s326, 1
      %s328 = scalar_select %p325, %s326, %s327
      %p331 = pneg %p325
      %p332 = scmp.eq.s32.totalorder %s22, 1
      %p333 = por %p331, %p332
      %p334 = scmp.ne.s32.totalorder %s326, %s329
      %p335 = scmp.eq.s32.totalorder %s22, 0
      %p336 = por %p334, %p335
      %p337 = scmp.ne.s32.totalorder %s326, %s329
      %p338 = scmp.eq.s32.totalorder %s27, 1
      %p339 = por %p337, %p338
      %p340 = scmp.ne.s32.totalorder %s329, %s330
      %p341 = scmp.eq.s32.totalorder %s27, 0
      %p342 = por %p340, %p341
      %p343 = scmp.ne.s32.totalorder %s329, %s330
      %p344 = scmp.eq.s32.totalorder %s28, 1
      %p345 = por %p343, %p344
      %p347 = scmp.ne.s32.totalorder %s330, %s346
      %p348 = scmp.eq.s32.totalorder %s28, 0
      %p349 = por %p347, %p348
      %p350 = scmp.le.s32.totalorder 1, %s22
      %p351 = scmp.lt.s32.totalorder %s22, 3
      %p352 = pnand %p350, %p351
      %p353 = pneg %p352
      // Predicated region
      $region9: #{multihead_attention_forward.1} parent=5 // pred_check
        _
      $region10: #{multihead_attention_forward.1} parent=5 // pred_check_branch
        %355 = sbr.rel (%p352) target = $region12
      $region11: #{multihead_attention_forward.1} parent=5 // pred_region
        %s356 = ssub.s32 %s22, 1
        // Predicated region
        $region13: #{multihead_attention_forward.1} parent=11 // pred_check
          %p357 = pneg %p139
        $region14: #{multihead_attention_forward.1} parent=11 // pred_check_branch
          %359 = sbr.rel (%p357) target = $region16
        $region15: #{multihead_attention_forward.1} parent=11 // pred_region
          _
        $region16: #{multihead_attention_forward.1} parent=11 // pred_fallthru
          _
        // Predicated region
        $region17: #{multihead_attention_forward.1} parent=11 // pred_check
          %p360 = pneg %p160
        $region18: #{multihead_attention_forward.1} parent=11 // pred_check_branch
          %362 = sbr.rel (%p360) target = $region20
        $region19: #{multihead_attention_forward.1} parent=11 // pred_region
          _
        $region20: #{multihead_attention_forward.1} parent=11 // pred_fallthru
          _
        // Predicated region
        $region21: #{multihead_attention_forward.1} parent=11 // pred_check
          %p363 = pneg %p181
        $region22: #{multihead_attention_forward.1} parent=11 // pred_check_branch
          %365 = sbr.rel (%p363) target = $region24
        $region23: #{multihead_attention_forward.1} parent=11 // pred_region
          _
        $region24: #{multihead_attention_forward.1} parent=11 // pred_fallthru
          _
        // Predicated region
        $region25: #{multihead_attention_forward.1} parent=11 // pred_check
          %p366 = pneg %p202
        $region26: #{multihead_attention_forward.1} parent=11 // pred_check_branch
          %368 = sbr.rel (%p366) target = $region28
        $region27: #{multihead_attention_forward.1} parent=11 // pred_region
          _
        $region28: #{multihead_attention_forward.1} parent=11 // pred_fallthru
          _
        // Predicated region
        $region29: #{multihead_attention_forward.1} parent=11 // pred_check
          %p369 = pneg %p223
        $region30: #{multihead_attention_forward.1} parent=11 // pred_check_branch
          %371 = sbr.rel (%p369) target = $region32
        $region31: #{multihead_attention_forward.1} parent=11 // pred_region
          _
        $region32: #{multihead_attention_forward.1} parent=11 // pred_fallthru
          _
        // Predicated region
        $region33: #{multihead_attention_forward.1} parent=11 // pred_check
          %p372 = pneg %p244
        $region34: #{multihead_attention_forward.1} parent=11 // pred_check_branch
          %374 = sbr.rel (%p372) target = $region36
        $region35: #{multihead_attention_forward.1} parent=11 // pred_region
          _
        $region36: #{multihead_attention_forward.1} parent=11 // pred_fallthru
          _
        // Predicated region
        $region37: #{multihead_attention_forward.1} parent=11 // pred_check
          %p375 = pneg %p265
        $region38: #{multihead_attention_forward.1} parent=11 // pred_check_branch
          %377 = sbr.rel (%p375) target = $region40
        $region39: #{multihead_attention_forward.1} parent=11 // pred_region
          _
        $region40: #{multihead_attention_forward.1} parent=11 // pred_fallthru
          _
        // Predicated region
        $region41: #{multihead_attention_forward.1} parent=11 // pred_check
          %p378 = pneg %p286
        $region42: #{multihead_attention_forward.1} parent=11 // pred_check_branch
          %380 = sbr.rel (%p378) target = $region44
        $region43: #{multihead_attention_forward.1} parent=11 // pred_region
          _
        $region44: #{multihead_attention_forward.1} parent=11 // pred_fallthru
          _
      $region12: #{multihead_attention_forward.1} parent=5 // pred_fallthru
        _
      %p381 = scmp.lt.s32.totalorder %s22, 2
      // Predicated region
      $region45: #{multihead_attention_forward.1} parent=5 // pred_check
        %p382 = pneg %p381
      $region46: #{multihead_attention_forward.1} parent=5 // pred_check_branch
        %384 = sbr.rel (%p382) target = $region48
      $region47: #{multihead_attention_forward.1} parent=5 // pred_region
        // Predicated region
        $region49: #{multihead_attention_forward.1} parent=47 // pred_check
          %p385 = pneg %p56
        $region50: #{multihead_attention_forward.1} parent=47 // pred_check_branch
          %387 = sbr.rel (%p385) target = $region52
        $region51: #{multihead_attention_forward.1} parent=47 // pred_region
          %p388 = scmp.lt.s32.totalorder %s29, 1
          %s389 = scalar_select %p388, %s29, 1
          %p390 = scmp.lt.s32.totalorder %s30, 0
          %s391 = scalar_select %p390, %s30, 0
          %s392 = smul.addr %s389, 32
          %s393 = sadd.s32 %s391, %s392
          %s394 = smul.addr %s393, 4
          %s395 = scalar_lea.vmem %s0, %s394
        $region52: #{multihead_attention_forward.1} parent=47 // pred_fallthru
          _
        // Predicated region
        $region53: #{multihead_attention_forward.1} parent=47 // pred_check
          %p396 = pneg %p84
        $region54: #{multihead_attention_forward.1} parent=47 // pred_check_branch
          %398 = sbr.rel (%p396) target = $region56
        $region55: #{multihead_attention_forward.1} parent=47 // pred_region
          %p399 = scmp.lt.s32.totalorder %s29, 1
          %s400 = scalar_select %p399, %s29, 1
          %p401 = scmp.lt.s32.totalorder %s30, 0
          %s402 = scalar_select %p401, %s30, 0
          %s403 = smul.addr %s400, 32
          %s404 = sadd.s32 %s402, %s403
          %s405 = smul.addr %s404, 4
          %s406 = scalar_lea.vmem %s1, %s405
        $region56: #{multihead_attention_forward.1} parent=47 // pred_fallthru
          _
        // Predicated region
        $region57: #{multihead_attention_forward.1} parent=47 // pred_check
          %p407 = pneg %p112
        $region58: #{multihead_attention_forward.1} parent=47 // pred_check_branch
          %409 = sbr.rel (%p407) target = $region60
        $region59: #{multihead_attention_forward.1} parent=47 // pred_region
          %p410 = scmp.lt.s32.totalorder %s29, 1
          %s411 = scalar_select %p410, %s29, 1
          %p412 = scmp.lt.s32.totalorder %s30, 0
          %s413 = scalar_select %p412, %s30, 0
          %s414 = smul.addr %s411, 32
          %s415 = sadd.s32 %s413, %s414
          %s416 = smul.addr %s415, 4
          %s417 = scalar_lea.vmem %s2, %s416
        $region60: #{multihead_attention_forward.1} parent=47 // pred_fallthru
          _
      $region48: #{multihead_attention_forward.1} parent=5 // pred_fallthru
        _
      %p418 = scmp.le.s32.totalorder 1, %s22
      %p419 = scmp.lt.s32.totalorder %s22, 3
      %p420 = pnand %p418, %p419
      %p421 = pneg %p420
      // Predicated region
      $region61: #{multihead_attention_forward.1} parent=5 // pred_check
        _
      $region62: #{multihead_attention_forward.1} parent=5 // pred_check_branch
        %423 = sbr.rel (%p420) target = $region64
      $region63: #{multihead_attention_forward.1} parent=5 // pred_region
        %s424 = ssub.s32 %s22, 1
        %p425 = scmp.lt.s32.totalorder %s31, 1
        %s426 = scalar_select %p425, %s31, 1
        %p427 = scmp.lt.s32.totalorder %s32, 0
        %s428 = scalar_select %p427, %s32, 0
        %s429 = smul.addr %s426, 32
        %s430 = sadd.s32 %s428, %s429
        %s431 = smul.addr %s430, 4
        %s432 = scalar_lea.vmem %s0, %s431
        %p433 = pneg %p62
        %p434 = pneg %p59
        %p435 = scmp.lt.s32.totalorder %s31, 1
        %s436 = scalar_select %p435, %s31, 1
        %p437 = scmp.lt.s32.totalorder %s32, 0
        %s438 = scalar_select %p437, %s32, 0
        %s439 = smul.addr %s436, 32
        %s440 = sadd.s32 %s438, %s439
        %s441 = smul.addr %s440, 4
        %s442 = scalar_lea.vmem %s1, %s441
        %p443 = pneg %p90
        %p444 = pneg %p87
        %p445 = scmp.lt.s32.totalorder %s31, 1
        %s446 = scalar_select %p445, %s31, 1
        %p447 = scmp.lt.s32.totalorder %s32, 0
        %s448 = scalar_select %p447, %s32, 0
        %s449 = smul.addr %s446, 32
        %s450 = sadd.s32 %s448, %s449
        %s451 = smul.addr %s450, 4
        %s452 = scalar_lea.vmem %s2, %s451
        %p453 = pneg %p118
        %p454 = pneg %p115
        %p455 = pneg %p139
        %p456 = pneg %p136
        %p457 = pneg %p160
        %p458 = pneg %p157
        %p459 = pneg %p181
        %p460 = pneg %p178
        %p461 = pneg %p202
        %p462 = pneg %p199
        %p463 = pneg %p223
        %p464 = pneg %p220
        %p465 = pneg %p244
        %p466 = pneg %p241
        %p467 = pneg %p265
        %p468 = pneg %p262
        %p469 = pneg %p286
        %p470 = pneg %p283
        %p471 = pneg %p314
        %p472 = pneg %p311
        %p473 = scmp.lt.s32.totalorder %s31, 1
        %s474 = scalar_select %p473, %s31, 1
        %p475 = scmp.lt.s32.totalorder %s32, 0
        %s476 = scalar_select %p475, %s32, 0
        %s477 = smul.addr %s474, 32
        %s478 = sadd.s32 %s476, %s477
        %s479 = smul.addr %s478, 4
        %s480 = scalar_lea.vmem %s11, %s479
        %p481 = pneg %p342
        %p482 = pneg %p339
        %s483 = sand.u32 %s329, 1
        %s484 = scalar_lea.sflag [#allocation4], %s483
        %s485 = sand.u32 %s329, 1
        %s486 = smul.addr %s485, 128
        %s487 = scalar_lea.vmem [#allocation3], %s486
        %p488 = scmp.lt.s32.totalorder %s31, 1
        %s489 = scalar_select %p488, %s31, 1
        %p490 = scmp.lt.s32.totalorder %s32, 0
        %s491 = scalar_select %p490, %s32, 0
        %s492 = smul.addr %s489, 32
        %s493 = sadd.s32 %s491, %s492
        %s494 = smul.addr %s493, 4
        %s495 = scalar_lea.vmem %s0, %s494
        %p496 = scmp.lt.s32.totalorder %s31, 1
        %s497 = scalar_select %p496, %s31, 1
        %p498 = scmp.lt.s32.totalorder %s32, 0
        %s499 = scalar_select %p498, %s32, 0
        %s500 = smul.addr %s497, 32
        %s501 = sadd.s32 %s499, %s500
        %s502 = smul.addr %s501, 4
        %s503 = scalar_lea.vmem %s1, %s502
        %p504 = scmp.lt.s32.totalorder %s31, 1
        %s505 = scalar_select %p504, %s31, 1
        %p506 = scmp.lt.s32.totalorder %s32, 0
        %s507 = scalar_select %p506, %s32, 0
        %s508 = smul.addr %s505, 32
        %s509 = sadd.s32 %s507, %s508
        %s510 = smul.addr %s509, 4
        %s511 = scalar_lea.vmem %s2, %s510
        %p512 = scmp.lt.s32.totalorder %s31, 1
        %s513 = scalar_select %p512, %s31, 1
        %p514 = scmp.lt.s32.totalorder %s32, 0
        %s515 = scalar_select %p514, %s32, 0
        %s516 = smul.addr %s513, 32
        %s517 = sadd.s32 %s515, %s516
        %s518 = smul.addr %s517, 4
        %s519 = scalar_lea.vmem %s11, %s518
        %s520 = smul.u32 4, %s32
        %v521 = vld [vmem:[%s3] sm:$0xff]
        %v522 = vld [vmem:[%s3 + $0x8] sm:$0xff]
        %v523 = vld [vmem:[%s3 + $0x10] sm:$0xff]
        %v524 = vld [vmem:[%s3 + $0x18] sm:$0xff]
        %v525 = vld [vmem:[%s4] sm:$0xff]
        %v526 = vld [vmem:[%s4 + $0x8] sm:$0xff]
        %v527 = vld [vmem:[%s4 + $0x10] sm:$0xff]
        %v528 = vld [vmem:[%s4 + $0x18] sm:$0xff]
        %v529 = vld [vmem:[%s5] sm:$0xff]
        %v530 = vld [vmem:[%s5 + $0x8] sm:$0xff]
        %v531 = vld [vmem:[%s5 + $0x10] sm:$0xff]
        %v532 = vld [vmem:[%s5 + $0x18] sm:$0xff]
        %v533 = vld [vmem:[%s6] sm:$0xff]
        %v534 = vld [vmem:[%s6 + $0x8] sm:$0xff]
        %v535 = vld [vmem:[%s6 + $0x10] sm:$0xff]
        %v536 = vld [vmem:[%s6 + $0x18] sm:$0xff]
        %v537 = vld [vmem:[%s7] sm:$0xff]
        %v538 = vld [vmem:[%s7 + $0x8] sm:$0xff]
        %v539 = vld [vmem:[%s7 + $0x10] sm:$0xff]
        %v540 = vld [vmem:[%s7 + $0x18] sm:$0xff]
        %v541 = vld [vmem:[%s8] sm:$0xff]
        %v542 = vld [vmem:[%s8 + $0x8] sm:$0xff]
        %v543 = vld [vmem:[%s8 + $0x10] sm:$0xff]
        %v544 = vld [vmem:[%s8 + $0x18] sm:$0xff]
        %v545 = vld [vmem:[%s9] sm:$0xff]
        %v546 = vld [vmem:[%s9 + $0x8] sm:$0xff]
        %v547 = vld [vmem:[%s9 + $0x10] sm:$0xff]
        %v548 = vld [vmem:[%s9 + $0x18] sm:$0xff]
        %v549 = vld [vmem:[%s10] sm:$0xff]
        %v550 = vld [vmem:[%s10 + $0x8] sm:$0xff]
        %v551 = vld [vmem:[%s10 + $0x10] sm:$0xff]
        %v552 = vld [vmem:[%s10 + $0x18] sm:$0xff]
        %v553 = vld [vmem:[%s495] sm:$0x1]
        %v554 = vld [vmem:[%s495 + $0x4] sm:$0x1]
        %v555 = vld [vmem:[%s495 + $0x8] sm:$0x1]
        %v556 = vld [vmem:[%s495 + $0xc] sm:$0x1]
        %v557 = vld [vmem:[%s495 + $0x10] sm:$0x1]
        %v558 = vld [vmem:[%s495 + $0x14] sm:$0x1]
        %v559 = vld [vmem:[%s495 + $0x18] sm:$0x1]
        %v560 = vld [vmem:[%s495 + $0x1c] sm:$0x1]
        %v561 = vld [vmem:[%s495 + $0x20] sm:$0x1]
        %v562 = vld [vmem:[%s495 + $0x24] sm:$0x1]
        %v563 = vld [vmem:[%s495 + $0x28] sm:$0x1]
        %v564 = vld [vmem:[%s495 + $0x2c] sm:$0x1]
        %v565 = vld [vmem:[%s495 + $0x30] sm:$0x1]
        %v566 = vld [vmem:[%s495 + $0x34] sm:$0x1]
        %v567 = vld [vmem:[%s495 + $0x38] sm:$0x1]
        %v568 = vld [vmem:[%s495 + $0x3c] sm:$0x1]
        %v569 = vld [vmem:[%s495 + $0x40] sm:$0x1]
        %v570 = vld [vmem:[%s495 + $0x44] sm:$0x1]
        %v571 = vld [vmem:[%s495 + $0x48] sm:$0x1]
        %v572 = vld [vmem:[%s495 + $0x4c] sm:$0x1]
        %v573 = vld [vmem:[%s495 + $0x50] sm:$0x1]
        %v574 = vld [vmem:[%s495 + $0x54] sm:$0x1]
        %v575 = vld [vmem:[%s495 + $0x58] sm:$0x1]
        %v576 = vld [vmem:[%s495 + $0x5c] sm:$0x1]
        %v577 = vld [vmem:[%s495 + $0x60] sm:$0x1]
        %v578 = vld [vmem:[%s495 + $0x64] sm:$0x1]
        %v579 = vld [vmem:[%s495 + $0x68] sm:$0x1]
        %v580 = vld [vmem:[%s495 + $0x6c] sm:$0x1]
        %v581 = vld [vmem:[%s495 + $0x70] sm:$0x1]
        %v582 = vld [vmem:[%s495 + $0x74] sm:$0x1]
        %v583 = vld [vmem:[%s495 + $0x78] sm:$0x1]
        %v584 = vld [vmem:[%s495 + $0x7c] sm:$0x1]
        %v585 = vld [vmem:[%s503] sm:$0x1]
        %v586 = vld [vmem:[%s503 + $0x4] sm:$0x1]
        %v587 = vld [vmem:[%s503 + $0x8] sm:$0x1]
        %v588 = vld [vmem:[%s503 + $0xc] sm:$0x1]
        %v589 = vld [vmem:[%s503 + $0x10] sm:$0x1]
        %v590 = vld [vmem:[%s503 + $0x14] sm:$0x1]
        %v591 = vld [vmem:[%s503 + $0x18] sm:$0x1]
        %v592 = vld [vmem:[%s503 + $0x1c] sm:$0x1]
        %v593 = vld [vmem:[%s503 + $0x20] sm:$0x1]
        %v594 = vld [vmem:[%s503 + $0x24] sm:$0x1]
        %v595 = vld [vmem:[%s503 + $0x28] sm:$0x1]
        %v596 = vld [vmem:[%s503 + $0x2c] sm:$0x1]
        %v597 = vld [vmem:[%s503 + $0x30] sm:$0x1]
        %v598 = vld [vmem:[%s503 + $0x34] sm:$0x1]
        %v599 = vld [vmem:[%s503 + $0x38] sm:$0x1]
        %v600 = vld [vmem:[%s503 + $0x3c] sm:$0x1]
        %v601 = vld [vmem:[%s503 + $0x40] sm:$0x1]
        %v602 = vld [vmem:[%s503 + $0x44] sm:$0x1]
        %v603 = vld [vmem:[%s503 + $0x48] sm:$0x1]
        %v604 = vld [vmem:[%s503 + $0x4c] sm:$0x1]
        %v605 = vld [vmem:[%s503 + $0x50] sm:$0x1]
        %v606 = vld [vmem:[%s503 + $0x54] sm:$0x1]
        %v607 = vld [vmem:[%s503 + $0x58] sm:$0x1]
        %v608 = vld [vmem:[%s503 + $0x5c] sm:$0x1]
        %v609 = vld [vmem:[%s503 + $0x60] sm:$0x1]
        %v610 = vld [vmem:[%s503 + $0x64] sm:$0x1]
        %v611 = vld [vmem:[%s503 + $0x68] sm:$0x1]
        %v612 = vld [vmem:[%s503 + $0x6c] sm:$0x1]
        %v613 = vld [vmem:[%s503 + $0x70] sm:$0x1]
        %v614 = vld [vmem:[%s503 + $0x74] sm:$0x1]
        %v615 = vld [vmem:[%s503 + $0x78] sm:$0x1]
        %v616 = vld [vmem:[%s503 + $0x7c] sm:$0x1]
        %v617 = vld [vmem:[%s511] sm:$0x1]
        %v618 = vld [vmem:[%s511 + $0x4] sm:$0x1]
        %v619 = vld [vmem:[%s511 + $0x8] sm:$0x1]
        %v620 = vld [vmem:[%s511 + $0xc] sm:$0x1]
        %v621 = vld [vmem:[%s511 + $0x10] sm:$0x1]
        %v622 = vld [vmem:[%s511 + $0x14] sm:$0x1]
        %v623 = vld [vmem:[%s511 + $0x18] sm:$0x1]
        %v624 = vld [vmem:[%s511 + $0x1c] sm:$0x1]
        %v625 = vld [vmem:[%s511 + $0x20] sm:$0x1]
        %v626 = vld [vmem:[%s511 + $0x24] sm:$0x1]
        %v627 = vld [vmem:[%s511 + $0x28] sm:$0x1]
        %v628 = vld [vmem:[%s511 + $0x2c] sm:$0x1]
        %v629 = vld [vmem:[%s511 + $0x30] sm:$0x1]
        %v630 = vld [vmem:[%s511 + $0x34] sm:$0x1]
        %v631 = vld [vmem:[%s511 + $0x38] sm:$0x1]
        %v632 = vld [vmem:[%s511 + $0x3c] sm:$0x1]
        %v633 = vld [vmem:[%s511 + $0x40] sm:$0x1]
        %v634 = vld [vmem:[%s511 + $0x44] sm:$0x1]
        %v635 = vld [vmem:[%s511 + $0x48] sm:$0x1]
        %v636 = vld [vmem:[%s511 + $0x4c] sm:$0x1]
        %v637 = vld [vmem:[%s511 + $0x50] sm:$0x1]
        %v638 = vld [vmem:[%s511 + $0x54] sm:$0x1]
        %v639 = vld [vmem:[%s511 + $0x58] sm:$0x1]
        %v640 = vld [vmem:[%s511 + $0x5c] sm:$0x1]
        %v641 = vld [vmem:[%s511 + $0x60] sm:$0x1]
        %v642 = vld [vmem:[%s511 + $0x64] sm:$0x1]
        %v643 = vld [vmem:[%s511 + $0x68] sm:$0x1]
        %v644 = vld [vmem:[%s511 + $0x6c] sm:$0x1]
        %v645 = vld [vmem:[%s511 + $0x70] sm:$0x1]
        %v646 = vld [vmem:[%s511 + $0x74] sm:$0x1]
        %v647 = vld [vmem:[%s511 + $0x78] sm:$0x1]
        %v648 = vld [vmem:[%s511 + $0x7c] sm:$0x1]
        %650 = vset.pattern.permute.xlu0 0
        %651 = vperm.xlu0 %650, %v537
        %v652 = vpop.permute.xlu0 %651
        %655 = vset.pattern.permute.xlu0 0
        %656 = vperm.xlu0 %655, %v538
        %v657 = vpop.permute.xlu0 %656
        %660 = vset.pattern.permute.xlu0 0
        %661 = vperm.xlu0 %660, %v539
        %v662 = vpop.permute.xlu0 %661
        %665 = vset.pattern.permute.xlu0 0
        %666 = vperm.xlu0 %665, %v540
        %v667 = vpop.permute.xlu0 %666
        %v701 = vrot.slane %v554, 7
        %vm702 = vcmask 1041409
        %v703 = vsel %vm702, %v701, %v553
        %v704 = vrot.slane %v555, 6
        %vm705 = vcmask 1042434
        %v706 = vsel %vm705, %v704, %v703
        %v707 = vrot.slane %v556, 5
        %vm708 = vcmask 1043459
        %v709 = vsel %vm708, %v707, %v706
        %v710 = vrot.slane %v557, 4
        %vm711 = vcmask 1044484
        %v712 = vsel %vm711, %v710, %v709
        %v713 = vrot.slane %v558, 3
        %vm714 = vcmask 1045509
        %v715 = vsel %vm714, %v713, %v712
        %v716 = vrot.slane %v559, 2
        %vm717 = vcmask 1046534
        %v718 = vsel %vm717, %v716, %v715
        %v719 = vrot.slane %v560, 1
        %vm720 = vcmask 1047559
        %v721 = vsel %vm720, %v719, %v718
        %v722 = vrot.slane %v562, 7
        %v723 = vsel %vm702, %v722, %v561
        %v724 = vrot.slane %v563, 6
        %v725 = vsel %vm705, %v724, %v723
        %v726 = vrot.slane %v564, 5
        %v727 = vsel %vm708, %v726, %v725
        %v728 = vrot.slane %v565, 4
        %v729 = vsel %vm711, %v728, %v727
        %v730 = vrot.slane %v566, 3
        %v731 = vsel %vm714, %v730, %v729
        %v732 = vrot.slane %v567, 2
        %v733 = vsel %vm717, %v732, %v731
        %v734 = vrot.slane %v568, 1
        %v735 = vsel %vm720, %v734, %v733
        %v736 = vrot.slane %v570, 7
        %v737 = vsel %vm702, %v736, %v569
        %v738 = vrot.slane %v571, 6
        %v739 = vsel %vm705, %v738, %v737
        %v740 = vrot.slane %v572, 5
        %v741 = vsel %vm708, %v740, %v739
        %v742 = vrot.slane %v573, 4
        %v743 = vsel %vm711, %v742, %v741
        %v744 = vrot.slane %v574, 3
        %v745 = vsel %vm714, %v744, %v743
        %v746 = vrot.slane %v575, 2
        %v747 = vsel %vm717, %v746, %v745
        %v748 = vrot.slane %v576, 1
        %v749 = vsel %vm720, %v748, %v747
        %v750 = vrot.slane %v578, 7
        %v751 = vsel %vm702, %v750, %v577
        %v752 = vrot.slane %v579, 6
        %v753 = vsel %vm705, %v752, %v751
        %v754 = vrot.slane %v580, 5
        %v755 = vsel %vm708, %v754, %v753
        %v756 = vrot.slane %v581, 4
        %v757 = vsel %vm711, %v756, %v755
        %v758 = vrot.slane %v582, 3
        %v759 = vsel %vm714, %v758, %v757
        %v760 = vrot.slane %v583, 2
        %v761 = vsel %vm717, %v760, %v759
        %v762 = vrot.slane %v584, 1
        %v763 = vsel %vm720, %v762, %v761
        %vm768 = vcmask 261120
        %v770 = vsel %vm768, %v521, 0
        %v773 = vsel %vm768, %v522, 0
        %v776 = vsel %vm768, %v523, 0
        %v779 = vsel %vm768, %v524, 0
        %781 = vmatpush.msra.mxu0 0.0
        %782 = vmatpush.msra.mxu0 0.0
        %783 = vmatpush.msra.mxu0 0.0
        %784 = vmatpush.msra.mxu0 0.0
        %785 = vmatpush.msra.mxu0 0.0
        %786 = vmatpush.msra.mxu0 0.0
        %787 = vmatpush.msra.mxu0 0.0
        %788 = vmatpush.msra.mxu0 0.0
        %789 = vmatpush.msra.mxu0 0.0
        %790 = vmatpush.msra.mxu0 0.0
        %791 = vmatpush.msra.mxu0 0.0
        %792 = vmatpush.msra.mxu0 0.0
        %793 = vmatpush.msra.mxu0 %v763
        %794 = vmatpush.msra.mxu0 %v749
        %795 = vmatpush.msra.mxu0 %v735
        %796 = vmatpush.msra.mxu0 %v721
        %797 = vmatmul.f32.gmra.mxu0 %v770
        %v798 = vpop.f32.mrf.mxu0
        %v799 = vadd.f32 %v652, %v798
        %800 = vmatmul.f32.gmra.mxu0 %v773
        %v801 = vpop.f32.mrf.mxu0
        %v802 = vadd.f32 %v657, %v801
        %803 = vmatmul.f32.gmra.mxu0 %v776
        %v804 = vpop.f32.mrf.mxu0
        %v805 = vadd.f32 %v662, %v804
        %806 = vmatmul.f32.gmra.mxu0 %v779
        %v807 = vpop.f32.mrf.mxu0
        %v808 = vadd.f32 %v667, %v807
        %809 = vdwg.mxu0
        %811 = vset.pattern.permute.xlu0 0
        %812 = vperm.xlu0 %811, %v541
        %v813 = vpop.permute.xlu0 %812
        %816 = vset.pattern.permute.xlu0 0
        %817 = vperm.xlu0 %816, %v542
        %v818 = vpop.permute.xlu0 %817
        %821 = vset.pattern.permute.xlu0 0
        %822 = vperm.xlu0 %821, %v543
        %v823 = vpop.permute.xlu0 %822
        %826 = vset.pattern.permute.xlu0 0
        %827 = vperm.xlu0 %826, %v544
        %v828 = vpop.permute.xlu0 %827
        %v862 = vrot.slane %v586, 7
        %v863 = vsel %vm702, %v862, %v585
        %v864 = vrot.slane %v587, 6
        %v865 = vsel %vm705, %v864, %v863
        %v866 = vrot.slane %v588, 5
        %v867 = vsel %vm708, %v866, %v865
        %v868 = vrot.slane %v589, 4
        %v869 = vsel %vm711, %v868, %v867
        %v870 = vrot.slane %v590, 3
        %v871 = vsel %vm714, %v870, %v869
        %v872 = vrot.slane %v591, 2
        %v873 = vsel %vm717, %v872, %v871
        %v874 = vrot.slane %v592, 1
        %v875 = vsel %vm720, %v874, %v873
        %v876 = vrot.slane %v594, 7
        %v877 = vsel %vm702, %v876, %v593
        %v878 = vrot.slane %v595, 6
        %v879 = vsel %vm705, %v878, %v877
        %v880 = vrot.slane %v596, 5
        %v881 = vsel %vm708, %v880, %v879
        %v882 = vrot.slane %v597, 4
        %v883 = vsel %vm711, %v882, %v881
        %v884 = vrot.slane %v598, 3
        %v885 = vsel %vm714, %v884, %v883
        %v886 = vrot.slane %v599, 2
        %v887 = vsel %vm717, %v886, %v885
        %v888 = vrot.slane %v600, 1
        %v889 = vsel %vm720, %v888, %v887
        %v890 = vrot.slane %v602, 7
        %v891 = vsel %vm702, %v890, %v601
        %v892 = vrot.slane %v603, 6
        %v893 = vsel %vm705, %v892, %v891
        %v894 = vrot.slane %v604, 5
        %v895 = vsel %vm708, %v894, %v893
        %v896 = vrot.slane %v605, 4
        %v897 = vsel %vm711, %v896, %v895
        %v898 = vrot.slane %v606, 3
        %v899 = vsel %vm714, %v898, %v897
        %v900 = vrot.slane %v607, 2
        %v901 = vsel %vm717, %v900, %v899
        %v902 = vrot.slane %v608, 1
        %v903 = vsel %vm720, %v902, %v901
        %v904 = vrot.slane %v610, 7
        %v905 = vsel %vm702, %v904, %v609
        %v906 = vrot.slane %v611, 6
        %v907 = vsel %vm705, %v906, %v905
        %v908 = vrot.slane %v612, 5
        %v909 = vsel %vm708, %v908, %v907
        %v910 = vrot.slane %v613, 4
        %v911 = vsel %vm711, %v910, %v909
        %v912 = vrot.slane %v614, 3
        %v913 = vsel %vm714, %v912, %v911
        %v914 = vrot.slane %v615, 2
        %v915 = vsel %vm717, %v914, %v913
        %v916 = vrot.slane %v616, 1
        %v917 = vsel %vm720, %v916, %v915
        %v923 = vsel %vm768, %v525, 0
        %v926 = vsel %vm768, %v526, 0
        %v929 = vsel %vm768, %v527, 0
        %v932 = vsel %vm768, %v528, 0
        %934 = vmatpush.msra.mxu0 0.0
        %935 = vmatpush.msra.mxu0 0.0
        %936 = vmatpush.msra.mxu0 0.0
        %937 = vmatpush.msra.mxu0 0.0
        %938 = vmatpush.msra.mxu0 0.0
        %939 = vmatpush.msra.mxu0 0.0
        %940 = vmatpush.msra.mxu0 0.0
        %941 = vmatpush.msra.mxu0 0.0
        %942 = vmatpush.msra.mxu0 0.0
        %943 = vmatpush.msra.mxu0 0.0
        %944 = vmatpush.msra.mxu0 0.0
        %945 = vmatpush.msra.mxu0 0.0
        %946 = vmatpush.msra.mxu0 %v917
        %947 = vmatpush.msra.mxu0 %v903
        %948 = vmatpush.msra.mxu0 %v889
        %949 = vmatpush.msra.mxu0 %v875
        %950 = vmatmul.f32.gmra.mxu0 %v923
        %v951 = vpop.f32.mrf.mxu0
        %v952 = vadd.f32 %v813, %v951
        %953 = vmatmul.f32.gmra.mxu0 %v926
        %v954 = vpop.f32.mrf.mxu0
        %v955 = vadd.f32 %v818, %v954
        %956 = vmatmul.f32.gmra.mxu0 %v929
        %v957 = vpop.f32.mrf.mxu0
        %v958 = vadd.f32 %v823, %v957
        %959 = vmatmul.f32.gmra.mxu0 %v932
        %v960 = vpop.f32.mrf.mxu0
        %v961 = vadd.f32 %v828, %v960
        %962 = vdwg.mxu0
        %964 = vset.pattern.permute.xlu0 0
        %965 = vperm.xlu0 %964, %v545
        %v966 = vpop.permute.xlu0 %965
        %969 = vset.pattern.permute.xlu0 0
        %970 = vperm.xlu0 %969, %v546
        %v971 = vpop.permute.xlu0 %970
        %974 = vset.pattern.permute.xlu0 0
        %975 = vperm.xlu0 %974, %v547
        %v976 = vpop.permute.xlu0 %975
        %979 = vset.pattern.permute.xlu0 0
        %980 = vperm.xlu0 %979, %v548
        %v981 = vpop.permute.xlu0 %980
        %v1015 = vrot.slane %v618, 7
        %v1016 = vsel %vm702, %v1015, %v617
        %v1017 = vrot.slane %v619, 6
        %v1018 = vsel %vm705, %v1017, %v1016
        %v1019 = vrot.slane %v620, 5
        %v1020 = vsel %vm708, %v1019, %v1018
        %v1021 = vrot.slane %v621, 4
        %v1022 = vsel %vm711, %v1021, %v1020
        %v1023 = vrot.slane %v622, 3
        %v1024 = vsel %vm714, %v1023, %v1022
        %v1025 = vrot.slane %v623, 2
        %v1026 = vsel %vm717, %v1025, %v1024
        %v1027 = vrot.slane %v624, 1
        %v1028 = vsel %vm720, %v1027, %v1026
        %v1029 = vrot.slane %v626, 7
        %v1030 = vsel %vm702, %v1029, %v625
        %v1031 = vrot.slane %v627, 6
        %v1032 = vsel %vm705, %v1031, %v1030
        %v1033 = vrot.slane %v628, 5
        %v1034 = vsel %vm708, %v1033, %v1032
        %v1035 = vrot.slane %v629, 4
        %v1036 = vsel %vm711, %v1035, %v1034
        %v1037 = vrot.slane %v630, 3
        %v1038 = vsel %vm714, %v1037, %v1036
        %v1039 = vrot.slane %v631, 2
        %v1040 = vsel %vm717, %v1039, %v1038
        %v1041 = vrot.slane %v632, 1
        %v1042 = vsel %vm720, %v1041, %v1040
        %v1043 = vrot.slane %v634, 7
        %v1044 = vsel %vm702, %v1043, %v633
        %v1045 = vrot.slane %v635, 6
        %v1046 = vsel %vm705, %v1045, %v1044
        %v1047 = vrot.slane %v636, 5
        %v1048 = vsel %vm708, %v1047, %v1046
        %v1049 = vrot.slane %v637, 4
        %v1050 = vsel %vm711, %v1049, %v1048
        %v1051 = vrot.slane %v638, 3
        %v1052 = vsel %vm714, %v1051, %v1050
        %v1053 = vrot.slane %v639, 2
        %v1054 = vsel %vm717, %v1053, %v1052
        %v1055 = vrot.slane %v640, 1
        %v1056 = vsel %vm720, %v1055, %v1054
        %v1057 = vrot.slane %v642, 7
        %v1058 = vsel %vm702, %v1057, %v641
        %v1059 = vrot.slane %v643, 6
        %v1060 = vsel %vm705, %v1059, %v1058
        %v1061 = vrot.slane %v644, 5
        %v1062 = vsel %vm708, %v1061, %v1060
        %v1063 = vrot.slane %v645, 4
        %v1064 = vsel %vm711, %v1063, %v1062
        %v1065 = vrot.slane %v646, 3
        %v1066 = vsel %vm714, %v1065, %v1064
        %v1067 = vrot.slane %v647, 2
        %v1068 = vsel %vm717, %v1067, %v1066
        %v1069 = vrot.slane %v648, 1
        %v1070 = vsel %vm720, %v1069, %v1068
        %v1076 = vsel %vm768, %v529, 0
        %v1079 = vsel %vm768, %v530, 0
        %v1082 = vsel %vm768, %v531, 0
        %v1085 = vsel %vm768, %v532, 0
        %1087 = vmatpush.msra.mxu0 0.0
        %1088 = vmatpush.msra.mxu0 0.0
        %1089 = vmatpush.msra.mxu0 0.0
        %1090 = vmatpush.msra.mxu0 0.0
        %1091 = vmatpush.msra.mxu0 0.0
        %1092 = vmatpush.msra.mxu0 0.0
        %1093 = vmatpush.msra.mxu0 0.0
        %1094 = vmatpush.msra.mxu0 0.0
        %1095 = vmatpush.msra.mxu0 0.0
        %1096 = vmatpush.msra.mxu0 0.0
        %1097 = vmatpush.msra.mxu0 0.0
        %1098 = vmatpush.msra.mxu0 0.0
        %1099 = vmatpush.msra.mxu0 %v1070
        %1100 = vmatpush.msra.mxu0 %v1056
        %1101 = vmatpush.msra.mxu0 %v1042
        %1102 = vmatpush.msra.mxu0 %v1028
        %1103 = vmatmul.f32.gmra.mxu0 %v1076
        %v1104 = vpop.f32.mrf.mxu0
        %v1105 = vadd.f32 %v966, %v1104
        %1106 = vmatmul.f32.gmra.mxu0 %v1079
        %v1107 = vpop.f32.mrf.mxu0
        %v1108 = vadd.f32 %v971, %v1107
        %1109 = vmatmul.f32.gmra.mxu0 %v1082
        %v1110 = vpop.f32.mrf.mxu0
        %v1111 = vadd.f32 %v976, %v1110
        %1112 = vmatmul.f32.gmra.mxu0 %v1085
        %v1113 = vpop.f32.mrf.mxu0
        %v1114 = vadd.f32 %v981, %v1113
        %1115 = vdwg.mxu0
        %1116 = vxpose.xlu0.b32.start [1/16] %v799, 128
        %1117 = vxpose.xlu0.b32.cont [2/16] 0.0, 128
        %1118 = vxpose.xlu0.b32.cont [3/16] 0.0, 128
        %1119 = vxpose.xlu0.b32.cont [4/16] 0.0, 128
        %1120 = vxpose.xlu0.b32.cont [5/16] 0.0, 128
        %1121 = vxpose.xlu0.b32.cont [6/16] 0.0, 128
        %1122 = vxpose.xlu0.b32.cont [7/16] 0.0, 128
        %1123 = vxpose.xlu0.b32.cont [8/16] 0.0, 128
        %1124 = vxpose.xlu0.b32.cont [9/16] 0.0, 128
        %1125 = vxpose.xlu0.b32.cont [10/16] 0.0, 128
        %1126 = vxpose.xlu0.b32.cont [11/16] 0.0, 128
        %1127 = vxpose.xlu0.b32.cont [12/16] 0.0, 128
        %1128 = vxpose.xlu0.b32.cont [13/16] 0.0, 128
        %1129 = vxpose.xlu0.b32.cont [14/16] 0.0, 128
        %1130 = vxpose.xlu0.b32.cont [15/16] 0.0, 128
        %1131 = vxpose.xlu0.b32.end [16/16] 0.0, 128
        %v1132 = vpop.trf.xlu0
        %v1133 = vpop.trf.xlu0
        %v1134 = vpop.trf.xlu0
        %v1135 = vpop.trf.xlu0
        %v1136 = vpop.trf.xlu0
        %v1137 = vpop.trf.xlu0
        %v1138 = vpop.trf.xlu0
        %v1139 = vpop.trf.xlu0
        %v1140 = vpop.trf.xlu0
        %v1141 = vpop.trf.xlu0
        %v1142 = vpop.trf.xlu0
        %v1143 = vpop.trf.xlu0
        %v1144 = vpop.trf.xlu0
        %v1145 = vpop.trf.xlu0
        %v1146 = vpop.trf.xlu0
        %v1147 = vpop.trf.xlu0
        %vm1148 = vcmask 64512
        %v1150 = vsel %vm1148, %v1132, 0
        %1152 = vmatpush.msra.mxu0 0.0
        %1153 = vmatpush.msra.mxu0 0.0
        %1154 = vmatpush.msra.mxu0 0.0
        %1155 = vmatpush.msra.mxu0 0.0
        %1156 = vmatpush.msra.mxu0 0.0
        %1157 = vmatpush.msra.mxu0 0.0
        %1158 = vmatpush.msra.mxu0 0.0
        %1159 = vmatpush.msra.mxu0 0.0
        %1160 = vmatpush.msra.mxu0 0.0
        %1161 = vmatpush.msra.mxu0 0.0
        %1162 = vmatpush.msra.mxu0 0.0
        %1163 = vmatpush.msra.mxu0 0.0
        %1164 = vmatpush.msra.mxu0 0.0
        %1165 = vmatpush.msra.mxu0 0.0
        %1166 = vmatpush.msra.mxu0 0.0
        %1167 = vmatpush.msra.mxu0 %v952
        %1168 = vmatmul.f32.gmra.mxu0 %v1150
        %v1169 = vpop.f32.mrf.mxu0
        %v1170 = vadd.f32 0.0, %v1169
        %1171 = vdwg.mxu0
        %v1172 = vmul.f32 %v1170, 0.35355338
        %v1173 = vsel %vm1148, %v1172, -inf
        %1174 = vmax.xlane.f32.xlu0 %v1173
        %v1175 = vpop.xlane.xlu0 %1174
        %v1176 = vsub.f32 %v1172, %v1175
        %v1177 = vmul.f32 %v1176, 1.442695
        %v1178 = vpow.pop %v1177
        %v1179 = vsel %vm1148, %v1178, 0.0
        %1180 = vadd.xlane.f32.xlu0 %v1179
        %v1181 = vpop.xlane.xlu0 %1180
        %v1182 = vrcp.pop %v1181
        %v1183 = vmul.f32 %v1181, %v1182
        %v1184 = vsub.f32 1.0, %v1183
        %v1185 = vmul.f32 %v1182, %v1184
        %v1186 = vadd.f32 %v1182, %v1185
        %vm1187 = vweird.f32 %v1181
        %vm1188 = vweird.f32 %v1182
        %vm1189 = vmor %vm1187, %vm1188
        %v1190 = vsel %vm1189, %v1182, %v1186
        %v1191 = vand.u32 2147483647, %v1181
        %vm1192 = vcmp.eq.f32.partialorder %v1191, 8.507059e+37
        %v1193 = vand.u32 %v1181, 2147483648
        %v1194 = vor.u32 1.1754944e-38, %v1193
        %v1195 = vsel %vm1192, %v1194, %v1190
        %v1196 = vmul.f32 %v1178, %v1195
        %1197 = vst.msk [vmem:[%s487] sm:$0xff] %vm1148, %v1196
        %v1199 = vsel %vm1148, %v1105, 0
        %v1202 = vsel %vm1148, %v1196, 0
        %1204 = vmatpush.xpose.msra.mxu0 0.0
        %1205 = vmatpush.xpose.msra.mxu0 0.0
        %1206 = vmatpush.xpose.msra.mxu0 0.0
        %1207 = vmatpush.xpose.msra.mxu0 0.0
        %1208 = vmatpush.xpose.msra.mxu0 0.0
        %1209 = vmatpush.xpose.msra.mxu0 0.0
        %1210 = vmatpush.xpose.msra.mxu0 0.0
        %1211 = vmatpush.xpose.msra.mxu0 0.0
        %1212 = vmatpush.xpose.msra.mxu0 0.0
        %1213 = vmatpush.xpose.msra.mxu0 0.0
        %1214 = vmatpush.xpose.msra.mxu0 0.0
        %1215 = vmatpush.xpose.msra.mxu0 0.0
        %1216 = vmatpush.xpose.msra.mxu0 0.0
        %1217 = vmatpush.xpose.msra.mxu0 0.0
        %1218 = vmatpush.xpose.msra.mxu0 0.0
        %1219 = vmatpush.xpose.msra.mxu0 %v1202
        %1220 = vmatmul.f32.gmra.mxu0 %v1199
        %v1221 = vpop.f32.mrf.mxu0
        %v1222 = vadd.f32 0.0, %v1221
        %1223 = vdwg.mxu0
        %1224 = vst.msk [vmem:[#allocation2] sm:$0xff] %vm1148, %v1222
        %1225 = vxpose.xlu0.b32.start [1/16] %v802, 128
        %1226 = vxpose.xlu0.b32.cont [2/16] 0.0, 128
        %1227 = vxpose.xlu0.b32.cont [3/16] 0.0, 128
        %1228 = vxpose.xlu0.b32.cont [4/16] 0.0, 128
        %1229 = vxpose.xlu0.b32.cont [5/16] 0.0, 128
        %1230 = vxpose.xlu0.b32.cont [6/16] 0.0, 128
        %1231 = vxpose.xlu0.b32.cont [7/16] 0.0, 128
        %1232 = vxpose.xlu0.b32.cont [8/16] 0.0, 128
        %1233 = vxpose.xlu0.b32.cont [9/16] 0.0, 128
        %1234 = vxpose.xlu0.b32.cont [10/16] 0.0, 128
        %1235 = vxpose.xlu0.b32.cont [11/16] 0.0, 128
        %1236 = vxpose.xlu0.b32.cont [12/16] 0.0, 128
        %1237 = vxpose.xlu0.b32.cont [13/16] 0.0, 128
        %1238 = vxpose.xlu0.b32.cont [14/16] 0.0, 128
        %1239 = vxpose.xlu0.b32.cont [15/16] 0.0, 128
        %1240 = vxpose.xlu0.b32.end [16/16] 0.0, 128
        %v1241 = vpop.trf.xlu0
        %v1242 = vpop.trf.xlu0
        %v1243 = vpop.trf.xlu0
        %v1244 = vpop.trf.xlu0
        %v1245 = vpop.trf.xlu0
        %v1246 = vpop.trf.xlu0
        %v1247 = vpop.trf.xlu0
        %v1248 = vpop.trf.xlu0
        %v1249 = vpop.trf.xlu0
        %v1250 = vpop.trf.xlu0
        %v1251 = vpop.trf.xlu0
        %v1252 = vpop.trf.xlu0
        %v1253 = vpop.trf.xlu0
        %v1254 = vpop.trf.xlu0
        %v1255 = vpop.trf.xlu0
        %v1256 = vpop.trf.xlu0
        %v1258 = vsel %vm1148, %v1241, 0
        %1260 = vmatpush.msra.mxu0 0.0
        %1261 = vmatpush.msra.mxu0 0.0
        %1262 = vmatpush.msra.mxu0 0.0
        %1263 = vmatpush.msra.mxu0 0.0
        %1264 = vmatpush.msra.mxu0 0.0
        %1265 = vmatpush.msra.mxu0 0.0
        %1266 = vmatpush.msra.mxu0 0.0
        %1267 = vmatpush.msra.mxu0 0.0
        %1268 = vmatpush.msra.mxu0 0.0
        %1269 = vmatpush.msra.mxu0 0.0
        %1270 = vmatpush.msra.mxu0 0.0
        %1271 = vmatpush.msra.mxu0 0.0
        %1272 = vmatpush.msra.mxu0 0.0
        %1273 = vmatpush.msra.mxu0 0.0
        %1274 = vmatpush.msra.mxu0 0.0
        %1275 = vmatpush.msra.mxu0 %v955
        %1276 = vmatmul.f32.gmra.mxu0 %v1258
        %v1277 = vpop.f32.mrf.mxu0
        %v1278 = vadd.f32 0.0, %v1277
        %1279 = vdwg.mxu0
        %v1280 = vmul.f32 %v1278, 0.35355338
        %v1281 = vsel %vm1148, %v1280, -inf
        %1282 = vmax.xlane.f32.xlu0 %v1281
        %v1283 = vpop.xlane.xlu0 %1282
        %v1284 = vsub.f32 %v1280, %v1283
        %v1285 = vmul.f32 %v1284, 1.442695
        %v1286 = vpow.pop %v1285
        %v1287 = vsel %vm1148, %v1286, 0.0
        %1288 = vadd.xlane.f32.xlu0 %v1287
        %v1289 = vpop.xlane.xlu0 %1288
        %v1290 = vrcp.pop %v1289
        %v1291 = vmul.f32 %v1289, %v1290
        %v1292 = vsub.f32 1.0, %v1291
        %v1293 = vmul.f32 %v1290, %v1292
        %v1294 = vadd.f32 %v1290, %v1293
        %vm1295 = vweird.f32 %v1289
        %vm1296 = vweird.f32 %v1290
        %vm1297 = vmor %vm1295, %vm1296
        %v1298 = vsel %vm1297, %v1290, %v1294
        %v1299 = vand.u32 2147483647, %v1289
        %vm1300 = vcmp.eq.f32.partialorder %v1299, 8.507059e+37
        %v1301 = vand.u32 %v1289, 2147483648
        %v1302 = vor.u32 1.1754944e-38, %v1301
        %v1303 = vsel %vm1300, %v1302, %v1298
        %v1304 = vmul.f32 %v1286, %v1303
        %s1305 = scalar_lea.vmem %s487, 32 [#allocation3]
        %1306 = vst.msk [vmem:[%s1305] sm:$0xff] %vm1148, %v1304
        %v1308 = vsel %vm1148, %v1108, 0
        %v1311 = vsel %vm1148, %v1304, 0
        %1313 = vmatpush.xpose.msra.mxu0 0.0
        %1314 = vmatpush.xpose.msra.mxu0 0.0
        %1315 = vmatpush.xpose.msra.mxu0 0.0
        %1316 = vmatpush.xpose.msra.mxu0 0.0
        %1317 = vmatpush.xpose.msra.mxu0 0.0
        %1318 = vmatpush.xpose.msra.mxu0 0.0
        %1319 = vmatpush.xpose.msra.mxu0 0.0
        %1320 = vmatpush.xpose.msra.mxu0 0.0
        %1321 = vmatpush.xpose.msra.mxu0 0.0
        %1322 = vmatpush.xpose.msra.mxu0 0.0
        %1323 = vmatpush.xpose.msra.mxu0 0.0
        %1324 = vmatpush.xpose.msra.mxu0 0.0
        %1325 = vmatpush.xpose.msra.mxu0 0.0
        %1326 = vmatpush.xpose.msra.mxu0 0.0
        %1327 = vmatpush.xpose.msra.mxu0 0.0
        %1328 = vmatpush.xpose.msra.mxu0 %v1311
        %1329 = vmatmul.f32.gmra.mxu0 %v1308
        %v1330 = vpop.f32.mrf.mxu0
        %v1331 = vadd.f32 0.0, %v1330
        %1332 = vdwg.mxu0
        %1333 = vst.msk [vmem:[#allocation2 + $0x8] sm:$0xff] %vm1148, %v1331
        %1334 = vxpose.xlu0.b32.start [1/16] %v805, 128
        %1335 = vxpose.xlu0.b32.cont [2/16] 0.0, 128
        %1336 = vxpose.xlu0.b32.cont [3/16] 0.0, 128
        %1337 = vxpose.xlu0.b32.cont [4/16] 0.0, 128
        %1338 = vxpose.xlu0.b32.cont [5/16] 0.0, 128
        %1339 = vxpose.xlu0.b32.cont [6/16] 0.0, 128
        %1340 = vxpose.xlu0.b32.cont [7/16] 0.0, 128
        %1341 = vxpose.xlu0.b32.cont [8/16] 0.0, 128
        %1342 = vxpose.xlu0.b32.cont [9/16] 0.0, 128
        %1343 = vxpose.xlu0.b32.cont [10/16] 0.0, 128
        %1344 = vxpose.xlu0.b32.cont [11/16] 0.0, 128
        %1345 = vxpose.xlu0.b32.cont [12/16] 0.0, 128
        %1346 = vxpose.xlu0.b32.cont [13/16] 0.0, 128
        %1347 = vxpose.xlu0.b32.cont [14/16] 0.0, 128
        %1348 = vxpose.xlu0.b32.cont [15/16] 0.0, 128
        %1349 = vxpose.xlu0.b32.end [16/16] 0.0, 128
        %v1350 = vpop.trf.xlu0
        %v1351 = vpop.trf.xlu0
        %v1352 = vpop.trf.xlu0
        %v1353 = vpop.trf.xlu0
        %v1354 = vpop.trf.xlu0
        %v1355 = vpop.trf.xlu0
        %v1356 = vpop.trf.xlu0
        %v1357 = vpop.trf.xlu0
        %v1358 = vpop.trf.xlu0
        %v1359 = vpop.trf.xlu0
        %v1360 = vpop.trf.xlu0
        %v1361 = vpop.trf.xlu0
        %v1362 = vpop.trf.xlu0
        %v1363 = vpop.trf.xlu0
        %v1364 = vpop.trf.xlu0
        %v1365 = vpop.trf.xlu0
        %v1367 = vsel %vm1148, %v1350, 0
        %1369 = vmatpush.msra.mxu0 0.0
        %1370 = vmatpush.msra.mxu0 0.0
        %1371 = vmatpush.msra.mxu0 0.0
        %1372 = vmatpush.msra.mxu0 0.0
        %1373 = vmatpush.msra.mxu0 0.0
        %1374 = vmatpush.msra.mxu0 0.0
        %1375 = vmatpush.msra.mxu0 0.0
        %1376 = vmatpush.msra.mxu0 0.0
        %1377 = vmatpush.msra.mxu0 0.0
        %1378 = vmatpush.msra.mxu0 0.0
        %1379 = vmatpush.msra.mxu0 0.0
        %1380 = vmatpush.msra.mxu0 0.0
        %1381 = vmatpush.msra.mxu0 0.0
        %1382 = vmatpush.msra.mxu0 0.0
        %1383 = vmatpush.msra.mxu0 0.0
        %1384 = vmatpush.msra.mxu0 %v958
        %1385 = vmatmul.f32.gmra.mxu0 %v1367
        %v1386 = vpop.f32.mrf.mxu0
        %v1387 = vadd.f32 0.0, %v1386
        %1388 = vdwg.mxu0
        %v1389 = vmul.f32 %v1387, 0.35355338
        %v1390 = vsel %vm1148, %v1389, -inf
        %1391 = vmax.xlane.f32.xlu0 %v1390
        %v1392 = vpop.xlane.xlu0 %1391
        %v1393 = vsub.f32 %v1389, %v1392
        %v1394 = vmul.f32 %v1393, 1.442695
        %v1395 = vpow.pop %v1394
        %v1396 = vsel %vm1148, %v1395, 0.0
        %1397 = vadd.xlane.f32.xlu0 %v1396
        %v1398 = vpop.xlane.xlu0 %1397
        %v1399 = vrcp.pop %v1398
        %v1400 = vmul.f32 %v1398, %v1399
        %v1401 = vsub.f32 1.0, %v1400
        %v1402 = vmul.f32 %v1399, %v1401
        %v1403 = vadd.f32 %v1399, %v1402
        %vm1404 = vweird.f32 %v1398
        %vm1405 = vweird.f32 %v1399
        %vm1406 = vmor %vm1404, %vm1405
        %v1407 = vsel %vm1406, %v1399, %v1403
        %v1408 = vand.u32 2147483647, %v1398
        %vm1409 = vcmp.eq.f32.partialorder %v1408, 8.507059e+37
        %v1410 = vand.u32 %v1398, 2147483648
        %v1411 = vor.u32 1.1754944e-38, %v1410
        %v1412 = vsel %vm1409, %v1411, %v1407
        %v1413 = vmul.f32 %v1395, %v1412
        %s1414 = scalar_lea.vmem %s487, 64 [#allocation3]
        %1415 = vst.msk [vmem:[%s1414] sm:$0xff] %vm1148, %v1413
        %v1417 = vsel %vm1148, %v1111, 0
        %v1420 = vsel %vm1148, %v1413, 0
        %1422 = vmatpush.xpose.msra.mxu0 0.0
        %1423 = vmatpush.xpose.msra.mxu0 0.0
        %1424 = vmatpush.xpose.msra.mxu0 0.0
        %1425 = vmatpush.xpose.msra.mxu0 0.0
        %1426 = vmatpush.xpose.msra.mxu0 0.0
        %1427 = vmatpush.xpose.msra.mxu0 0.0
        %1428 = vmatpush.xpose.msra.mxu0 0.0
        %1429 = vmatpush.xpose.msra.mxu0 0.0
        %1430 = vmatpush.xpose.msra.mxu0 0.0
        %1431 = vmatpush.xpose.msra.mxu0 0.0
        %1432 = vmatpush.xpose.msra.mxu0 0.0
        %1433 = vmatpush.xpose.msra.mxu0 0.0
        %1434 = vmatpush.xpose.msra.mxu0 0.0
        %1435 = vmatpush.xpose.msra.mxu0 0.0
        %1436 = vmatpush.xpose.msra.mxu0 0.0
        %1437 = vmatpush.xpose.msra.mxu0 %v1420
        %1438 = vmatmul.f32.gmra.mxu0 %v1417
        %v1439 = vpop.f32.mrf.mxu0
        %v1440 = vadd.f32 0.0, %v1439
        %1441 = vdwg.mxu0
        %1442 = vst.msk [vmem:[#allocation2 + $0x10] sm:$0xff] %vm1148, %v1440
        %1443 = vxpose.xlu0.b32.start [1/16] %v808, 128
        %1444 = vxpose.xlu0.b32.cont [2/16] 0.0, 128
        %1445 = vxpose.xlu0.b32.cont [3/16] 0.0, 128
        %1446 = vxpose.xlu0.b32.cont [4/16] 0.0, 128
        %1447 = vxpose.xlu0.b32.cont [5/16] 0.0, 128
        %1448 = vxpose.xlu0.b32.cont [6/16] 0.0, 128
        %1449 = vxpose.xlu0.b32.cont [7/16] 0.0, 128
        %1450 = vxpose.xlu0.b32.cont [8/16] 0.0, 128
        %1451 = vxpose.xlu0.b32.cont [9/16] 0.0, 128
        %1452 = vxpose.xlu0.b32.cont [10/16] 0.0, 128
        %1453 = vxpose.xlu0.b32.cont [11/16] 0.0, 128
        %1454 = vxpose.xlu0.b32.cont [12/16] 0.0, 128
        %1455 = vxpose.xlu0.b32.cont [13/16] 0.0, 128
        %1456 = vxpose.xlu0.b32.cont [14/16] 0.0, 128
        %1457 = vxpose.xlu0.b32.cont [15/16] 0.0, 128
        %1458 = vxpose.xlu0.b32.end [16/16] 0.0, 128
        %v1459 = vpop.trf.xlu0
        %v1460 = vpop.trf.xlu0
        %v1461 = vpop.trf.xlu0
        %v1462 = vpop.trf.xlu0
        %v1463 = vpop.trf.xlu0
        %v1464 = vpop.trf.xlu0
        %v1465 = vpop.trf.xlu0
        %v1466 = vpop.trf.xlu0
        %v1467 = vpop.trf.xlu0
        %v1468 = vpop.trf.xlu0
        %v1469 = vpop.trf.xlu0
        %v1470 = vpop.trf.xlu0
        %v1471 = vpop.trf.xlu0
        %v1472 = vpop.trf.xlu0
        %v1473 = vpop.trf.xlu0
        %v1474 = vpop.trf.xlu0
        %v1476 = vsel %vm1148, %v1459, 0
        %1478 = vmatpush.msra.mxu0 0.0
        %1479 = vmatpush.msra.mxu0 0.0
        %1480 = vmatpush.msra.mxu0 0.0
        %1481 = vmatpush.msra.mxu0 0.0
        %1482 = vmatpush.msra.mxu0 0.0
        %1483 = vmatpush.msra.mxu0 0.0
        %1484 = vmatpush.msra.mxu0 0.0
        %1485 = vmatpush.msra.mxu0 0.0
        %1486 = vmatpush.msra.mxu0 0.0
        %1487 = vmatpush.msra.mxu0 0.0
        %1488 = vmatpush.msra.mxu0 0.0
        %1489 = vmatpush.msra.mxu0 0.0
        %1490 = vmatpush.msra.mxu0 0.0
        %1491 = vmatpush.msra.mxu0 0.0
        %1492 = vmatpush.msra.mxu0 0.0
        %1493 = vmatpush.msra.mxu0 %v961
        %1494 = vmatmul.f32.gmra.mxu0 %v1476
        %v1495 = vpop.f32.mrf.mxu0
        %v1496 = vadd.f32 0.0, %v1495
        %1497 = vdwg.mxu0
        %v1498 = vmul.f32 %v1496, 0.35355338
        %v1499 = vsel %vm1148, %v1498, -inf
        %1500 = vmax.xlane.f32.xlu0 %v1499
        %v1501 = vpop.xlane.xlu0 %1500
        %v1502 = vsub.f32 %v1498, %v1501
        %v1503 = vmul.f32 %v1502, 1.442695
        %v1504 = vpow.pop %v1503
        %v1505 = vsel %vm1148, %v1504, 0.0
        %1506 = vadd.xlane.f32.xlu0 %v1505
        %v1507 = vpop.xlane.xlu0 %1506
        %v1508 = vrcp.pop %v1507
        %v1509 = vmul.f32 %v1507, %v1508
        %v1510 = vsub.f32 1.0, %v1509
        %v1511 = vmul.f32 %v1508, %v1510
        %v1512 = vadd.f32 %v1508, %v1511
        %vm1513 = vweird.f32 %v1507
        %vm1514 = vweird.f32 %v1508
        %vm1515 = vmor %vm1513, %vm1514
        %v1516 = vsel %vm1515, %v1508, %v1512
        %v1517 = vand.u32 2147483647, %v1507
        %vm1518 = vcmp.eq.f32.partialorder %v1517, 8.507059e+37
        %v1519 = vand.u32 %v1507, 2147483648
        %v1520 = vor.u32 1.1754944e-38, %v1519
        %v1521 = vsel %vm1518, %v1520, %v1516
        %v1522 = vmul.f32 %v1504, %v1521
        %s1523 = scalar_lea.vmem %s487, 96 [#allocation3]
        %1524 = vst.msk [vmem:[%s1523] sm:$0xff] %vm1148, %v1522
        %v1526 = vsel %vm1148, %v1114, 0
        %v1529 = vsel %vm1148, %v1522, 0
        %1531 = vmatpush.xpose.msra.mxu0 0.0
        %1532 = vmatpush.xpose.msra.mxu0 0.0
        %1533 = vmatpush.xpose.msra.mxu0 0.0
        %1534 = vmatpush.xpose.msra.mxu0 0.0
        %1535 = vmatpush.xpose.msra.mxu0 0.0
        %1536 = vmatpush.xpose.msra.mxu0 0.0
        %1537 = vmatpush.xpose.msra.mxu0 0.0
        %1538 = vmatpush.xpose.msra.mxu0 0.0
        %1539 = vmatpush.xpose.msra.mxu0 0.0
        %1540 = vmatpush.xpose.msra.mxu0 0.0
        %1541 = vmatpush.xpose.msra.mxu0 0.0
        %1542 = vmatpush.xpose.msra.mxu0 0.0
        %1543 = vmatpush.xpose.msra.mxu0 0.0
        %1544 = vmatpush.xpose.msra.mxu0 0.0
        %1545 = vmatpush.xpose.msra.mxu0 0.0
        %1546 = vmatpush.xpose.msra.mxu0 %v1529
        %1547 = vmatmul.f32.gmra.mxu0 %v1526
        %v1548 = vpop.f32.mrf.mxu0
        %v1549 = vadd.f32 0.0, %v1548
        %1550 = vdwg.mxu0
        %1551 = vst.msk [vmem:[#allocation2 + $0x18] sm:$0xff] %vm1148, %v1549
        %v1552 = vld [vmem:[#allocation2] sm:$0xff]
        %v1553 = vld [vmem:[#allocation2 + $0x8] sm:$0xff]
        %v1554 = vld [vmem:[#allocation2 + $0x10] sm:$0xff]
        %v1555 = vld [vmem:[#allocation2 + $0x18] sm:$0xff]
        %1557 = vset.pattern.permute.xlu0 0
        %1558 = vperm.xlu0 %1557, %v549
        %v1559 = vpop.permute.xlu0 %1558
        %1562 = vset.pattern.permute.xlu0 0
        %1563 = vperm.xlu0 %1562, %v550
        %v1564 = vpop.permute.xlu0 %1563
        %1567 = vset.pattern.permute.xlu0 0
        %1568 = vperm.xlu0 %1567, %v551
        %v1569 = vpop.permute.xlu0 %1568
        %1572 = vset.pattern.permute.xlu0 0
        %1573 = vperm.xlu0 %1572, %v552
        %v1574 = vpop.permute.xlu0 %1573
        %v1577 = vsel %vm768, %v533, 0
        %v1580 = vsel %vm768, %v534, 0
        %v1583 = vsel %vm768, %v535, 0
        %v1586 = vsel %vm768, %v536, 0
        %1588 = vmatpush.msra.mxu0 0.0
        %1589 = vmatpush.msra.mxu0 0.0
        %1590 = vmatpush.msra.mxu0 0.0
        %1591 = vmatpush.msra.mxu0 0.0
        %1592 = vmatpush.msra.mxu0 0.0
        %1593 = vmatpush.msra.mxu0 0.0
        %1594 = vmatpush.msra.mxu0 0.0
        %1595 = vmatpush.msra.mxu0 0.0
        %1596 = vmatpush.msra.mxu0 0.0
        %1597 = vmatpush.msra.mxu0 0.0
        %1598 = vmatpush.msra.mxu0 0.0
        %1599 = vmatpush.msra.mxu0 0.0
        %1600 = vmatpush.msra.mxu0 %v1555
        %1601 = vmatpush.msra.mxu0 %v1554
        %1602 = vmatpush.msra.mxu0 %v1553
        %1603 = vmatpush.msra.mxu0 %v1552
        %1604 = vmatmul.f32.gmra.mxu0 %v1577
        %v1605 = vpop.f32.mrf.mxu0
        %v1606 = vadd.f32 %v1559, %v1605
        %1607 = vmatmul.f32.gmra.mxu0 %v1580
        %v1608 = vpop.f32.mrf.mxu0
        %v1609 = vadd.f32 %v1564, %v1608
        %1610 = vmatmul.f32.gmra.mxu0 %v1583
        %v1611 = vpop.f32.mrf.mxu0
        %v1612 = vadd.f32 %v1569, %v1611
        %1613 = vmatmul.f32.gmra.mxu0 %v1586
        %v1614 = vpop.f32.mrf.mxu0
        %v1615 = vadd.f32 %v1574, %v1614
        %1616 = vdwg.mxu0
        %v1621 = vrot.slane %v1606, 1
        %v1622 = vrot.slane %v1606, 2
        %v1623 = vrot.slane %v1606, 3
        %v1624 = vrot.slane %v1606, 4
        %v1625 = vrot.slane %v1606, 5
        %v1626 = vrot.slane %v1606, 6
        %v1627 = vrot.slane %v1606, 7
        %v1628 = vrot.slane %v1609, 1
        %v1629 = vrot.slane %v1609, 2
        %v1630 = vrot.slane %v1609, 3
        %v1631 = vrot.slane %v1609, 4
        %v1632 = vrot.slane %v1609, 5
        %v1633 = vrot.slane %v1609, 6
        %v1634 = vrot.slane %v1609, 7
        %v1635 = vrot.slane %v1612, 1
        %v1636 = vrot.slane %v1612, 2
        %v1637 = vrot.slane %v1612, 3
        %v1638 = vrot.slane %v1612, 4
        %v1639 = vrot.slane %v1612, 5
        %v1640 = vrot.slane %v1612, 6
        %v1641 = vrot.slane %v1612, 7
        %v1642 = vrot.slane %v1615, 1
        %v1643 = vrot.slane %v1615, 2
        %v1644 = vrot.slane %v1615, 3
        %v1645 = vrot.slane %v1615, 4
        %v1646 = vrot.slane %v1615, 5
        %v1647 = vrot.slane %v1615, 6
        %v1648 = vrot.slane %v1615, 7
        %vm1677 = vcmask 57344
        %1678 = vst.msk [vmem:[%s519] sm:$0x1] %vm1677, %v1606
        %1679 = vst.msk [vmem:[%s519 + $0x4] sm:$0x1] %vm1677, %v1621
        %1680 = vst.msk [vmem:[%s519 + $0x8] sm:$0x1] %vm1677, %v1622
        %1681 = vst.msk [vmem:[%s519 + $0xc] sm:$0x1] %vm1677, %v1623
        %1682 = vst.msk [vmem:[%s519 + $0x10] sm:$0x1] %vm1677, %v1624
        %1683 = vst.msk [vmem:[%s519 + $0x14] sm:$0x1] %vm1677, %v1625
        %1684 = vst.msk [vmem:[%s519 + $0x18] sm:$0x1] %vm1677, %v1626
        %1685 = vst.msk [vmem:[%s519 + $0x1c] sm:$0x1] %vm1677, %v1627
        %1686 = vst.msk [vmem:[%s519 + $0x20] sm:$0x1] %vm1677, %v1609
        %1687 = vst.msk [vmem:[%s519 + $0x24] sm:$0x1] %vm1677, %v1628
        %1688 = vst.msk [vmem:[%s519 + $0x28] sm:$0x1] %vm1677, %v1629
        %1689 = vst.msk [vmem:[%s519 + $0x2c] sm:$0x1] %vm1677, %v1630
        %1690 = vst.msk [vmem:[%s519 + $0x30] sm:$0x1] %vm1677, %v1631
        %1691 = vst.msk [vmem:[%s519 + $0x34] sm:$0x1] %vm1677, %v1632
        %1692 = vst.msk [vmem:[%s519 + $0x38] sm:$0x1] %vm1677, %v1633
        %1693 = vst.msk [vmem:[%s519 + $0x3c] sm:$0x1] %vm1677, %v1634
        %1694 = vst.msk [vmem:[%s519 + $0x40] sm:$0x1] %vm1677, %v1612
        %1695 = vst.msk [vmem:[%s519 + $0x44] sm:$0x1] %vm1677, %v1635
        %1696 = vst.msk [vmem:[%s519 + $0x48] sm:$0x1] %vm1677, %v1636
        %1697 = vst.msk [vmem:[%s519 + $0x4c] sm:$0x1] %vm1677, %v1637
        %1698 = vst.msk [vmem:[%s519 + $0x50] sm:$0x1] %vm1677, %v1638
        %1699 = vst.msk [vmem:[%s519 + $0x54] sm:$0x1] %vm1677, %v1639
        %1700 = vst.msk [vmem:[%s519 + $0x58] sm:$0x1] %vm1677, %v1640
        %1701 = vst.msk [vmem:[%s519 + $0x5c] sm:$0x1] %vm1677, %v1641
        %1702 = vst.msk [vmem:[%s519 + $0x60] sm:$0x1] %vm1677, %v1615
        %1703 = vst.msk [vmem:[%s519 + $0x64] sm:$0x1] %vm1677, %v1642
        %1704 = vst.msk [vmem:[%s519 + $0x68] sm:$0x1] %vm1677, %v1643
        %1705 = vst.msk [vmem:[%s519 + $0x6c] sm:$0x1] %vm1677, %v1644
        %1706 = vst.msk [vmem:[%s519 + $0x70] sm:$0x1] %vm1677, %v1645
        %1707 = vst.msk [vmem:[%s519 + $0x74] sm:$0x1] %vm1677, %v1646
        %1708 = vst.msk [vmem:[%s519 + $0x78] sm:$0x1] %vm1677, %v1647
        %1709 = vst.msk [vmem:[%s519 + $0x7c] sm:$0x1] %vm1677, %v1648
        %v1710 = vld [vmem:[%s495 + $0x1] sm:$0x1]
        %v1711 = vld [vmem:[%s495 + $0x5] sm:$0x1]
        %v1712 = vld [vmem:[%s495 + $0x9] sm:$0x1]
        %v1713 = vld [vmem:[%s495 + $0xd] sm:$0x1]
        %v1714 = vld [vmem:[%s495 + $0x11] sm:$0x1]
        %v1715 = vld [vmem:[%s495 + $0x15] sm:$0x1]
        %v1716 = vld [vmem:[%s495 + $0x19] sm:$0x1]
        %v1717 = vld [vmem:[%s495 + $0x1d] sm:$0x1]
        %v1718 = vld [vmem:[%s495 + $0x21] sm:$0x1]
        %v1719 = vld [vmem:[%s495 + $0x25] sm:$0x1]
        %v1720 = vld [vmem:[%s495 + $0x29] sm:$0x1]
        %v1721 = vld [vmem:[%s495 + $0x2d] sm:$0x1]
        %v1722 = vld [vmem:[%s495 + $0x31] sm:$0x1]
        %v1723 = vld [vmem:[%s495 + $0x35] sm:$0x1]
        %v1724 = vld [vmem:[%s495 + $0x39] sm:$0x1]
        %v1725 = vld [vmem:[%s495 + $0x3d] sm:$0x1]
        %v1726 = vld [vmem:[%s495 + $0x41] sm:$0x1]
        %v1727 = vld [vmem:[%s495 + $0x45] sm:$0x1]
        %v1728 = vld [vmem:[%s495 + $0x49] sm:$0x1]
        %v1729 = vld [vmem:[%s495 + $0x4d] sm:$0x1]
        %v1730 = vld [vmem:[%s495 + $0x51] sm:$0x1]
        %v1731 = vld [vmem:[%s495 + $0x55] sm:$0x1]
        %v1732 = vld [vmem:[%s495 + $0x59] sm:$0x1]
        %v1733 = vld [vmem:[%s495 + $0x5d] sm:$0x1]
        %v1734 = vld [vmem:[%s495 + $0x61] sm:$0x1]
        %v1735 = vld [vmem:[%s495 + $0x65] sm:$0x1]
        %v1736 = vld [vmem:[%s495 + $0x69] sm:$0x1]
        %v1737 = vld [vmem:[%s495 + $0x6d] sm:$0x1]
        %v1738 = vld [vmem:[%s495 + $0x71] sm:$0x1]
        %v1739 = vld [vmem:[%s495 + $0x75] sm:$0x1]
        %v1740 = vld [vmem:[%s495 + $0x79] sm:$0x1]
        %v1741 = vld [vmem:[%s495 + $0x7d] sm:$0x1]
        %v1742 = vld [vmem:[%s503 + $0x1] sm:$0x1]
        %v1743 = vld [vmem:[%s503 + $0x5] sm:$0x1]
        %v1744 = vld [vmem:[%s503 + $0x9] sm:$0x1]
        %v1745 = vld [vmem:[%s503 + $0xd] sm:$0x1]
        %v1746 = vld [vmem:[%s503 + $0x11] sm:$0x1]
        %v1747 = vld [vmem:[%s503 + $0x15] sm:$0x1]
        %v1748 = vld [vmem:[%s503 + $0x19] sm:$0x1]
        %v1749 = vld [vmem:[%s503 + $0x1d] sm:$0x1]
        %v1750 = vld [vmem:[%s503 + $0x21] sm:$0x1]
        %v1751 = vld [vmem:[%s503 + $0x25] sm:$0x1]
        %v1752 = vld [vmem:[%s503 + $0x29] sm:$0x1]
        %v1753 = vld [vmem:[%s503 + $0x2d] sm:$0x1]
        %v1754 = vld [vmem:[%s503 + $0x31] sm:$0x1]
        %v1755 = vld [vmem:[%s503 + $0x35] sm:$0x1]
        %v1756 = vld [vmem:[%s503 + $0x39] sm:$0x1]
        %v1757 = vld [vmem:[%s503 + $0x3d] sm:$0x1]
        %v1758 = vld [vmem:[%s503 + $0x41] sm:$0x1]
        %v1759 = vld [vmem:[%s503 + $0x45] sm:$0x1]
        %v1760 = vld [vmem:[%s503 + $0x49] sm:$0x1]
        %v1761 = vld [vmem:[%s503 + $0x4d] sm:$0x1]
        %v1762 = vld [vmem:[%s503 + $0x51] sm:$0x1]
        %v1763 = vld [vmem:[%s503 + $0x55] sm:$0x1]
        %v1764 = vld [vmem:[%s503 + $0x59] sm:$0x1]
        %v1765 = vld [vmem:[%s503 + $0x5d] sm:$0x1]
        %v1766 = vld [vmem:[%s503 + $0x61] sm:$0x1]
        %v1767 = vld [vmem:[%s503 + $0x65] sm:$0x1]
        %v1768 = vld [vmem:[%s503 + $0x69] sm:$0x1]
        %v1769 = vld [vmem:[%s503 + $0x6d] sm:$0x1]
        %v1770 = vld [vmem:[%s503 + $0x71] sm:$0x1]
        %v1771 = vld [vmem:[%s503 + $0x75] sm:$0x1]
        %v1772 = vld [vmem:[%s503 + $0x79] sm:$0x1]
        %v1773 = vld [vmem:[%s503 + $0x7d] sm:$0x1]
        %v1774 = vld [vmem:[%s511 + $0x1] sm:$0x1]
        %v1775 = vld [vmem:[%s511 + $0x5] sm:$0x1]
        %v1776 = vld [vmem:[%s511 + $0x9] sm:$0x1]
        %v1777 = vld [vmem:[%s511 + $0xd] sm:$0x1]
        %v1778 = vld [vmem:[%s511 + $0x11] sm:$0x1]
        %v1779 = vld [vmem:[%s511 + $0x15] sm:$0x1]
        %v1780 = vld [vmem:[%s511 + $0x19] sm:$0x1]
        %v1781 = vld [vmem:[%s511 + $0x1d] sm:$0x1]
        %v1782 = vld [vmem:[%s511 + $0x21] sm:$0x1]
        %v1783 = vld [vmem:[%s511 + $0x25] sm:$0x1]
        %v1784 = vld [vmem:[%s511 + $0x29] sm:$0x1]
        %v1785 = vld [vmem:[%s511 + $0x2d] sm:$0x1]
        %v1786 = vld [vmem:[%s511 + $0x31] sm:$0x1]
        %v1787 = vld [vmem:[%s511 + $0x35] sm:$0x1]
        %v1788 = vld [vmem:[%s511 + $0x39] sm:$0x1]
        %v1789 = vld [vmem:[%s511 + $0x3d] sm:$0x1]
        %v1790 = vld [vmem:[%s511 + $0x41] sm:$0x1]
        %v1791 = vld [vmem:[%s511 + $0x45] sm:$0x1]
        %v1792 = vld [vmem:[%s511 + $0x49] sm:$0x1]
        %v1793 = vld [vmem:[%s511 + $0x4d] sm:$0x1]
        %v1794 = vld [vmem:[%s511 + $0x51] sm:$0x1]
        %v1795 = vld [vmem:[%s511 + $0x55] sm:$0x1]
        %v1796 = vld [vmem:[%s511 + $0x59] sm:$0x1]
        %v1797 = vld [vmem:[%s511 + $0x5d] sm:$0x1]
        %v1798 = vld [vmem:[%s511 + $0x61] sm:$0x1]
        %v1799 = vld [vmem:[%s511 + $0x65] sm:$0x1]
        %v1800 = vld [vmem:[%s511 + $0x69] sm:$0x1]
        %v1801 = vld [vmem:[%s511 + $0x6d] sm:$0x1]
        %v1802 = vld [vmem:[%s511 + $0x71] sm:$0x1]
        %v1803 = vld [vmem:[%s511 + $0x75] sm:$0x1]
        %v1804 = vld [vmem:[%s511 + $0x79] sm:$0x1]
        %v1805 = vld [vmem:[%s511 + $0x7d] sm:$0x1]
        %v1838 = vrot.slane %v1711, 7
        %v1839 = vsel %vm702, %v1838, %v1710
        %v1840 = vrot.slane %v1712, 6
        %v1841 = vsel %vm705, %v1840, %v1839
        %v1842 = vrot.slane %v1713, 5
        %v1843 = vsel %vm708, %v1842, %v1841
        %v1844 = vrot.slane %v1714, 4
        %v1845 = vsel %vm711, %v1844, %v1843
        %v1846 = vrot.slane %v1715, 3
        %v1847 = vsel %vm714, %v1846, %v1845
        %v1848 = vrot.slane %v1716, 2
        %v1849 = vsel %vm717, %v1848, %v1847
        %v1850 = vrot.slane %v1717, 1
        %v1851 = vsel %vm720, %v1850, %v1849
        %v1852 = vrot.slane %v1719, 7
        %v1853 = vsel %vm702, %v1852, %v1718
        %v1854 = vrot.slane %v1720, 6
        %v1855 = vsel %vm705, %v1854, %v1853
        %v1856 = vrot.slane %v1721, 5
        %v1857 = vsel %vm708, %v1856, %v1855
        %v1858 = vrot.slane %v1722, 4
        %v1859 = vsel %vm711, %v1858, %v1857
        %v1860 = vrot.slane %v1723, 3
        %v1861 = vsel %vm714, %v1860, %v1859
        %v1862 = vrot.slane %v1724, 2
        %v1863 = vsel %vm717, %v1862, %v1861
        %v1864 = vrot.slane %v1725, 1
        %v1865 = vsel %vm720, %v1864, %v1863
        %v1866 = vrot.slane %v1727, 7
        %v1867 = vsel %vm702, %v1866, %v1726
        %v1868 = vrot.slane %v1728, 6
        %v1869 = vsel %vm705, %v1868, %v1867
        %v1870 = vrot.slane %v1729, 5
        %v1871 = vsel %vm708, %v1870, %v1869
        %v1872 = vrot.slane %v1730, 4
        %v1873 = vsel %vm711, %v1872, %v1871
        %v1874 = vrot.slane %v1731, 3
        %v1875 = vsel %vm714, %v1874, %v1873
        %v1876 = vrot.slane %v1732, 2
        %v1877 = vsel %vm717, %v1876, %v1875
        %v1878 = vrot.slane %v1733, 1
        %v1879 = vsel %vm720, %v1878, %v1877
        %v1880 = vrot.slane %v1735, 7
        %v1881 = vsel %vm702, %v1880, %v1734
        %v1882 = vrot.slane %v1736, 6
        %v1883 = vsel %vm705, %v1882, %v1881
        %v1884 = vrot.slane %v1737, 5
        %v1885 = vsel %vm708, %v1884, %v1883
        %v1886 = vrot.slane %v1738, 4
        %v1887 = vsel %vm711, %v1886, %v1885
        %v1888 = vrot.slane %v1739, 3
        %v1889 = vsel %vm714, %v1888, %v1887
        %v1890 = vrot.slane %v1740, 2
        %v1891 = vsel %vm717, %v1890, %v1889
        %v1892 = vrot.slane %v1741, 1
        %v1893 = vsel %vm720, %v1892, %v1891
        %1898 = vmatpush.msra.mxu0 0.0
        %1899 = vmatpush.msra.mxu0 0.0
        %1900 = vmatpush.msra.mxu0 0.0
        %1901 = vmatpush.msra.mxu0 0.0
        %1902 = vmatpush.msra.mxu0 0.0
        %1903 = vmatpush.msra.mxu0 0.0
        %1904 = vmatpush.msra.mxu0 0.0
        %1905 = vmatpush.msra.mxu0 0.0
        %1906 = vmatpush.msra.mxu0 0.0
        %1907 = vmatpush.msra.mxu0 0.0
        %1908 = vmatpush.msra.mxu0 0.0
        %1909 = vmatpush.msra.mxu0 0.0
        %1910 = vmatpush.msra.mxu0 %v1893
        %1911 = vmatpush.msra.mxu0 %v1879
        %1912 = vmatpush.msra.mxu0 %v1865
        %1913 = vmatpush.msra.mxu0 %v1851
        %1914 = vmatmul.f32.gmra.mxu0 %v770
        %v1915 = vpop.f32.mrf.mxu0
        %v1916 = vadd.f32 %v652, %v1915
        %1917 = vmatmul.f32.gmra.mxu0 %v773
        %v1918 = vpop.f32.mrf.mxu0
        %v1919 = vadd.f32 %v657, %v1918
        %1920 = vmatmul.f32.gmra.mxu0 %v776
        %v1921 = vpop.f32.mrf.mxu0
        %v1922 = vadd.f32 %v662, %v1921
        %1923 = vmatmul.f32.gmra.mxu0 %v779
        %v1924 = vpop.f32.mrf.mxu0
        %v1925 = vadd.f32 %v667, %v1924
        %1926 = vdwg.mxu0
        %v1959 = vrot.slane %v1743, 7
        %v1960 = vsel %vm702, %v1959, %v1742
        %v1961 = vrot.slane %v1744, 6
        %v1962 = vsel %vm705, %v1961, %v1960
        %v1963 = vrot.slane %v1745, 5
        %v1964 = vsel %vm708, %v1963, %v1962
        %v1965 = vrot.slane %v1746, 4
        %v1966 = vsel %vm711, %v1965, %v1964
        %v1967 = vrot.slane %v1747, 3
        %v1968 = vsel %vm714, %v1967, %v1966
        %v1969 = vrot.slane %v1748, 2
        %v1970 = vsel %vm717, %v1969, %v1968
        %v1971 = vrot.slane %v1749, 1
        %v1972 = vsel %vm720, %v1971, %v1970
        %v1973 = vrot.slane %v1751, 7
        %v1974 = vsel %vm702, %v1973, %v1750
        %v1975 = vrot.slane %v1752, 6
        %v1976 = vsel %vm705, %v1975, %v1974
        %v1977 = vrot.slane %v1753, 5
        %v1978 = vsel %vm708, %v1977, %v1976
        %v1979 = vrot.slane %v1754, 4
        %v1980 = vsel %vm711, %v1979, %v1978
        %v1981 = vrot.slane %v1755, 3
        %v1982 = vsel %vm714, %v1981, %v1980
        %v1983 = vrot.slane %v1756, 2
        %v1984 = vsel %vm717, %v1983, %v1982
        %v1985 = vrot.slane %v1757, 1
        %v1986 = vsel %vm720, %v1985, %v1984
        %v1987 = vrot.slane %v1759, 7
        %v1988 = vsel %vm702, %v1987, %v1758
        %v1989 = vrot.slane %v1760, 6
        %v1990 = vsel %vm705, %v1989, %v1988
        %v1991 = vrot.slane %v1761, 5
        %v1992 = vsel %vm708, %v1991, %v1990
        %v1993 = vrot.slane %v1762, 4
        %v1994 = vsel %vm711, %v1993, %v1992
        %v1995 = vrot.slane %v1763, 3
        %v1996 = vsel %vm714, %v1995, %v1994
        %v1997 = vrot.slane %v1764, 2
        %v1998 = vsel %vm717, %v1997, %v1996
        %v1999 = vrot.slane %v1765, 1
        %v2000 = vsel %vm720, %v1999, %v1998
        %v2001 = vrot.slane %v1767, 7
        %v2002 = vsel %vm702, %v2001, %v1766
        %v2003 = vrot.slane %v1768, 6
        %v2004 = vsel %vm705, %v2003, %v2002
        %v2005 = vrot.slane %v1769, 5
        %v2006 = vsel %vm708, %v2005, %v2004
        %v2007 = vrot.slane %v1770, 4
        %v2008 = vsel %vm711, %v2007, %v2006
        %v2009 = vrot.slane %v1771, 3
        %v2010 = vsel %vm714, %v2009, %v2008
        %v2011 = vrot.slane %v1772, 2
        %v2012 = vsel %vm717, %v2011, %v2010
        %v2013 = vrot.slane %v1773, 1
        %v2014 = vsel %vm720, %v2013, %v2012
        %2019 = vmatpush.msra.mxu0 0.0
        %2020 = vmatpush.msra.mxu0 0.0
        %2021 = vmatpush.msra.mxu0 0.0
        %2022 = vmatpush.msra.mxu0 0.0
        %2023 = vmatpush.msra.mxu0 0.0
        %2024 = vmatpush.msra.mxu0 0.0
        %2025 = vmatpush.msra.mxu0 0.0
        %2026 = vmatpush.msra.mxu0 0.0
        %2027 = vmatpush.msra.mxu0 0.0
        %2028 = vmatpush.msra.mxu0 0.0
        %2029 = vmatpush.msra.mxu0 0.0
        %2030 = vmatpush.msra.mxu0 0.0
        %2031 = vmatpush.msra.mxu0 %v2014
        %2032 = vmatpush.msra.mxu0 %v2000
        %2033 = vmatpush.msra.mxu0 %v1986
        %2034 = vmatpush.msra.mxu0 %v1972
        %2035 = vmatmul.f32.gmra.mxu0 %v923
        %v2036 = vpop.f32.mrf.mxu0
        %v2037 = vadd.f32 %v813, %v2036
        %2038 = vmatmul.f32.gmra.mxu0 %v926
        %v2039 = vpop.f32.mrf.mxu0
        %v2040 = vadd.f32 %v818, %v2039
        %2041 = vmatmul.f32.gmra.mxu0 %v929
        %v2042 = vpop.f32.mrf.mxu0
        %v2043 = vadd.f32 %v823, %v2042
        %2044 = vmatmul.f32.gmra.mxu0 %v932
        %v2045 = vpop.f32.mrf.mxu0
        %v2046 = vadd.f32 %v828, %v2045
        %2047 = vdwg.mxu0
        %v2080 = vrot.slane %v1775, 7
        %v2081 = vsel %vm702, %v2080, %v1774
        %v2082 = vrot.slane %v1776, 6
        %v2083 = vsel %vm705, %v2082, %v2081
        %v2084 = vrot.slane %v1777, 5
        %v2085 = vsel %vm708, %v2084, %v2083
        %v2086 = vrot.slane %v1778, 4
        %v2087 = vsel %vm711, %v2086, %v2085
        %v2088 = vrot.slane %v1779, 3
        %v2089 = vsel %vm714, %v2088, %v2087
        %v2090 = vrot.slane %v1780, 2
        %v2091 = vsel %vm717, %v2090, %v2089
        %v2092 = vrot.slane %v1781, 1
        %v2093 = vsel %vm720, %v2092, %v2091
        %v2094 = vrot.slane %v1783, 7
        %v2095 = vsel %vm702, %v2094, %v1782
        %v2096 = vrot.slane %v1784, 6
        %v2097 = vsel %vm705, %v2096, %v2095
        %v2098 = vrot.slane %v1785, 5
        %v2099 = vsel %vm708, %v2098, %v2097
        %v2100 = vrot.slane %v1786, 4
        %v2101 = vsel %vm711, %v2100, %v2099
        %v2102 = vrot.slane %v1787, 3
        %v2103 = vsel %vm714, %v2102, %v2101
        %v2104 = vrot.slane %v1788, 2
        %v2105 = vsel %vm717, %v2104, %v2103
        %v2106 = vrot.slane %v1789, 1
        %v2107 = vsel %vm720, %v2106, %v2105
        %v2108 = vrot.slane %v1791, 7
        %v2109 = vsel %vm702, %v2108, %v1790
        %v2110 = vrot.slane %v1792, 6
        %v2111 = vsel %vm705, %v2110, %v2109
        %v2112 = vrot.slane %v1793, 5
        %v2113 = vsel %vm708, %v2112, %v2111
        %v2114 = vrot.slane %v1794, 4
        %v2115 = vsel %vm711, %v2114, %v2113
        %v2116 = vrot.slane %v1795, 3
        %v2117 = vsel %vm714, %v2116, %v2115
        %v2118 = vrot.slane %v1796, 2
        %v2119 = vsel %vm717, %v2118, %v2117
        %v2120 = vrot.slane %v1797, 1
        %v2121 = vsel %vm720, %v2120, %v2119
        %v2122 = vrot.slane %v1799, 7
        %v2123 = vsel %vm702, %v2122, %v1798
        %v2124 = vrot.slane %v1800, 6
        %v2125 = vsel %vm705, %v2124, %v2123
        %v2126 = vrot.slane %v1801, 5
        %v2127 = vsel %vm708, %v2126, %v2125
        %v2128 = vrot.slane %v1802, 4
        %v2129 = vsel %vm711, %v2128, %v2127
        %v2130 = vrot.slane %v1803, 3
        %v2131 = vsel %vm714, %v2130, %v2129
        %v2132 = vrot.slane %v1804, 2
        %v2133 = vsel %vm717, %v2132, %v2131
        %v2134 = vrot.slane %v1805, 1
        %v2135 = vsel %vm720, %v2134, %v2133
        %2140 = vmatpush.msra.mxu0 0.0
        %2141 = vmatpush.msra.mxu0 0.0
        %2142 = vmatpush.msra.mxu0 0.0
        %2143 = vmatpush.msra.mxu0 0.0
        %2144 = vmatpush.msra.mxu0 0.0
        %2145 = vmatpush.msra.mxu0 0.0
        %2146 = vmatpush.msra.mxu0 0.0
        %2147 = vmatpush.msra.mxu0 0.0
        %2148 = vmatpush.msra.mxu0 0.0
        %2149 = vmatpush.msra.mxu0 0.0
        %2150 = vmatpush.msra.mxu0 0.0
        %2151 = vmatpush.msra.mxu0 0.0
        %2152 = vmatpush.msra.mxu0 %v2135
        %2153 = vmatpush.msra.mxu0 %v2121
        %2154 = vmatpush.msra.mxu0 %v2107
        %2155 = vmatpush.msra.mxu0 %v2093
        %2156 = vmatmul.f32.gmra.mxu0 %v1076
        %v2157 = vpop.f32.mrf.mxu0
        %v2158 = vadd.f32 %v966, %v2157
        %2159 = vmatmul.f32.gmra.mxu0 %v1079
        %v2160 = vpop.f32.mrf.mxu0
        %v2161 = vadd.f32 %v971, %v2160
        %2162 = vmatmul.f32.gmra.mxu0 %v1082
        %v2163 = vpop.f32.mrf.mxu0
        %v2164 = vadd.f32 %v976, %v2163
        %2165 = vmatmul.f32.gmra.mxu0 %v1085
        %v2166 = vpop.f32.mrf.mxu0
        %v2167 = vadd.f32 %v981, %v2166
        %2168 = vdwg.mxu0
        %2169 = vxpose.xlu0.b32.start [1/16] %v1916, 128
        %2170 = vxpose.xlu0.b32.cont [2/16] 0.0, 128
        %2171 = vxpose.xlu0.b32.cont [3/16] 0.0, 128
        %2172 = vxpose.xlu0.b32.cont [4/16] 0.0, 128
        %2173 = vxpose.xlu0.b32.cont [5/16] 0.0, 128
        %2174 = vxpose.xlu0.b32.cont [6/16] 0.0, 128
        %2175 = vxpose.xlu0.b32.cont [7/16] 0.0, 128
        %2176 = vxpose.xlu0.b32.cont [8/16] 0.0, 128
        %2177 = vxpose.xlu0.b32.cont [9/16] 0.0, 128
        %2178 = vxpose.xlu0.b32.cont [10/16] 0.0, 128
        %2179 = vxpose.xlu0.b32.cont [11/16] 0.0, 128
        %2180 = vxpose.xlu0.b32.cont [12/16] 0.0, 128
        %2181 = vxpose.xlu0.b32.cont [13/16] 0.0, 128
        %2182 = vxpose.xlu0.b32.cont [14/16] 0.0, 128
        %2183 = vxpose.xlu0.b32.cont [15/16] 0.0, 128
        %2184 = vxpose.xlu0.b32.end [16/16] 0.0, 128
        %v2185 = vpop.trf.xlu0
        %v2186 = vpop.trf.xlu0
        %v2187 = vpop.trf.xlu0
        %v2188 = vpop.trf.xlu0
        %v2189 = vpop.trf.xlu0
        %v2190 = vpop.trf.xlu0
        %v2191 = vpop.trf.xlu0
        %v2192 = vpop.trf.xlu0
        %v2193 = vpop.trf.xlu0
        %v2194 = vpop.trf.xlu0
        %v2195 = vpop.trf.xlu0
        %v2196 = vpop.trf.xlu0
        %v2197 = vpop.trf.xlu0
        %v2198 = vpop.trf.xlu0
        %v2199 = vpop.trf.xlu0
        %v2200 = vpop.trf.xlu0
        %v2202 = vsel %vm1148, %v2185, 0
        %2204 = vmatpush.msra.mxu0 0.0
        %2205 = vmatpush.msra.mxu0 0.0
        %2206 = vmatpush.msra.mxu0 0.0
        %2207 = vmatpush.msra.mxu0 0.0
        %2208 = vmatpush.msra.mxu0 0.0
        %2209 = vmatpush.msra.mxu0 0.0
        %2210 = vmatpush.msra.mxu0 0.0
        %2211 = vmatpush.msra.mxu0 0.0
        %2212 = vmatpush.msra.mxu0 0.0
        %2213 = vmatpush.msra.mxu0 0.0
        %2214 = vmatpush.msra.mxu0 0.0
        %2215 = vmatpush.msra.mxu0 0.0
        %2216 = vmatpush.msra.mxu0 0.0
        %2217 = vmatpush.msra.mxu0 0.0
        %2218 = vmatpush.msra.mxu0 0.0
        %2219 = vmatpush.msra.mxu0 %v2037
        %2220 = vmatmul.f32.gmra.mxu0 %v2202
        %v2221 = vpop.f32.mrf.mxu0
        %v2222 = vadd.f32 0.0, %v2221
        %2223 = vdwg.mxu0
        %v2224 = vmul.f32 %v2222, 0.35355338
        %v2225 = vsel %vm1148, %v2224, -inf
        %2226 = vmax.xlane.f32.xlu0 %v2225
        %v2227 = vpop.xlane.xlu0 %2226
        %v2228 = vsub.f32 %v2224, %v2227
        %v2229 = vmul.f32 %v2228, 1.442695
        %v2230 = vpow.pop %v2229
        %v2231 = vsel %vm1148, %v2230, 0.0
        %2232 = vadd.xlane.f32.xlu0 %v2231
        %v2233 = vpop.xlane.xlu0 %2232
        %v2234 = vrcp.pop %v2233
        %v2235 = vmul.f32 %v2233, %v2234
        %v2236 = vsub.f32 1.0, %v2235
        %v2237 = vmul.f32 %v2234, %v2236
        %v2238 = vadd.f32 %v2234, %v2237
        %vm2239 = vweird.f32 %v2233
        %vm2240 = vweird.f32 %v2234
        %vm2241 = vmor %vm2239, %vm2240
        %v2242 = vsel %vm2241, %v2234, %v2238
        %v2243 = vand.u32 2147483647, %v2233
        %vm2244 = vcmp.eq.f32.partialorder %v2243, 8.507059e+37
        %v2245 = vand.u32 %v2233, 2147483648
        %v2246 = vor.u32 1.1754944e-38, %v2245
        %v2247 = vsel %vm2244, %v2246, %v2242
        %v2248 = vmul.f32 %v2230, %v2247
        %s2249 = scalar_lea.vmem %s487, 8 [#allocation3]
        %2250 = vst.msk [vmem:[%s2249] sm:$0xff] %vm1148, %v2248
        %v2252 = vsel %vm1148, %v2158, 0
        %v2255 = vsel %vm1148, %v2248, 0
        %2257 = vmatpush.xpose.msra.mxu0 0.0
        %2258 = vmatpush.xpose.msra.mxu0 0.0
        %2259 = vmatpush.xpose.msra.mxu0 0.0
        %2260 = vmatpush.xpose.msra.mxu0 0.0
        %2261 = vmatpush.xpose.msra.mxu0 0.0
        %2262 = vmatpush.xpose.msra.mxu0 0.0
        %2263 = vmatpush.xpose.msra.mxu0 0.0
        %2264 = vmatpush.xpose.msra.mxu0 0.0
        %2265 = vmatpush.xpose.msra.mxu0 0.0
        %2266 = vmatpush.xpose.msra.mxu0 0.0
        %2267 = vmatpush.xpose.msra.mxu0 0.0
        %2268 = vmatpush.xpose.msra.mxu0 0.0
        %2269 = vmatpush.xpose.msra.mxu0 0.0
        %2270 = vmatpush.xpose.msra.mxu0 0.0
        %2271 = vmatpush.xpose.msra.mxu0 0.0
        %2272 = vmatpush.xpose.msra.mxu0 %v2255
        %2273 = vmatmul.f32.gmra.mxu0 %v2252
        %v2274 = vpop.f32.mrf.mxu0
        %v2275 = vadd.f32 0.0, %v2274
        %2276 = vdwg.mxu0
        %2277 = vst.msk [vmem:[#allocation2] sm:$0xff] %vm1148, %v2275
        %2278 = vxpose.xlu0.b32.start [1/16] %v1919, 128
        %2279 = vxpose.xlu0.b32.cont [2/16] 0.0, 128
        %2280 = vxpose.xlu0.b32.cont [3/16] 0.0, 128
        %2281 = vxpose.xlu0.b32.cont [4/16] 0.0, 128
        %2282 = vxpose.xlu0.b32.cont [5/16] 0.0, 128
        %2283 = vxpose.xlu0.b32.cont [6/16] 0.0, 128
        %2284 = vxpose.xlu0.b32.cont [7/16] 0.0, 128
        %2285 = vxpose.xlu0.b32.cont [8/16] 0.0, 128
        %2286 = vxpose.xlu0.b32.cont [9/16] 0.0, 128
        %2287 = vxpose.xlu0.b32.cont [10/16] 0.0, 128
        %2288 = vxpose.xlu0.b32.cont [11/16] 0.0, 128
        %2289 = vxpose.xlu0.b32.cont [12/16] 0.0, 128
        %2290 = vxpose.xlu0.b32.cont [13/16] 0.0, 128
        %2291 = vxpose.xlu0.b32.cont [14/16] 0.0, 128
        %2292 = vxpose.xlu0.b32.cont [15/16] 0.0, 128
        %2293 = vxpose.xlu0.b32.end [16/16] 0.0, 128
        %v2294 = vpop.trf.xlu0
        %v2295 = vpop.trf.xlu0
        %v2296 = vpop.trf.xlu0
        %v2297 = vpop.trf.xlu0
        %v2298 = vpop.trf.xlu0
        %v2299 = vpop.trf.xlu0
        %v2300 = vpop.trf.xlu0
        %v2301 = vpop.trf.xlu0
        %v2302 = vpop.trf.xlu0
        %v2303 = vpop.trf.xlu0
        %v2304 = vpop.trf.xlu0
        %v2305 = vpop.trf.xlu0
        %v2306 = vpop.trf.xlu0
        %v2307 = vpop.trf.xlu0
        %v2308 = vpop.trf.xlu0
        %v2309 = vpop.trf.xlu0
        %v2311 = vsel %vm1148, %v2294, 0
        %2313 = vmatpush.msra.mxu0 0.0
        %2314 = vmatpush.msra.mxu0 0.0
        %2315 = vmatpush.msra.mxu0 0.0
        %2316 = vmatpush.msra.mxu0 0.0
        %2317 = vmatpush.msra.mxu0 0.0
        %2318 = vmatpush.msra.mxu0 0.0
        %2319 = vmatpush.msra.mxu0 0.0
        %2320 = vmatpush.msra.mxu0 0.0
        %2321 = vmatpush.msra.mxu0 0.0
        %2322 = vmatpush.msra.mxu0 0.0
        %2323 = vmatpush.msra.mxu0 0.0
        %2324 = vmatpush.msra.mxu0 0.0
        %2325 = vmatpush.msra.mxu0 0.0
        %2326 = vmatpush.msra.mxu0 0.0
        %2327 = vmatpush.msra.mxu0 0.0
        %2328 = vmatpush.msra.mxu0 %v2040
        %2329 = vmatmul.f32.gmra.mxu0 %v2311
        %v2330 = vpop.f32.mrf.mxu0
        %v2331 = vadd.f32 0.0, %v2330
        %2332 = vdwg.mxu0
        %v2333 = vmul.f32 %v2331, 0.35355338
        %v2334 = vsel %vm1148, %v2333, -inf
        %2335 = vmax.xlane.f32.xlu0 %v2334
        %v2336 = vpop.xlane.xlu0 %2335
        %v2337 = vsub.f32 %v2333, %v2336
        %v2338 = vmul.f32 %v2337, 1.442695
        %v2339 = vpow.pop %v2338
        %v2340 = vsel %vm1148, %v2339, 0.0
        %2341 = vadd.xlane.f32.xlu0 %v2340
        %v2342 = vpop.xlane.xlu0 %2341
        %v2343 = vrcp.pop %v2342
        %v2344 = vmul.f32 %v2342, %v2343
        %v2345 = vsub.f32 1.0, %v2344
        %v2346 = vmul.f32 %v2343, %v2345
        %v2347 = vadd.f32 %v2343, %v2346
        %vm2348 = vweird.f32 %v2342
        %vm2349 = vweird.f32 %v2343
        %vm2350 = vmor %vm2348, %vm2349
        %v2351 = vsel %vm2350, %v2343, %v2347
        %v2352 = vand.u32 2147483647, %v2342
        %vm2353 = vcmp.eq.f32.partialorder %v2352, 8.507059e+37
        %v2354 = vand.u32 %v2342, 2147483648
        %v2355 = vor.u32 1.1754944e-38, %v2354
        %v2356 = vsel %vm2353, %v2355, %v2351
        %v2357 = vmul.f32 %v2339, %v2356
        %s2358 = scalar_lea.vmem %s487, 40 [#allocation3]
        %2359 = vst.msk [vmem:[%s2358] sm:$0xff] %vm1148, %v2357
        %v2361 = vsel %vm1148, %v2161, 0
        %v2364 = vsel %vm1148, %v2357, 0
        %2366 = vmatpush.xpose.msra.mxu0 0.0
        %2367 = vmatpush.xpose.msra.mxu0 0.0
        %2368 = vmatpush.xpose.msra.mxu0 0.0
        %2369 = vmatpush.xpose.msra.mxu0 0.0
        %2370 = vmatpush.xpose.msra.mxu0 0.0
        %2371 = vmatpush.xpose.msra.mxu0 0.0
        %2372 = vmatpush.xpose.msra.mxu0 0.0
        %2373 = vmatpush.xpose.msra.mxu0 0.0
        %2374 = vmatpush.xpose.msra.mxu0 0.0
        %2375 = vmatpush.xpose.msra.mxu0 0.0
        %2376 = vmatpush.xpose.msra.mxu0 0.0
        %2377 = vmatpush.xpose.msra.mxu0 0.0
        %2378 = vmatpush.xpose.msra.mxu0 0.0
        %2379 = vmatpush.xpose.msra.mxu0 0.0
        %2380 = vmatpush.xpose.msra.mxu0 0.0
        %2381 = vmatpush.xpose.msra.mxu0 %v2364
        %2382 = vmatmul.f32.gmra.mxu0 %v2361
        %v2383 = vpop.f32.mrf.mxu0
        %v2384 = vadd.f32 0.0, %v2383
        %2385 = vdwg.mxu0
        %2386 = vst.msk [vmem:[#allocation2 + $0x8] sm:$0xff] %vm1148, %v2384
        %2387 = vxpose.xlu0.b32.start [1/16] %v1922, 128
        %2388 = vxpose.xlu0.b32.cont [2/16] 0.0, 128
        %2389 = vxpose.xlu0.b32.cont [3/16] 0.0, 128
        %2390 = vxpose.xlu0.b32.cont [4/16] 0.0, 128
        %2391 = vxpose.xlu0.b32.cont [5/16] 0.0, 128
        %2392 = vxpose.xlu0.b32.cont [6/16] 0.0, 128
        %2393 = vxpose.xlu0.b32.cont [7/16] 0.0, 128
        %2394 = vxpose.xlu0.b32.cont [8/16] 0.0, 128
        %2395 = vxpose.xlu0.b32.cont [9/16] 0.0, 128
        %2396 = vxpose.xlu0.b32.cont [10/16] 0.0, 128
        %2397 = vxpose.xlu0.b32.cont [11/16] 0.0, 128
        %2398 = vxpose.xlu0.b32.cont [12/16] 0.0, 128
        %2399 = vxpose.xlu0.b32.cont [13/16] 0.0, 128
        %2400 = vxpose.xlu0.b32.cont [14/16] 0.0, 128
        %2401 = vxpose.xlu0.b32.cont [15/16] 0.0, 128
        %2402 = vxpose.xlu0.b32.end [16/16] 0.0, 128
        %v2403 = vpop.trf.xlu0
        %v2404 = vpop.trf.xlu0
        %v2405 = vpop.trf.xlu0
        %v2406 = vpop.trf.xlu0
        %v2407 = vpop.trf.xlu0
        %v2408 = vpop.trf.xlu0
        %v2409 = vpop.trf.xlu0
        %v2410 = vpop.trf.xlu0
        %v2411 = vpop.trf.xlu0
        %v2412 = vpop.trf.xlu0
        %v2413 = vpop.trf.xlu0
        %v2414 = vpop.trf.xlu0
        %v2415 = vpop.trf.xlu0
        %v2416 = vpop.trf.xlu0
        %v2417 = vpop.trf.xlu0
        %v2418 = vpop.trf.xlu0
        %v2420 = vsel %vm1148, %v2403, 0
        %2422 = vmatpush.msra.mxu0 0.0
        %2423 = vmatpush.msra.mxu0 0.0
        %2424 = vmatpush.msra.mxu0 0.0
        %2425 = vmatpush.msra.mxu0 0.0
        %2426 = vmatpush.msra.mxu0 0.0
        %2427 = vmatpush.msra.mxu0 0.0
        %2428 = vmatpush.msra.mxu0 0.0
        %2429 = vmatpush.msra.mxu0 0.0
        %2430 = vmatpush.msra.mxu0 0.0
        %2431 = vmatpush.msra.mxu0 0.0
        %2432 = vmatpush.msra.mxu0 0.0
        %2433 = vmatpush.msra.mxu0 0.0
        %2434 = vmatpush.msra.mxu0 0.0
        %2435 = vmatpush.msra.mxu0 0.0
        %2436 = vmatpush.msra.mxu0 0.0
        %2437 = vmatpush.msra.mxu0 %v2043
        %2438 = vmatmul.f32.gmra.mxu0 %v2420
        %v2439 = vpop.f32.mrf.mxu0
        %v2440 = vadd.f32 0.0, %v2439
        %2441 = vdwg.mxu0
        %v2442 = vmul.f32 %v2440, 0.35355338
        %v2443 = vsel %vm1148, %v2442, -inf
        %2444 = vmax.xlane.f32.xlu0 %v2443
        %v2445 = vpop.xlane.xlu0 %2444
        %v2446 = vsub.f32 %v2442, %v2445
        %v2447 = vmul.f32 %v2446, 1.442695
        %v2448 = vpow.pop %v2447
        %v2449 = vsel %vm1148, %v2448, 0.0
        %2450 = vadd.xlane.f32.xlu0 %v2449
        %v2451 = vpop.xlane.xlu0 %2450
        %v2452 = vrcp.pop %v2451
        %v2453 = vmul.f32 %v2451, %v2452
        %v2454 = vsub.f32 1.0, %v2453
        %v2455 = vmul.f32 %v2452, %v2454
        %v2456 = vadd.f32 %v2452, %v2455
        %vm2457 = vweird.f32 %v2451
        %vm2458 = vweird.f32 %v2452
        %vm2459 = vmor %vm2457, %vm2458
        %v2460 = vsel %vm2459, %v2452, %v2456
        %v2461 = vand.u32 2147483647, %v2451
        %vm2462 = vcmp.eq.f32.partialorder %v2461, 8.507059e+37
        %v2463 = vand.u32 %v2451, 2147483648
        %v2464 = vor.u32 1.1754944e-38, %v2463
        %v2465 = vsel %vm2462, %v2464, %v2460
        %v2466 = vmul.f32 %v2448, %v2465
        %s2467 = scalar_lea.vmem %s487, 72 [#allocation3]
        %2468 = vst.msk [vmem:[%s2467] sm:$0xff] %vm1148, %v2466
        %v2470 = vsel %vm1148, %v2164, 0
        %v2473 = vsel %vm1148, %v2466, 0
        %2475 = vmatpush.xpose.msra.mxu0 0.0
        %2476 = vmatpush.xpose.msra.mxu0 0.0
        %2477 = vmatpush.xpose.msra.mxu0 0.0
        %2478 = vmatpush.xpose.msra.mxu0 0.0
        %2479 = vmatpush.xpose.msra.mxu0 0.0
        %2480 = vmatpush.xpose.msra.mxu0 0.0
        %2481 = vmatpush.xpose.msra.mxu0 0.0
        %2482 = vmatpush.xpose.msra.mxu0 0.0
        %2483 = vmatpush.xpose.msra.mxu0 0.0
        %2484 = vmatpush.xpose.msra.mxu0 0.0
        %2485 = vmatpush.xpose.msra.mxu0 0.0
        %2486 = vmatpush.xpose.msra.mxu0 0.0
        %2487 = vmatpush.xpose.msra.mxu0 0.0
        %2488 = vmatpush.xpose.msra.mxu0 0.0
        %2489 = vmatpush.xpose.msra.mxu0 0.0
        %2490 = vmatpush.xpose.msra.mxu0 %v2473
        %2491 = vmatmul.f32.gmra.mxu0 %v2470
        %v2492 = vpop.f32.mrf.mxu0
        %v2493 = vadd.f32 0.0, %v2492
        %2494 = vdwg.mxu0
        %2495 = vst.msk [vmem:[#allocation2 + $0x10] sm:$0xff] %vm1148, %v2493
        %2496 = vxpose.xlu0.b32.start [1/16] %v1925, 128
        %2497 = vxpose.xlu0.b32.cont [2/16] 0.0, 128
        %2498 = vxpose.xlu0.b32.cont [3/16] 0.0, 128
        %2499 = vxpose.xlu0.b32.cont [4/16] 0.0, 128
        %2500 = vxpose.xlu0.b32.cont [5/16] 0.0, 128
        %2501 = vxpose.xlu0.b32.cont [6/16] 0.0, 128
        %2502 = vxpose.xlu0.b32.cont [7/16] 0.0, 128
        %2503 = vxpose.xlu0.b32.cont [8/16] 0.0, 128
        %2504 = vxpose.xlu0.b32.cont [9/16] 0.0, 128
        %2505 = vxpose.xlu0.b32.cont [10/16] 0.0, 128
        %2506 = vxpose.xlu0.b32.cont [11/16] 0.0, 128
        %2507 = vxpose.xlu0.b32.cont [12/16] 0.0, 128
        %2508 = vxpose.xlu0.b32.cont [13/16] 0.0, 128
        %2509 = vxpose.xlu0.b32.cont [14/16] 0.0, 128
        %2510 = vxpose.xlu0.b32.cont [15/16] 0.0, 128
        %2511 = vxpose.xlu0.b32.end [16/16] 0.0, 128
        %v2512 = vpop.trf.xlu0
        %v2513 = vpop.trf.xlu0
        %v2514 = vpop.trf.xlu0
        %v2515 = vpop.trf.xlu0
        %v2516 = vpop.trf.xlu0
        %v2517 = vpop.trf.xlu0
        %v2518 = vpop.trf.xlu0
        %v2519 = vpop.trf.xlu0
        %v2520 = vpop.trf.xlu0
        %v2521 = vpop.trf.xlu0
        %v2522 = vpop.trf.xlu0
        %v2523 = vpop.trf.xlu0
        %v2524 = vpop.trf.xlu0
        %v2525 = vpop.trf.xlu0
        %v2526 = vpop.trf.xlu0
        %v2527 = vpop.trf.xlu0
        %v2529 = vsel %vm1148, %v2512, 0
        %2531 = vmatpush.msra.mxu0 0.0
        %2532 = vmatpush.msra.mxu0 0.0
        %2533 = vmatpush.msra.mxu0 0.0
        %2534 = vmatpush.msra.mxu0 0.0
        %2535 = vmatpush.msra.mxu0 0.0
        %2536 = vmatpush.msra.mxu0 0.0
        %2537 = vmatpush.msra.mxu0 0.0
        %2538 = vmatpush.msra.mxu0 0.0
        %2539 = vmatpush.msra.mxu0 0.0
        %2540 = vmatpush.msra.mxu0 0.0
        %2541 = vmatpush.msra.mxu0 0.0
        %2542 = vmatpush.msra.mxu0 0.0
        %2543 = vmatpush.msra.mxu0 0.0
        %2544 = vmatpush.msra.mxu0 0.0
        %2545 = vmatpush.msra.mxu0 0.0
        %2546 = vmatpush.msra.mxu0 %v2046
        %2547 = vmatmul.f32.gmra.mxu0 %v2529
        %v2548 = vpop.f32.mrf.mxu0
        %v2549 = vadd.f32 0.0, %v2548
        %2550 = vdwg.mxu0
        %v2551 = vmul.f32 %v2549, 0.35355338
        %v2552 = vsel %vm1148, %v2551, -inf
        %2553 = vmax.xlane.f32.xlu0 %v2552
        %v2554 = vpop.xlane.xlu0 %2553
        %v2555 = vsub.f32 %v2551, %v2554
        %v2556 = vmul.f32 %v2555, 1.442695
        %v2557 = vpow.pop %v2556
        %v2558 = vsel %vm1148, %v2557, 0.0
        %2559 = vadd.xlane.f32.xlu0 %v2558
        %v2560 = vpop.xlane.xlu0 %2559
        %v2561 = vrcp.pop %v2560
        %v2562 = vmul.f32 %v2560, %v2561
        %v2563 = vsub.f32 1.0, %v2562
        %v2564 = vmul.f32 %v2561, %v2563
        %v2565 = vadd.f32 %v2561, %v2564
        %vm2566 = vweird.f32 %v2560
        %vm2567 = vweird.f32 %v2561
        %vm2568 = vmor %vm2566, %vm2567
        %v2569 = vsel %vm2568, %v2561, %v2565
        %v2570 = vand.u32 2147483647, %v2560
        %vm2571 = vcmp.eq.f32.partialorder %v2570, 8.507059e+37
        %v2572 = vand.u32 %v2560, 2147483648
        %v2573 = vor.u32 1.1754944e-38, %v2572
        %v2574 = vsel %vm2571, %v2573, %v2569
        %v2575 = vmul.f32 %v2557, %v2574
        %s2576 = scalar_lea.vmem %s487, 104 [#allocation3]
        %2577 = vst.msk [vmem:[%s2576] sm:$0xff] %vm1148, %v2575
        %v2579 = vsel %vm1148, %v2167, 0
        %v2582 = vsel %vm1148, %v2575, 0
        %2584 = vmatpush.xpose.msra.mxu0 0.0
        %2585 = vmatpush.xpose.msra.mxu0 0.0
        %2586 = vmatpush.xpose.msra.mxu0 0.0
        %2587 = vmatpush.xpose.msra.mxu0 0.0
        %2588 = vmatpush.xpose.msra.mxu0 0.0
        %2589 = vmatpush.xpose.msra.mxu0 0.0
        %2590 = vmatpush.xpose.msra.mxu0 0.0
        %2591 = vmatpush.xpose.msra.mxu0 0.0
        %2592 = vmatpush.xpose.msra.mxu0 0.0
        %2593 = vmatpush.xpose.msra.mxu0 0.0
        %2594 = vmatpush.xpose.msra.mxu0 0.0
        %2595 = vmatpush.xpose.msra.mxu0 0.0
        %2596 = vmatpush.xpose.msra.mxu0 0.0
        %2597 = vmatpush.xpose.msra.mxu0 0.0
        %2598 = vmatpush.xpose.msra.mxu0 0.0
        %2599 = vmatpush.xpose.msra.mxu0 %v2582
        %2600 = vmatmul.f32.gmra.mxu0 %v2579
        %v2601 = vpop.f32.mrf.mxu0
        %v2602 = vadd.f32 0.0, %v2601
        %2603 = vdwg.mxu0
        %2604 = vst.msk [vmem:[#allocation2 + $0x18] sm:$0xff] %vm1148, %v2602
        %v2605 = vld [vmem:[#allocation2] sm:$0xff]
        %v2606 = vld [vmem:[#allocation2 + $0x8] sm:$0xff]
        %v2607 = vld [vmem:[#allocation2 + $0x10] sm:$0xff]
        %v2608 = vld [vmem:[#allocation2 + $0x18] sm:$0xff]
        %2609 = vmatpush.msra.mxu0 0.0
        %2610 = vmatpush.msra.mxu0 0.0
        %2611 = vmatpush.msra.mxu0 0.0
        %2612 = vmatpush.msra.mxu0 0.0
        %2613 = vmatpush.msra.mxu0 0.0
        %2614 = vmatpush.msra.mxu0 0.0
        %2615 = vmatpush.msra.mxu0 0.0
        %2616 = vmatpush.msra.mxu0 0.0
        %2617 = vmatpush.msra.mxu0 0.0
        %2618 = vmatpush.msra.mxu0 0.0
        %2619 = vmatpush.msra.mxu0 0.0
        %2620 = vmatpush.msra.mxu0 0.0
        %2621 = vmatpush.msra.mxu0 %v2608
        %2622 = vmatpush.msra.mxu0 %v2607
        %2623 = vmatpush.msra.mxu0 %v2606
        %2624 = vmatpush.msra.mxu0 %v2605
        %2625 = vmatmul.f32.gmra.mxu0 %v1577
        %v2626 = vpop.f32.mrf.mxu0
        %v2627 = vadd.f32 %v1559, %v2626
        %2628 = vmatmul.f32.gmra.mxu0 %v1580
        %v2629 = vpop.f32.mrf.mxu0
        %v2630 = vadd.f32 %v1564, %v2629
        %2631 = vmatmul.f32.gmra.mxu0 %v1583
        %v2632 = vpop.f32.mrf.mxu0
        %v2633 = vadd.f32 %v1569, %v2632
        %2634 = vmatmul.f32.gmra.mxu0 %v1586
        %v2635 = vpop.f32.mrf.mxu0
        %v2636 = vadd.f32 %v1574, %v2635
        %2637 = vdwg.mxu0
        %v2642 = vrot.slane %v2627, 1
        %v2643 = vrot.slane %v2627, 2
        %v2644 = vrot.slane %v2627, 3
        %v2645 = vrot.slane %v2627, 4
        %v2646 = vrot.slane %v2627, 5
        %v2647 = vrot.slane %v2627, 6
        %v2648 = vrot.slane %v2627, 7
        %v2649 = vrot.slane %v2630, 1
        %v2650 = vrot.slane %v2630, 2
        %v2651 = vrot.slane %v2630, 3
        %v2652 = vrot.slane %v2630, 4
        %v2653 = vrot.slane %v2630, 5
        %v2654 = vrot.slane %v2630, 6
        %v2655 = vrot.slane %v2630, 7
        %v2656 = vrot.slane %v2633, 1
        %v2657 = vrot.slane %v2633, 2
        %v2658 = vrot.slane %v2633, 3
        %v2659 = vrot.slane %v2633, 4
        %v2660 = vrot.slane %v2633, 5
        %v2661 = vrot.slane %v2633, 6
        %v2662 = vrot.slane %v2633, 7
        %v2663 = vrot.slane %v2636, 1
        %v2664 = vrot.slane %v2636, 2
        %v2665 = vrot.slane %v2636, 3
        %v2666 = vrot.slane %v2636, 4
        %v2667 = vrot.slane %v2636, 5
        %v2668 = vrot.slane %v2636, 6
        %v2669 = vrot.slane %v2636, 7
        %2698 = vst.msk [vmem:[%s519 + $0x1] sm:$0x1] %vm1677, %v2627
        %2699 = vst.msk [vmem:[%s519 + $0x5] sm:$0x1] %vm1677, %v2642
        %2700 = vst.msk [vmem:[%s519 + $0x9] sm:$0x1] %vm1677, %v2643
        %2701 = vst.msk [vmem:[%s519 + $0xd] sm:$0x1] %vm1677, %v2644
        %2702 = vst.msk [vmem:[%s519 + $0x11] sm:$0x1] %vm1677, %v2645
        %2703 = vst.msk [vmem:[%s519 + $0x15] sm:$0x1] %vm1677, %v2646
        %2704 = vst.msk [vmem:[%s519 + $0x19] sm:$0x1] %vm1677, %v2647
        %2705 = vst.msk [vmem:[%s519 + $0x1d] sm:$0x1] %vm1677, %v2648
        %2706 = vst.msk [vmem:[%s519 + $0x21] sm:$0x1] %vm1677, %v2630
        %2707 = vst.msk [vmem:[%s519 + $0x25] sm:$0x1] %vm1677, %v2649
        %2708 = vst.msk [vmem:[%s519 + $0x29] sm:$0x1] %vm1677, %v2650
        %2709 = vst.msk [vmem:[%s519 + $0x2d] sm:$0x1] %vm1677, %v2651
        %2710 = vst.msk [vmem:[%s519 + $0x31] sm:$0x1] %vm1677, %v2652
        %2711 = vst.msk [vmem:[%s519 + $0x35] sm:$0x1] %vm1677, %v2653
        %2712 = vst.msk [vmem:[%s519 + $0x39] sm:$0x1] %vm1677, %v2654
        %2713 = vst.msk [vmem:[%s519 + $0x3d] sm:$0x1] %vm1677, %v2655
        %2714 = vst.msk [vmem:[%s519 + $0x41] sm:$0x1] %vm1677, %v2633
        %2715 = vst.msk [vmem:[%s519 + $0x45] sm:$0x1] %vm1677, %v2656
        %2716 = vst.msk [vmem:[%s519 + $0x49] sm:$0x1] %vm1677, %v2657
        %2717 = vst.msk [vmem:[%s519 + $0x4d] sm:$0x1] %vm1677, %v2658
        %2718 = vst.msk [vmem:[%s519 + $0x51] sm:$0x1] %vm1677, %v2659
        %2719 = vst.msk [vmem:[%s519 + $0x55] sm:$0x1] %vm1677, %v2660
        %2720 = vst.msk [vmem:[%s519 + $0x59] sm:$0x1] %vm1677, %v2661
        %2721 = vst.msk [vmem:[%s519 + $0x5d] sm:$0x1] %vm1677, %v2662
        %2722 = vst.msk [vmem:[%s519 + $0x61] sm:$0x1] %vm1677, %v2636
        %2723 = vst.msk [vmem:[%s519 + $0x65] sm:$0x1] %vm1677, %v2663
        %2724 = vst.msk [vmem:[%s519 + $0x69] sm:$0x1] %vm1677, %v2664
        %2725 = vst.msk [vmem:[%s519 + $0x6d] sm:$0x1] %vm1677, %v2665
        %2726 = vst.msk [vmem:[%s519 + $0x71] sm:$0x1] %vm1677, %v2666
        %2727 = vst.msk [vmem:[%s519 + $0x75] sm:$0x1] %vm1677, %v2667
        %2728 = vst.msk [vmem:[%s519 + $0x79] sm:$0x1] %vm1677, %v2668
        %2729 = vst.msk [vmem:[%s519 + $0x7d] sm:$0x1] %vm1677, %v2669
        %v2730 = vld [vmem:[%s495 + $0x2] sm:$0x1]
        %v2731 = vld [vmem:[%s495 + $0x6] sm:$0x1]
        %v2732 = vld [vmem:[%s495 + $0xa] sm:$0x1]
        %v2733 = vld [vmem:[%s495 + $0xe] sm:$0x1]
        %v2734 = vld [vmem:[%s495 + $0x12] sm:$0x1]
        %v2735 = vld [vmem:[%s495 + $0x16] sm:$0x1]
        %v2736 = vld [vmem:[%s495 + $0x1a] sm:$0x1]
        %v2737 = vld [vmem:[%s495 + $0x1e] sm:$0x1]
        %v2738 = vld [vmem:[%s495 + $0x22] sm:$0x1]
        %v2739 = vld [vmem:[%s495 + $0x26] sm:$0x1]
        %v2740 = vld [vmem:[%s495 + $0x2a] sm:$0x1]
        %v2741 = vld [vmem:[%s495 + $0x2e] sm:$0x1]
        %v2742 = vld [vmem:[%s495 + $0x32] sm:$0x1]
        %v2743 = vld [vmem:[%s495 + $0x36] sm:$0x1]
        %v2744 = vld [vmem:[%s495 + $0x3a] sm:$0x1]
        %v2745 = vld [vmem:[%s495 + $0x3e] sm:$0x1]
        %v2746 = vld [vmem:[%s495 + $0x42] sm:$0x1]
        %v2747 = vld [vmem:[%s495 + $0x46] sm:$0x1]
        %v2748 = vld [vmem:[%s495 + $0x4a] sm:$0x1]
        %v2749 = vld [vmem:[%s495 + $0x4e] sm:$0x1]
        %v2750 = vld [vmem:[%s495 + $0x52] sm:$0x1]
        %v2751 = vld [vmem:[%s495 + $0x56] sm:$0x1]
        %v2752 = vld [vmem:[%s495 + $0x5a] sm:$0x1]
        %v2753 = vld [vmem:[%s495 + $0x5e] sm:$0x1]
        %v2754 = vld [vmem:[%s495 + $0x62] sm:$0x1]
        %v2755 = vld [vmem:[%s495 + $0x66] sm:$0x1]
        %v2756 = vld [vmem:[%s495 + $0x6a] sm:$0x1]
        %v2757 = vld [vmem:[%s495 + $0x6e] sm:$0x1]
        %v2758 = vld [vmem:[%s495 + $0x72] sm:$0x1]
        %v2759 = vld [vmem:[%s495 + $0x76] sm:$0x1]
        %v2760 = vld [vmem:[%s495 + $0x7a] sm:$0x1]
        %v2761 = vld [vmem:[%s495 + $0x7e] sm:$0x1]
        %v2762 = vld [vmem:[%s503 + $0x2] sm:$0x1]
        %v2763 = vld [vmem:[%s503 + $0x6] sm:$0x1]
        %v2764 = vld [vmem:[%s503 + $0xa] sm:$0x1]
        %v2765 = vld [vmem:[%s503 + $0xe] sm:$0x1]
        %v2766 = vld [vmem:[%s503 + $0x12] sm:$0x1]
        %v2767 = vld [vmem:[%s503 + $0x16] sm:$0x1]
        %v2768 = vld [vmem:[%s503 + $0x1a] sm:$0x1]
        %v2769 = vld [vmem:[%s503 + $0x1e] sm:$0x1]
        %v2770 = vld [vmem:[%s503 + $0x22] sm:$0x1]
        %v2771 = vld [vmem:[%s503 + $0x26] sm:$0x1]
        %v2772 = vld [vmem:[%s503 + $0x2a] sm:$0x1]
        %v2773 = vld [vmem:[%s503 + $0x2e] sm:$0x1]
        %v2774 = vld [vmem:[%s503 + $0x32] sm:$0x1]
        %v2775 = vld [vmem:[%s503 + $0x36] sm:$0x1]
        %v2776 = vld [vmem:[%s503 + $0x3a] sm:$0x1]
        %v2777 = vld [vmem:[%s503 + $0x3e] sm:$0x1]
        %v2778 = vld [vmem:[%s503 + $0x42] sm:$0x1]
        %v2779 = vld [vmem:[%s503 + $0x46] sm:$0x1]
        %v2780 = vld [vmem:[%s503 + $0x4a] sm:$0x1]
        %v2781 = vld [vmem:[%s503 + $0x4e] sm:$0x1]
        %v2782 = vld [vmem:[%s503 + $0x52] sm:$0x1]
        %v2783 = vld [vmem:[%s503 + $0x56] sm:$0x1]
        %v2784 = vld [vmem:[%s503 + $0x5a] sm:$0x1]
        %v2785 = vld [vmem:[%s503 + $0x5e] sm:$0x1]
        %v2786 = vld [vmem:[%s503 + $0x62] sm:$0x1]
        %v2787 = vld [vmem:[%s503 + $0x66] sm:$0x1]
        %v2788 = vld [vmem:[%s503 + $0x6a] sm:$0x1]
        %v2789 = vld [vmem:[%s503 + $0x6e] sm:$0x1]
        %v2790 = vld [vmem:[%s503 + $0x72] sm:$0x1]
        %v2791 = vld [vmem:[%s503 + $0x76] sm:$0x1]
        %v2792 = vld [vmem:[%s503 + $0x7a] sm:$0x1]
        %v2793 = vld [vmem:[%s503 + $0x7e] sm:$0x1]
        %v2794 = vld [vmem:[%s511 + $0x2] sm:$0x1]
        %v2795 = vld [vmem:[%s511 + $0x6] sm:$0x1]
        %v2796 = vld [vmem:[%s511 + $0xa] sm:$0x1]
        %v2797 = vld [vmem:[%s511 + $0xe] sm:$0x1]
        %v2798 = vld [vmem:[%s511 + $0x12] sm:$0x1]
        %v2799 = vld [vmem:[%s511 + $0x16] sm:$0x1]
        %v2800 = vld [vmem:[%s511 + $0x1a] sm:$0x1]
        %v2801 = vld [vmem:[%s511 + $0x1e] sm:$0x1]
        %v2802 = vld [vmem:[%s511 + $0x22] sm:$0x1]
        %v2803 = vld [vmem:[%s511 + $0x26] sm:$0x1]
        %v2804 = vld [vmem:[%s511 + $0x2a] sm:$0x1]
        %v2805 = vld [vmem:[%s511 + $0x2e] sm:$0x1]
        %v2806 = vld [vmem:[%s511 + $0x32] sm:$0x1]
        %v2807 = vld [vmem:[%s511 + $0x36] sm:$0x1]
        %v2808 = vld [vmem:[%s511 + $0x3a] sm:$0x1]
        %v2809 = vld [vmem:[%s511 + $0x3e] sm:$0x1]
        %v2810 = vld [vmem:[%s511 + $0x42] sm:$0x1]
        %v2811 = vld [vmem:[%s511 + $0x46] sm:$0x1]
        %v2812 = vld [vmem:[%s511 + $0x4a] sm:$0x1]
        %v2813 = vld [vmem:[%s511 + $0x4e] sm:$0x1]
        %v2814 = vld [vmem:[%s511 + $0x52] sm:$0x1]
        %v2815 = vld [vmem:[%s511 + $0x56] sm:$0x1]
        %v2816 = vld [vmem:[%s511 + $0x5a] sm:$0x1]
        %v2817 = vld [vmem:[%s511 + $0x5e] sm:$0x1]
        %v2818 = vld [vmem:[%s511 + $0x62] sm:$0x1]
        %v2819 = vld [vmem:[%s511 + $0x66] sm:$0x1]
        %v2820 = vld [vmem:[%s511 + $0x6a] sm:$0x1]
        %v2821 = vld [vmem:[%s511 + $0x6e] sm:$0x1]
        %v2822 = vld [vmem:[%s511 + $0x72] sm:$0x1]
        %v2823 = vld [vmem:[%s511 + $0x76] sm:$0x1]
        %v2824 = vld [vmem:[%s511 + $0x7a] sm:$0x1]
        %v2825 = vld [vmem:[%s511 + $0x7e] sm:$0x1]
        %v2858 = vrot.slane %v2731, 7
        %v2859 = vsel %vm702, %v2858, %v2730
        %v2860 = vrot.slane %v2732, 6
        %v2861 = vsel %vm705, %v2860, %v2859
        %v2862 = vrot.slane %v2733, 5
        %v2863 = vsel %vm708, %v2862, %v2861
        %v2864 = vrot.slane %v2734, 4
        %v2865 = vsel %vm711, %v2864, %v2863
        %v2866 = vrot.slane %v2735, 3
        %v2867 = vsel %vm714, %v2866, %v2865
        %v2868 = vrot.slane %v2736, 2
        %v2869 = vsel %vm717, %v2868, %v2867
        %v2870 = vrot.slane %v2737, 1
        %v2871 = vsel %vm720, %v2870, %v2869
        %v2872 = vrot.slane %v2739, 7
        %v2873 = vsel %vm702, %v2872, %v2738
        %v2874 = vrot.slane %v2740, 6
        %v2875 = vsel %vm705, %v2874, %v2873
        %v2876 = vrot.slane %v2741, 5
        %v2877 = vsel %vm708, %v2876, %v2875
        %v2878 = vrot.slane %v2742, 4
        %v2879 = vsel %vm711, %v2878, %v2877
        %v2880 = vrot.slane %v2743, 3
        %v2881 = vsel %vm714, %v2880, %v2879
        %v2882 = vrot.slane %v2744, 2
        %v2883 = vsel %vm717, %v2882, %v2881
        %v2884 = vrot.slane %v2745, 1
        %v2885 = vsel %vm720, %v2884, %v2883
        %v2886 = vrot.slane %v2747, 7
        %v2887 = vsel %vm702, %v2886, %v2746
        %v2888 = vrot.slane %v2748, 6
        %v2889 = vsel %vm705, %v2888, %v2887
        %v2890 = vrot.slane %v2749, 5
        %v2891 = vsel %vm708, %v2890, %v2889
        %v2892 = vrot.slane %v2750, 4
        %v2893 = vsel %vm711, %v2892, %v2891
        %v2894 = vrot.slane %v2751, 3
        %v2895 = vsel %vm714, %v2894, %v2893
        %v2896 = vrot.slane %v2752, 2
        %v2897 = vsel %vm717, %v2896, %v2895
        %v2898 = vrot.slane %v2753, 1
        %v2899 = vsel %vm720, %v2898, %v2897
        %v2900 = vrot.slane %v2755, 7
        %v2901 = vsel %vm702, %v2900, %v2754
        %v2902 = vrot.slane %v2756, 6
        %v2903 = vsel %vm705, %v2902, %v2901
        %v2904 = vrot.slane %v2757, 5
        %v2905 = vsel %vm708, %v2904, %v2903
        %v2906 = vrot.slane %v2758, 4
        %v2907 = vsel %vm711, %v2906, %v2905
        %v2908 = vrot.slane %v2759, 3
        %v2909 = vsel %vm714, %v2908, %v2907
        %v2910 = vrot.slane %v2760, 2
        %v2911 = vsel %vm717, %v2910, %v2909
        %v2912 = vrot.slane %v2761, 1
        %v2913 = vsel %vm720, %v2912, %v2911
        %2918 = vmatpush.msra.mxu0 0.0
        %2919 = vmatpush.msra.mxu0 0.0
        %2920 = vmatpush.msra.mxu0 0.0
        %2921 = vmatpush.msra.mxu0 0.0
        %2922 = vmatpush.msra.mxu0 0.0
        %2923 = vmatpush.msra.mxu0 0.0
        %2924 = vmatpush.msra.mxu0 0.0
        %2925 = vmatpush.msra.mxu0 0.0
        %2926 = vmatpush.msra.mxu0 0.0
        %2927 = vmatpush.msra.mxu0 0.0
        %2928 = vmatpush.msra.mxu0 0.0
        %2929 = vmatpush.msra.mxu0 0.0
        %2930 = vmatpush.msra.mxu0 %v2913
        %2931 = vmatpush.msra.mxu0 %v2899
        %2932 = vmatpush.msra.mxu0 %v2885
        %2933 = vmatpush.msra.mxu0 %v2871
        %2934 = vmatmul.f32.gmra.mxu0 %v770
        %v2935 = vpop.f32.mrf.mxu0
        %v2936 = vadd.f32 %v652, %v2935
        %2937 = vmatmul.f32.gmra.mxu0 %v773
        %v2938 = vpop.f32.mrf.mxu0
        %v2939 = vadd.f32 %v657, %v2938
        %2940 = vmatmul.f32.gmra.mxu0 %v776
        %v2941 = vpop.f32.mrf.mxu0
        %v2942 = vadd.f32 %v662, %v2941
        %2943 = vmatmul.f32.gmra.mxu0 %v779
        %v2944 = vpop.f32.mrf.mxu0
        %v2945 = vadd.f32 %v667, %v2944
        %2946 = vdwg.mxu0
        %v2979 = vrot.slane %v2763, 7
        %v2980 = vsel %vm702, %v2979, %v2762
        %v2981 = vrot.slane %v2764, 6
        %v2982 = vsel %vm705, %v2981, %v2980
        %v2983 = vrot.slane %v2765, 5
        %v2984 = vsel %vm708, %v2983, %v2982
        %v2985 = vrot.slane %v2766, 4
        %v2986 = vsel %vm711, %v2985, %v2984
        %v2987 = vrot.slane %v2767, 3
        %v2988 = vsel %vm714, %v2987, %v2986
        %v2989 = vrot.slane %v2768, 2
        %v2990 = vsel %vm717, %v2989, %v2988
        %v2991 = vrot.slane %v2769, 1
        %v2992 = vsel %vm720, %v2991, %v2990
        %v2993 = vrot.slane %v2771, 7
        %v2994 = vsel %vm702, %v2993, %v2770
        %v2995 = vrot.slane %v2772, 6
        %v2996 = vsel %vm705, %v2995, %v2994
        %v2997 = vrot.slane %v2773, 5
        %v2998 = vsel %vm708, %v2997, %v2996
        %v2999 = vrot.slane %v2774, 4
        %v3000 = vsel %vm711, %v2999, %v2998
        %v3001 = vrot.slane %v2775, 3
        %v3002 = vsel %vm714, %v3001, %v3000
        %v3003 = vrot.slane %v2776, 2
        %v3004 = vsel %vm717, %v3003, %v3002
        %v3005 = vrot.slane %v2777, 1
        %v3006 = vsel %vm720, %v3005, %v3004
        %v3007 = vrot.slane %v2779, 7
        %v3008 = vsel %vm702, %v3007, %v2778
        %v3009 = vrot.slane %v2780, 6
        %v3010 = vsel %vm705, %v3009, %v3008
        %v3011 = vrot.slane %v2781, 5
        %v3012 = vsel %vm708, %v3011, %v3010
        %v3013 = vrot.slane %v2782, 4
        %v3014 = vsel %vm711, %v3013, %v3012
        %v3015 = vrot.slane %v2783, 3
        %v3016 = vsel %vm714, %v3015, %v3014
        %v3017 = vrot.slane %v2784, 2
        %v3018 = vsel %vm717, %v3017, %v3016
        %v3019 = vrot.slane %v2785, 1
        %v3020 = vsel %vm720, %v3019, %v3018
        %v3021 = vrot.slane %v2787, 7
        %v3022 = vsel %vm702, %v3021, %v2786
        %v3023 = vrot.slane %v2788, 6
        %v3024 = vsel %vm705, %v3023, %v3022
        %v3025 = vrot.slane %v2789, 5
        %v3026 = vsel %vm708, %v3025, %v3024
        %v3027 = vrot.slane %v2790, 4
        %v3028 = vsel %vm711, %v3027, %v3026
        %v3029 = vrot.slane %v2791, 3
        %v3030 = vsel %vm714, %v3029, %v3028
        %v3031 = vrot.slane %v2792, 2
        %v3032 = vsel %vm717, %v3031, %v3030
        %v3033 = vrot.slane %v2793, 1
        %v3034 = vsel %vm720, %v3033, %v3032
        %3039 = vmatpush.msra.mxu0 0.0
        %3040 = vmatpush.msra.mxu0 0.0
        %3041 = vmatpush.msra.mxu0 0.0
        %3042 = vmatpush.msra.mxu0 0.0
        %3043 = vmatpush.msra.mxu0 0.0
        %3044 = vmatpush.msra.mxu0 0.0
        %3045 = vmatpush.msra.mxu0 0.0
        %3046 = vmatpush.msra.mxu0 0.0
        %3047 = vmatpush.msra.mxu0 0.0
        %3048 = vmatpush.msra.mxu0 0.0
        %3049 = vmatpush.msra.mxu0 0.0
        %3050 = vmatpush.msra.mxu0 0.0
        %3051 = vmatpush.msra.mxu0 %v3034
        %3052 = vmatpush.msra.mxu0 %v3020
        %3053 = vmatpush.msra.mxu0 %v3006
        %3054 = vmatpush.msra.mxu0 %v2992
        %3055 = vmatmul.f32.gmra.mxu0 %v923
        %v3056 = vpop.f32.mrf.mxu0
        %v3057 = vadd.f32 %v813, %v3056
        %3058 = vmatmul.f32.gmra.mxu0 %v926
        %v3059 = vpop.f32.mrf.mxu0
        %v3060 = vadd.f32 %v818, %v3059
        %3061 = vmatmul.f32.gmra.mxu0 %v929
        %v3062 = vpop.f32.mrf.mxu0
        %v3063 = vadd.f32 %v823, %v3062
        %3064 = vmatmul.f32.gmra.mxu0 %v932
        %v3065 = vpop.f32.mrf.mxu0
        %v3066 = vadd.f32 %v828, %v3065
        %3067 = vdwg.mxu0
        %v3100 = vrot.slane %v2795, 7
        %v3101 = vsel %vm702, %v3100, %v2794
        %v3102 = vrot.slane %v2796, 6
        %v3103 = vsel %vm705, %v3102, %v3101
        %v3104 = vrot.slane %v2797, 5
        %v3105 = vsel %vm708, %v3104, %v3103
        %v3106 = vrot.slane %v2798, 4
        %v3107 = vsel %vm711, %v3106, %v3105
        %v3108 = vrot.slane %v2799, 3
        %v3109 = vsel %vm714, %v3108, %v3107
        %v3110 = vrot.slane %v2800, 2
        %v3111 = vsel %vm717, %v3110, %v3109
        %v3112 = vrot.slane %v2801, 1
        %v3113 = vsel %vm720, %v3112, %v3111
        %v3114 = vrot.slane %v2803, 7
        %v3115 = vsel %vm702, %v3114, %v2802
        %v3116 = vrot.slane %v2804, 6
        %v3117 = vsel %vm705, %v3116, %v3115
        %v3118 = vrot.slane %v2805, 5
        %v3119 = vsel %vm708, %v3118, %v3117
        %v3120 = vrot.slane %v2806, 4
        %v3121 = vsel %vm711, %v3120, %v3119
        %v3122 = vrot.slane %v2807, 3
        %v3123 = vsel %vm714, %v3122, %v3121
        %v3124 = vrot.slane %v2808, 2
        %v3125 = vsel %vm717, %v3124, %v3123
        %v3126 = vrot.slane %v2809, 1
        %v3127 = vsel %vm720, %v3126, %v3125
        %v3128 = vrot.slane %v2811, 7
        %v3129 = vsel %vm702, %v3128, %v2810
        %v3130 = vrot.slane %v2812, 6
        %v3131 = vsel %vm705, %v3130, %v3129
        %v3132 = vrot.slane %v2813, 5
        %v3133 = vsel %vm708, %v3132, %v3131
        %v3134 = vrot.slane %v2814, 4
        %v3135 = vsel %vm711, %v3134, %v3133
        %v3136 = vrot.slane %v2815, 3
        %v3137 = vsel %vm714, %v3136, %v3135
        %v3138 = vrot.slane %v2816, 2
        %v3139 = vsel %vm717, %v3138, %v3137
        %v3140 = vrot.slane %v2817, 1
        %v3141 = vsel %vm720, %v3140, %v3139
        %v3142 = vrot.slane %v2819, 7
        %v3143 = vsel %vm702, %v3142, %v2818
        %v3144 = vrot.slane %v2820, 6
        %v3145 = vsel %vm705, %v3144, %v3143
        %v3146 = vrot.slane %v2821, 5
        %v3147 = vsel %vm708, %v3146, %v3145
        %v3148 = vrot.slane %v2822, 4
        %v3149 = vsel %vm711, %v3148, %v3147
        %v3150 = vrot.slane %v2823, 3
        %v3151 = vsel %vm714, %v3150, %v3149
        %v3152 = vrot.slane %v2824, 2
        %v3153 = vsel %vm717, %v3152, %v3151
        %v3154 = vrot.slane %v2825, 1
        %v3155 = vsel %vm720, %v3154, %v3153
        %3160 = vmatpush.msra.mxu0 0.0
        %3161 = vmatpush.msra.mxu0 0.0
        %3162 = vmatpush.msra.mxu0 0.0
        %3163 = vmatpush.msra.mxu0 0.0
        %3164 = vmatpush.msra.mxu0 0.0
        %3165 = vmatpush.msra.mxu0 0.0
        %3166 = vmatpush.msra.mxu0 0.0
        %3167 = vmatpush.msra.mxu0 0.0
        %3168 = vmatpush.msra.mxu0 0.0
        %3169 = vmatpush.msra.mxu0 0.0
        %3170 = vmatpush.msra.mxu0 0.0
        %3171 = vmatpush.msra.mxu0 0.0
        %3172 = vmatpush.msra.mxu0 %v3155
        %3173 = vmatpush.msra.mxu0 %v3141
        %3174 = vmatpush.msra.mxu0 %v3127
        %3175 = vmatpush.msra.mxu0 %v3113
        %3176 = vmatmul.f32.gmra.mxu0 %v1076
        %v3177 = vpop.f32.mrf.mxu0
        %v3178 = vadd.f32 %v966, %v3177
        %3179 = vmatmul.f32.gmra.mxu0 %v1079
        %v3180 = vpop.f32.mrf.mxu0
        %v3181 = vadd.f32 %v971, %v3180
        %3182 = vmatmul.f32.gmra.mxu0 %v1082
        %v3183 = vpop.f32.mrf.mxu0
        %v3184 = vadd.f32 %v976, %v3183
        %3185 = vmatmul.f32.gmra.mxu0 %v1085
        %v3186 = vpop.f32.mrf.mxu0
        %v3187 = vadd.f32 %v981, %v3186
        %3188 = vdwg.mxu0
        %3189 = vxpose.xlu0.b32.start [1/16] %v2936, 128
        %3190 = vxpose.xlu0.b32.cont [2/16] 0.0, 128
        %3191 = vxpose.xlu0.b32.cont [3/16] 0.0, 128
        %3192 = vxpose.xlu0.b32.cont [4/16] 0.0, 128
        %3193 = vxpose.xlu0.b32.cont [5/16] 0.0, 128
        %3194 = vxpose.xlu0.b32.cont [6/16] 0.0, 128
        %3195 = vxpose.xlu0.b32.cont [7/16] 0.0, 128
        %3196 = vxpose.xlu0.b32.cont [8/16] 0.0, 128
        %3197 = vxpose.xlu0.b32.cont [9/16] 0.0, 128
        %3198 = vxpose.xlu0.b32.cont [10/16] 0.0, 128
        %3199 = vxpose.xlu0.b32.cont [11/16] 0.0, 128
        %3200 = vxpose.xlu0.b32.cont [12/16] 0.0, 128
        %3201 = vxpose.xlu0.b32.cont [13/16] 0.0, 128
        %3202 = vxpose.xlu0.b32.cont [14/16] 0.0, 128
        %3203 = vxpose.xlu0.b32.cont [15/16] 0.0, 128
        %3204 = vxpose.xlu0.b32.end [16/16] 0.0, 128
        %v3205 = vpop.trf.xlu0
        %v3206 = vpop.trf.xlu0
        %v3207 = vpop.trf.xlu0
        %v3208 = vpop.trf.xlu0
        %v3209 = vpop.trf.xlu0
        %v3210 = vpop.trf.xlu0
        %v3211 = vpop.trf.xlu0
        %v3212 = vpop.trf.xlu0
        %v3213 = vpop.trf.xlu0
        %v3214 = vpop.trf.xlu0
        %v3215 = vpop.trf.xlu0
        %v3216 = vpop.trf.xlu0
        %v3217 = vpop.trf.xlu0
        %v3218 = vpop.trf.xlu0
        %v3219 = vpop.trf.xlu0
        %v3220 = vpop.trf.xlu0
        %v3222 = vsel %vm1148, %v3205, 0
        %3224 = vmatpush.msra.mxu0 0.0
        %3225 = vmatpush.msra.mxu0 0.0
        %3226 = vmatpush.msra.mxu0 0.0
        %3227 = vmatpush.msra.mxu0 0.0
        %3228 = vmatpush.msra.mxu0 0.0
        %3229 = vmatpush.msra.mxu0 0.0
        %3230 = vmatpush.msra.mxu0 0.0
        %3231 = vmatpush.msra.mxu0 0.0
        %3232 = vmatpush.msra.mxu0 0.0
        %3233 = vmatpush.msra.mxu0 0.0
        %3234 = vmatpush.msra.mxu0 0.0
        %3235 = vmatpush.msra.mxu0 0.0
        %3236 = vmatpush.msra.mxu0 0.0
        %3237 = vmatpush.msra.mxu0 0.0
        %3238 = vmatpush.msra.mxu0 0.0
        %3239 = vmatpush.msra.mxu0 %v3057
        %3240 = vmatmul.f32.gmra.mxu0 %v3222
        %v3241 = vpop.f32.mrf.mxu0
        %v3242 = vadd.f32 0.0, %v3241
        %3243 = vdwg.mxu0
        %v3244 = vmul.f32 %v3242, 0.35355338
        %v3245 = vsel %vm1148, %v3244, -inf
        %3246 = vmax.xlane.f32.xlu0 %v3245
        %v3247 = vpop.xlane.xlu0 %3246
        %v3248 = vsub.f32 %v3244, %v3247
        %v3249 = vmul.f32 %v3248, 1.442695
        %v3250 = vpow.pop %v3249
        %v3251 = vsel %vm1148, %v3250, 0.0
        %3252 = vadd.xlane.f32.xlu0 %v3251
        %v3253 = vpop.xlane.xlu0 %3252
        %v3254 = vrcp.pop %v3253
        %v3255 = vmul.f32 %v3253, %v3254
        %v3256 = vsub.f32 1.0, %v3255
        %v3257 = vmul.f32 %v3254, %v3256
        %v3258 = vadd.f32 %v3254, %v3257
        %vm3259 = vweird.f32 %v3253
        %vm3260 = vweird.f32 %v3254
        %vm3261 = vmor %vm3259, %vm3260
        %v3262 = vsel %vm3261, %v3254, %v3258
        %v3263 = vand.u32 2147483647, %v3253
        %vm3264 = vcmp.eq.f32.partialorder %v3263, 8.507059e+37
        %v3265 = vand.u32 %v3253, 2147483648
        %v3266 = vor.u32 1.1754944e-38, %v3265
        %v3267 = vsel %vm3264, %v3266, %v3262
        %v3268 = vmul.f32 %v3250, %v3267
        %s3269 = scalar_lea.vmem %s487, 16 [#allocation3]
        %3270 = vst.msk [vmem:[%s3269] sm:$0xff] %vm1148, %v3268
        %v3272 = vsel %vm1148, %v3178, 0
        %v3275 = vsel %vm1148, %v3268, 0
        %3277 = vmatpush.xpose.msra.mxu0 0.0
        %3278 = vmatpush.xpose.msra.mxu0 0.0
        %3279 = vmatpush.xpose.msra.mxu0 0.0
        %3280 = vmatpush.xpose.msra.mxu0 0.0
        %3281 = vmatpush.xpose.msra.mxu0 0.0
        %3282 = vmatpush.xpose.msra.mxu0 0.0
        %3283 = vmatpush.xpose.msra.mxu0 0.0
        %3284 = vmatpush.xpose.msra.mxu0 0.0
        %3285 = vmatpush.xpose.msra.mxu0 0.0
        %3286 = vmatpush.xpose.msra.mxu0 0.0
        %3287 = vmatpush.xpose.msra.mxu0 0.0
        %3288 = vmatpush.xpose.msra.mxu0 0.0
        %3289 = vmatpush.xpose.msra.mxu0 0.0
        %3290 = vmatpush.xpose.msra.mxu0 0.0
        %3291 = vmatpush.xpose.msra.mxu0 0.0
        %3292 = vmatpush.xpose.msra.mxu0 %v3275
        %3293 = vmatmul.f32.gmra.mxu0 %v3272
        %v3294 = vpop.f32.mrf.mxu0
        %v3295 = vadd.f32 0.0, %v3294
        %3296 = vdwg.mxu0
        %3297 = vst.msk [vmem:[#allocation2] sm:$0xff] %vm1148, %v3295
        %3298 = vxpose.xlu0.b32.start [1/16] %v2939, 128
        %3299 = vxpose.xlu0.b32.cont [2/16] 0.0, 128
        %3300 = vxpose.xlu0.b32.cont [3/16] 0.0, 128
        %3301 = vxpose.xlu0.b32.cont [4/16] 0.0, 128
        %3302 = vxpose.xlu0.b32.cont [5/16] 0.0, 128
        %3303 = vxpose.xlu0.b32.cont [6/16] 0.0, 128
        %3304 = vxpose.xlu0.b32.cont [7/16] 0.0, 128
        %3305 = vxpose.xlu0.b32.cont [8/16] 0.0, 128
        %3306 = vxpose.xlu0.b32.cont [9/16] 0.0, 128
        %3307 = vxpose.xlu0.b32.cont [10/16] 0.0, 128
        %3308 = vxpose.xlu0.b32.cont [11/16] 0.0, 128
        %3309 = vxpose.xlu0.b32.cont [12/16] 0.0, 128
        %3310 = vxpose.xlu0.b32.cont [13/16] 0.0, 128
        %3311 = vxpose.xlu0.b32.cont [14/16] 0.0, 128
        %3312 = vxpose.xlu0.b32.cont [15/16] 0.0, 128
        %3313 = vxpose.xlu0.b32.end [16/16] 0.0, 128
        %v3314 = vpop.trf.xlu0
        %v3315 = vpop.trf.xlu0
        %v3316 = vpop.trf.xlu0
        %v3317 = vpop.trf.xlu0
        %v3318 = vpop.trf.xlu0
        %v3319 = vpop.trf.xlu0
        %v3320 = vpop.trf.xlu0
        %v3321 = vpop.trf.xlu0
        %v3322 = vpop.trf.xlu0
        %v3323 = vpop.trf.xlu0
        %v3324 = vpop.trf.xlu0
        %v3325 = vpop.trf.xlu0
        %v3326 = vpop.trf.xlu0
        %v3327 = vpop.trf.xlu0
        %v3328 = vpop.trf.xlu0
        %v3329 = vpop.trf.xlu0
        %v3331 = vsel %vm1148, %v3314, 0
        %3333 = vmatpush.msra.mxu0 0.0
        %3334 = vmatpush.msra.mxu0 0.0
        %3335 = vmatpush.msra.mxu0 0.0
        %3336 = vmatpush.msra.mxu0 0.0
        %3337 = vmatpush.msra.mxu0 0.0
        %3338 = vmatpush.msra.mxu0 0.0
        %3339 = vmatpush.msra.mxu0 0.0
        %3340 = vmatpush.msra.mxu0 0.0
        %3341 = vmatpush.msra.mxu0 0.0
        %3342 = vmatpush.msra.mxu0 0.0
        %3343 = vmatpush.msra.mxu0 0.0
        %3344 = vmatpush.msra.mxu0 0.0
        %3345 = vmatpush.msra.mxu0 0.0
        %3346 = vmatpush.msra.mxu0 0.0
        %3347 = vmatpush.msra.mxu0 0.0
        %3348 = vmatpush.msra.mxu0 %v3060
        %3349 = vmatmul.f32.gmra.mxu0 %v3331
        %v3350 = vpop.f32.mrf.mxu0
        %v3351 = vadd.f32 0.0, %v3350
        %3352 = vdwg.mxu0
        %v3353 = vmul.f32 %v3351, 0.35355338
        %v3354 = vsel %vm1148, %v3353, -inf
        %3355 = vmax.xlane.f32.xlu0 %v3354
        %v3356 = vpop.xlane.xlu0 %3355
        %v3357 = vsub.f32 %v3353, %v3356
        %v3358 = vmul.f32 %v3357, 1.442695
        %v3359 = vpow.pop %v3358
        %v3360 = vsel %vm1148, %v3359, 0.0
        %3361 = vadd.xlane.f32.xlu0 %v3360
        %v3362 = vpop.xlane.xlu0 %3361
        %v3363 = vrcp.pop %v3362
        %v3364 = vmul.f32 %v3362, %v3363
        %v3365 = vsub.f32 1.0, %v3364
        %v3366 = vmul.f32 %v3363, %v3365
        %v3367 = vadd.f32 %v3363, %v3366
        %vm3368 = vweird.f32 %v3362
        %vm3369 = vweird.f32 %v3363
        %vm3370 = vmor %vm3368, %vm3369
        %v3371 = vsel %vm3370, %v3363, %v3367
        %v3372 = vand.u32 2147483647, %v3362
        %vm3373 = vcmp.eq.f32.partialorder %v3372, 8.507059e+37
        %v3374 = vand.u32 %v3362, 2147483648
        %v3375 = vor.u32 1.1754944e-38, %v3374
        %v3376 = vsel %vm3373, %v3375, %v3371
        %v3377 = vmul.f32 %v3359, %v3376
        %s3378 = scalar_lea.vmem %s487, 48 [#allocation3]
        %3379 = vst.msk [vmem:[%s3378] sm:$0xff] %vm1148, %v3377
        %v3381 = vsel %vm1148, %v3181, 0
        %v3384 = vsel %vm1148, %v3377, 0
        %3386 = vmatpush.xpose.msra.mxu0 0.0
        %3387 = vmatpush.xpose.msra.mxu0 0.0
        %3388 = vmatpush.xpose.msra.mxu0 0.0
        %3389 = vmatpush.xpose.msra.mxu0 0.0
        %3390 = vmatpush.xpose.msra.mxu0 0.0
        %3391 = vmatpush.xpose.msra.mxu0 0.0
        %3392 = vmatpush.xpose.msra.mxu0 0.0
        %3393 = vmatpush.xpose.msra.mxu0 0.0
        %3394 = vmatpush.xpose.msra.mxu0 0.0
        %3395 = vmatpush.xpose.msra.mxu0 0.0
        %3396 = vmatpush.xpose.msra.mxu0 0.0
        %3397 = vmatpush.xpose.msra.mxu0 0.0
        %3398 = vmatpush.xpose.msra.mxu0 0.0
        %3399 = vmatpush.xpose.msra.mxu0 0.0
        %3400 = vmatpush.xpose.msra.mxu0 0.0
        %3401 = vmatpush.xpose.msra.mxu0 %v3384
        %3402 = vmatmul.f32.gmra.mxu0 %v3381
        %v3403 = vpop.f32.mrf.mxu0
        %v3404 = vadd.f32 0.0, %v3403
        %3405 = vdwg.mxu0
        %3406 = vst.msk [vmem:[#allocation2 + $0x8] sm:$0xff] %vm1148, %v3404
        %3407 = vxpose.xlu0.b32.start [1/16] %v2942, 128
        %3408 = vxpose.xlu0.b32.cont [2/16] 0.0, 128
        %3409 = vxpose.xlu0.b32.cont [3/16] 0.0, 128
        %3410 = vxpose.xlu0.b32.cont [4/16] 0.0, 128
        %3411 = vxpose.xlu0.b32.cont [5/16] 0.0, 128
        %3412 = vxpose.xlu0.b32.cont [6/16] 0.0, 128
        %3413 = vxpose.xlu0.b32.cont [7/16] 0.0, 128
        %3414 = vxpose.xlu0.b32.cont [8/16] 0.0, 128
        %3415 = vxpose.xlu0.b32.cont [9/16] 0.0, 128
        %3416 = vxpose.xlu0.b32.cont [10/16] 0.0, 128
        %3417 = vxpose.xlu0.b32.cont [11/16] 0.0, 128
        %3418 = vxpose.xlu0.b32.cont [12/16] 0.0, 128
        %3419 = vxpose.xlu0.b32.cont [13/16] 0.0, 128
        %3420 = vxpose.xlu0.b32.cont [14/16] 0.0, 128
        %3421 = vxpose.xlu0.b32.cont [15/16] 0.0, 128
        %3422 = vxpose.xlu0.b32.end [16/16] 0.0, 128
        %v3423 = vpop.trf.xlu0
        %v3424 = vpop.trf.xlu0
        %v3425 = vpop.trf.xlu0
        %v3426 = vpop.trf.xlu0
        %v3427 = vpop.trf.xlu0
        %v3428 = vpop.trf.xlu0
        %v3429 = vpop.trf.xlu0
        %v3430 = vpop.trf.xlu0
        %v3431 = vpop.trf.xlu0
        %v3432 = vpop.trf.xlu0
        %v3433 = vpop.trf.xlu0
        %v3434 = vpop.trf.xlu0
        %v3435 = vpop.trf.xlu0
        %v3436 = vpop.trf.xlu0
        %v3437 = vpop.trf.xlu0
        %v3438 = vpop.trf.xlu0
        %v3440 = vsel %vm1148, %v3423, 0
        %3442 = vmatpush.msra.mxu0 0.0
        %3443 = vmatpush.msra.mxu0 0.0
        %3444 = vmatpush.msra.mxu0 0.0
        %3445 = vmatpush.msra.mxu0 0.0
        %3446 = vmatpush.msra.mxu0 0.0
        %3447 = vmatpush.msra.mxu0 0.0
        %3448 = vmatpush.msra.mxu0 0.0
        %3449 = vmatpush.msra.mxu0 0.0
        %3450 = vmatpush.msra.mxu0 0.0
        %3451 = vmatpush.msra.mxu0 0.0
        %3452 = vmatpush.msra.mxu0 0.0
        %3453 = vmatpush.msra.mxu0 0.0
        %3454 = vmatpush.msra.mxu0 0.0
        %3455 = vmatpush.msra.mxu0 0.0
        %3456 = vmatpush.msra.mxu0 0.0
        %3457 = vmatpush.msra.mxu0 %v3063
        %3458 = vmatmul.f32.gmra.mxu0 %v3440
        %v3459 = vpop.f32.mrf.mxu0
        %v3460 = vadd.f32 0.0, %v3459
        %3461 = vdwg.mxu0
        %v3462 = vmul.f32 %v3460, 0.35355338
        %v3463 = vsel %vm1148, %v3462, -inf
        %3464 = vmax.xlane.f32.xlu0 %v3463
        %v3465 = vpop.xlane.xlu0 %3464
        %v3466 = vsub.f32 %v3462, %v3465
        %v3467 = vmul.f32 %v3466, 1.442695
        %v3468 = vpow.pop %v3467
        %v3469 = vsel %vm1148, %v3468, 0.0
        %3470 = vadd.xlane.f32.xlu0 %v3469
        %v3471 = vpop.xlane.xlu0 %3470
        %v3472 = vrcp.pop %v3471
        %v3473 = vmul.f32 %v3471, %v3472
        %v3474 = vsub.f32 1.0, %v3473
        %v3475 = vmul.f32 %v3472, %v3474
        %v3476 = vadd.f32 %v3472, %v3475
        %vm3477 = vweird.f32 %v3471
        %vm3478 = vweird.f32 %v3472
        %vm3479 = vmor %vm3477, %vm3478
        %v3480 = vsel %vm3479, %v3472, %v3476
        %v3481 = vand.u32 2147483647, %v3471
        %vm3482 = vcmp.eq.f32.partialorder %v3481, 8.507059e+37
        %v3483 = vand.u32 %v3471, 2147483648
        %v3484 = vor.u32 1.1754944e-38, %v3483
        %v3485 = vsel %vm3482, %v3484, %v3480
        %v3486 = vmul.f32 %v3468, %v3485
        %s3487 = scalar_lea.vmem %s487, 80 [#allocation3]
        %3488 = vst.msk [vmem:[%s3487] sm:$0xff] %vm1148, %v3486
        %v3490 = vsel %vm1148, %v3184, 0
        %v3493 = vsel %vm1148, %v3486, 0
        %3495 = vmatpush.xpose.msra.mxu0 0.0
        %3496 = vmatpush.xpose.msra.mxu0 0.0
        %3497 = vmatpush.xpose.msra.mxu0 0.0
        %3498 = vmatpush.xpose.msra.mxu0 0.0
        %3499 = vmatpush.xpose.msra.mxu0 0.0
        %3500 = vmatpush.xpose.msra.mxu0 0.0
        %3501 = vmatpush.xpose.msra.mxu0 0.0
        %3502 = vmatpush.xpose.msra.mxu0 0.0
        %3503 = vmatpush.xpose.msra.mxu0 0.0
        %3504 = vmatpush.xpose.msra.mxu0 0.0
        %3505 = vmatpush.xpose.msra.mxu0 0.0
        %3506 = vmatpush.xpose.msra.mxu0 0.0
        %3507 = vmatpush.xpose.msra.mxu0 0.0
        %3508 = vmatpush.xpose.msra.mxu0 0.0
        %3509 = vmatpush.xpose.msra.mxu0 0.0
        %3510 = vmatpush.xpose.msra.mxu0 %v3493
        %3511 = vmatmul.f32.gmra.mxu0 %v3490
        %v3512 = vpop.f32.mrf.mxu0
        %v3513 = vadd.f32 0.0, %v3512
        %3514 = vdwg.mxu0
        %3515 = vst.msk [vmem:[#allocation2 + $0x10] sm:$0xff] %vm1148, %v3513
        %3516 = vxpose.xlu0.b32.start [1/16] %v2945, 128
        %3517 = vxpose.xlu0.b32.cont [2/16] 0.0, 128
        %3518 = vxpose.xlu0.b32.cont [3/16] 0.0, 128
        %3519 = vxpose.xlu0.b32.cont [4/16] 0.0, 128
        %3520 = vxpose.xlu0.b32.cont [5/16] 0.0, 128
        %3521 = vxpose.xlu0.b32.cont [6/16] 0.0, 128
        %3522 = vxpose.xlu0.b32.cont [7/16] 0.0, 128
        %3523 = vxpose.xlu0.b32.cont [8/16] 0.0, 128
        %3524 = vxpose.xlu0.b32.cont [9/16] 0.0, 128
        %3525 = vxpose.xlu0.b32.cont [10/16] 0.0, 128
        %3526 = vxpose.xlu0.b32.cont [11/16] 0.0, 128
        %3527 = vxpose.xlu0.b32.cont [12/16] 0.0, 128
        %3528 = vxpose.xlu0.b32.cont [13/16] 0.0, 128
        %3529 = vxpose.xlu0.b32.cont [14/16] 0.0, 128
        %3530 = vxpose.xlu0.b32.cont [15/16] 0.0, 128
        %3531 = vxpose.xlu0.b32.end [16/16] 0.0, 128
        %v3532 = vpop.trf.xlu0
        %v3533 = vpop.trf.xlu0
        %v3534 = vpop.trf.xlu0
        %v3535 = vpop.trf.xlu0
        %v3536 = vpop.trf.xlu0
        %v3537 = vpop.trf.xlu0
        %v3538 = vpop.trf.xlu0
        %v3539 = vpop.trf.xlu0
        %v3540 = vpop.trf.xlu0
        %v3541 = vpop.trf.xlu0
        %v3542 = vpop.trf.xlu0
        %v3543 = vpop.trf.xlu0
        %v3544 = vpop.trf.xlu0
        %v3545 = vpop.trf.xlu0
        %v3546 = vpop.trf.xlu0
        %v3547 = vpop.trf.xlu0
        %v3549 = vsel %vm1148, %v3532, 0
        %3551 = vmatpush.msra.mxu0 0.0
        %3552 = vmatpush.msra.mxu0 0.0
        %3553 = vmatpush.msra.mxu0 0.0
        %3554 = vmatpush.msra.mxu0 0.0
        %3555 = vmatpush.msra.mxu0 0.0
        %3556 = vmatpush.msra.mxu0 0.0
        %3557 = vmatpush.msra.mxu0 0.0
        %3558 = vmatpush.msra.mxu0 0.0
        %3559 = vmatpush.msra.mxu0 0.0
        %3560 = vmatpush.msra.mxu0 0.0
        %3561 = vmatpush.msra.mxu0 0.0
        %3562 = vmatpush.msra.mxu0 0.0
        %3563 = vmatpush.msra.mxu0 0.0
        %3564 = vmatpush.msra.mxu0 0.0
        %3565 = vmatpush.msra.mxu0 0.0
        %3566 = vmatpush.msra.mxu0 %v3066
        %3567 = vmatmul.f32.gmra.mxu0 %v3549
        %v3568 = vpop.f32.mrf.mxu0
        %v3569 = vadd.f32 0.0, %v3568
        %3570 = vdwg.mxu0
        %v3571 = vmul.f32 %v3569, 0.35355338
        %v3572 = vsel %vm1148, %v3571, -inf
        %3573 = vmax.xlane.f32.xlu0 %v3572
        %v3574 = vpop.xlane.xlu0 %3573
        %v3575 = vsub.f32 %v3571, %v3574
        %v3576 = vmul.f32 %v3575, 1.442695
        %v3577 = vpow.pop %v3576
        %v3578 = vsel %vm1148, %v3577, 0.0
        %3579 = vadd.xlane.f32.xlu0 %v3578
        %v3580 = vpop.xlane.xlu0 %3579
        %v3581 = vrcp.pop %v3580
        %v3582 = vmul.f32 %v3580, %v3581
        %v3583 = vsub.f32 1.0, %v3582
        %v3584 = vmul.f32 %v3581, %v3583
        %v3585 = vadd.f32 %v3581, %v3584
        %vm3586 = vweird.f32 %v3580
        %vm3587 = vweird.f32 %v3581
        %vm3588 = vmor %vm3586, %vm3587
        %v3589 = vsel %vm3588, %v3581, %v3585
        %v3590 = vand.u32 2147483647, %v3580
        %vm3591 = vcmp.eq.f32.partialorder %v3590, 8.507059e+37
        %v3592 = vand.u32 %v3580, 2147483648
        %v3593 = vor.u32 1.1754944e-38, %v3592
        %v3594 = vsel %vm3591, %v3593, %v3589
        %v3595 = vmul.f32 %v3577, %v3594
        %s3596 = scalar_lea.vmem %s487, 112 [#allocation3]
        %3597 = vst.msk [vmem:[%s3596] sm:$0xff] %vm1148, %v3595
        %v3599 = vsel %vm1148, %v3187, 0
        %v3602 = vsel %vm1148, %v3595, 0
        %3604 = vmatpush.xpose.msra.mxu0 0.0
        %3605 = vmatpush.xpose.msra.mxu0 0.0
        %3606 = vmatpush.xpose.msra.mxu0 0.0
        %3607 = vmatpush.xpose.msra.mxu0 0.0
        %3608 = vmatpush.xpose.msra.mxu0 0.0
        %3609 = vmatpush.xpose.msra.mxu0 0.0
        %3610 = vmatpush.xpose.msra.mxu0 0.0
        %3611 = vmatpush.xpose.msra.mxu0 0.0
        %3612 = vmatpush.xpose.msra.mxu0 0.0
        %3613 = vmatpush.xpose.msra.mxu0 0.0
        %3614 = vmatpush.xpose.msra.mxu0 0.0
        %3615 = vmatpush.xpose.msra.mxu0 0.0
        %3616 = vmatpush.xpose.msra.mxu0 0.0
        %3617 = vmatpush.xpose.msra.mxu0 0.0
        %3618 = vmatpush.xpose.msra.mxu0 0.0
        %3619 = vmatpush.xpose.msra.mxu0 %v3602
        %3620 = vmatmul.f32.gmra.mxu0 %v3599
        %v3621 = vpop.f32.mrf.mxu0
        %v3622 = vadd.f32 0.0, %v3621
        %3623 = vdwg.mxu0
        %3624 = vst.msk [vmem:[#allocation2 + $0x18] sm:$0xff] %vm1148, %v3622
        %v3625 = vld [vmem:[#allocation2] sm:$0xff]
        %v3626 = vld [vmem:[#allocation2 + $0x8] sm:$0xff]
        %v3627 = vld [vmem:[#allocation2 + $0x10] sm:$0xff]
        %v3628 = vld [vmem:[#allocation2 + $0x18] sm:$0xff]
        %3629 = vmatpush.msra.mxu0 0.0
        %3630 = vmatpush.msra.mxu0 0.0
        %3631 = vmatpush.msra.mxu0 0.0
        %3632 = vmatpush.msra.mxu0 0.0
        %3633 = vmatpush.msra.mxu0 0.0
        %3634 = vmatpush.msra.mxu0 0.0
        %3635 = vmatpush.msra.mxu0 0.0
        %3636 = vmatpush.msra.mxu0 0.0
        %3637 = vmatpush.msra.mxu0 0.0
        %3638 = vmatpush.msra.mxu0 0.0
        %3639 = vmatpush.msra.mxu0 0.0
        %3640 = vmatpush.msra.mxu0 0.0
        %3641 = vmatpush.msra.mxu0 %v3628
        %3642 = vmatpush.msra.mxu0 %v3627
        %3643 = vmatpush.msra.mxu0 %v3626
        %3644 = vmatpush.msra.mxu0 %v3625
        %3645 = vmatmul.f32.gmra.mxu0 %v1577
        %v3646 = vpop.f32.mrf.mxu0
        %v3647 = vadd.f32 %v1559, %v3646
        %3648 = vmatmul.f32.gmra.mxu0 %v1580
        %v3649 = vpop.f32.mrf.mxu0
        %v3650 = vadd.f32 %v1564, %v3649
        %3651 = vmatmul.f32.gmra.mxu0 %v1583
        %v3652 = vpop.f32.mrf.mxu0
        %v3653 = vadd.f32 %v1569, %v3652
        %3654 = vmatmul.f32.gmra.mxu0 %v1586
        %v3655 = vpop.f32.mrf.mxu0
        %v3656 = vadd.f32 %v1574, %v3655
        %3657 = vdwg.mxu0
        %v3662 = vrot.slane %v3647, 1
        %v3663 = vrot.slane %v3647, 2
        %v3664 = vrot.slane %v3647, 3
        %v3665 = vrot.slane %v3647, 4
        %v3666 = vrot.slane %v3647, 5
        %v3667 = vrot.slane %v3647, 6
        %v3668 = vrot.slane %v3647, 7
        %v3669 = vrot.slane %v3650, 1
        %v3670 = vrot.slane %v3650, 2
        %v3671 = vrot.slane %v3650, 3
        %v3672 = vrot.slane %v3650, 4
        %v3673 = vrot.slane %v3650, 5
        %v3674 = vrot.slane %v3650, 6
        %v3675 = vrot.slane %v3650, 7
        %v3676 = vrot.slane %v3653, 1
        %v3677 = vrot.slane %v3653, 2
        %v3678 = vrot.slane %v3653, 3
        %v3679 = vrot.slane %v3653, 4
        %v3680 = vrot.slane %v3653, 5
        %v3681 = vrot.slane %v3653, 6
        %v3682 = vrot.slane %v3653, 7
        %v3683 = vrot.slane %v3656, 1
        %v3684 = vrot.slane %v3656, 2
        %v3685 = vrot.slane %v3656, 3
        %v3686 = vrot.slane %v3656, 4
        %v3687 = vrot.slane %v3656, 5
        %v3688 = vrot.slane %v3656, 6
        %v3689 = vrot.slane %v3656, 7
        %3718 = vst.msk [vmem:[%s519 + $0x2] sm:$0x1] %vm1677, %v3647
        %3719 = vst.msk [vmem:[%s519 + $0x6] sm:$0x1] %vm1677, %v3662
        %3720 = vst.msk [vmem:[%s519 + $0xa] sm:$0x1] %vm1677, %v3663
        %3721 = vst.msk [vmem:[%s519 + $0xe] sm:$0x1] %vm1677, %v3664
        %3722 = vst.msk [vmem:[%s519 + $0x12] sm:$0x1] %vm1677, %v3665
        %3723 = vst.msk [vmem:[%s519 + $0x16] sm:$0x1] %vm1677, %v3666
        %3724 = vst.msk [vmem:[%s519 + $0x1a] sm:$0x1] %vm1677, %v3667
        %3725 = vst.msk [vmem:[%s519 + $0x1e] sm:$0x1] %vm1677, %v3668
        %3726 = vst.msk [vmem:[%s519 + $0x22] sm:$0x1] %vm1677, %v3650
        %3727 = vst.msk [vmem:[%s519 + $0x26] sm:$0x1] %vm1677, %v3669
        %3728 = vst.msk [vmem:[%s519 + $0x2a] sm:$0x1] %vm1677, %v3670
        %3729 = vst.msk [vmem:[%s519 + $0x2e] sm:$0x1] %vm1677, %v3671
        %3730 = vst.msk [vmem:[%s519 + $0x32] sm:$0x1] %vm1677, %v3672
        %3731 = vst.msk [vmem:[%s519 + $0x36] sm:$0x1] %vm1677, %v3673
        %3732 = vst.msk [vmem:[%s519 + $0x3a] sm:$0x1] %vm1677, %v3674
        %3733 = vst.msk [vmem:[%s519 + $0x3e] sm:$0x1] %vm1677, %v3675
        %3734 = vst.msk [vmem:[%s519 + $0x42] sm:$0x1] %vm1677, %v3653
        %3735 = vst.msk [vmem:[%s519 + $0x46] sm:$0x1] %vm1677, %v3676
        %3736 = vst.msk [vmem:[%s519 + $0x4a] sm:$0x1] %vm1677, %v3677
        %3737 = vst.msk [vmem:[%s519 + $0x4e] sm:$0x1] %vm1677, %v3678
        %3738 = vst.msk [vmem:[%s519 + $0x52] sm:$0x1] %vm1677, %v3679
        %3739 = vst.msk [vmem:[%s519 + $0x56] sm:$0x1] %vm1677, %v3680
        %3740 = vst.msk [vmem:[%s519 + $0x5a] sm:$0x1] %vm1677, %v3681
        %3741 = vst.msk [vmem:[%s519 + $0x5e] sm:$0x1] %vm1677, %v3682
        %3742 = vst.msk [vmem:[%s519 + $0x62] sm:$0x1] %vm1677, %v3656
        %3743 = vst.msk [vmem:[%s519 + $0x66] sm:$0x1] %vm1677, %v3683
        %3744 = vst.msk [vmem:[%s519 + $0x6a] sm:$0x1] %vm1677, %v3684
        %3745 = vst.msk [vmem:[%s519 + $0x6e] sm:$0x1] %vm1677, %v3685
        %3746 = vst.msk [vmem:[%s519 + $0x72] sm:$0x1] %vm1677, %v3686
        %3747 = vst.msk [vmem:[%s519 + $0x76] sm:$0x1] %vm1677, %v3687
        %3748 = vst.msk [vmem:[%s519 + $0x7a] sm:$0x1] %vm1677, %v3688
        %3749 = vst.msk [vmem:[%s519 + $0x7e] sm:$0x1] %vm1677, %v3689
        %v3750 = vld [vmem:[%s495 + $0x3] sm:$0x1]
        %v3751 = vld [vmem:[%s495 + $0x7] sm:$0x1]
        %v3752 = vld [vmem:[%s495 + $0xb] sm:$0x1]
        %v3753 = vld [vmem:[%s495 + $0xf] sm:$0x1]
        %v3754 = vld [vmem:[%s495 + $0x13] sm:$0x1]
        %v3755 = vld [vmem:[%s495 + $0x17] sm:$0x1]
        %v3756 = vld [vmem:[%s495 + $0x1b] sm:$0x1]
        %v3757 = vld [vmem:[%s495 + $0x1f] sm:$0x1]
        %v3758 = vld [vmem:[%s495 + $0x23] sm:$0x1]
        %v3759 = vld [vmem:[%s495 + $0x27] sm:$0x1]
        %v3760 = vld [vmem:[%s495 + $0x2b] sm:$0x1]
        %v3761 = vld [vmem:[%s495 + $0x2f] sm:$0x1]
        %v3762 = vld [vmem:[%s495 + $0x33] sm:$0x1]
        %v3763 = vld [vmem:[%s495 + $0x37] sm:$0x1]
        %v3764 = vld [vmem:[%s495 + $0x3b] sm:$0x1]
        %v3765 = vld [vmem:[%s495 + $0x3f] sm:$0x1]
        %v3766 = vld [vmem:[%s495 + $0x43] sm:$0x1]
        %v3767 = vld [vmem:[%s495 + $0x47] sm:$0x1]
        %v3768 = vld [vmem:[%s495 + $0x4b] sm:$0x1]
        %v3769 = vld [vmem:[%s495 + $0x4f] sm:$0x1]
        %v3770 = vld [vmem:[%s495 + $0x53] sm:$0x1]
        %v3771 = vld [vmem:[%s495 + $0x57] sm:$0x1]
        %v3772 = vld [vmem:[%s495 + $0x5b] sm:$0x1]
        %v3773 = vld [vmem:[%s495 + $0x5f] sm:$0x1]
        %v3774 = vld [vmem:[%s495 + $0x63] sm:$0x1]
        %v3775 = vld [vmem:[%s495 + $0x67] sm:$0x1]
        %v3776 = vld [vmem:[%s495 + $0x6b] sm:$0x1]
        %v3777 = vld [vmem:[%s495 + $0x6f] sm:$0x1]
        %v3778 = vld [vmem:[%s495 + $0x73] sm:$0x1]
        %v3779 = vld [vmem:[%s495 + $0x77] sm:$0x1]
        %v3780 = vld [vmem:[%s495 + $0x7b] sm:$0x1]
        %v3781 = vld [vmem:[%s495 + $0x7f] sm:$0x1]
        %v3782 = vld [vmem:[%s503 + $0x3] sm:$0x1]
        %v3783 = vld [vmem:[%s503 + $0x7] sm:$0x1]
        %v3784 = vld [vmem:[%s503 + $0xb] sm:$0x1]
        %v3785 = vld [vmem:[%s503 + $0xf] sm:$0x1]
        %v3786 = vld [vmem:[%s503 + $0x13] sm:$0x1]
        %v3787 = vld [vmem:[%s503 + $0x17] sm:$0x1]
        %v3788 = vld [vmem:[%s503 + $0x1b] sm:$0x1]
        %v3789 = vld [vmem:[%s503 + $0x1f] sm:$0x1]
        %v3790 = vld [vmem:[%s503 + $0x23] sm:$0x1]
        %v3791 = vld [vmem:[%s503 + $0x27] sm:$0x1]
        %v3792 = vld [vmem:[%s503 + $0x2b] sm:$0x1]
        %v3793 = vld [vmem:[%s503 + $0x2f] sm:$0x1]
        %v3794 = vld [vmem:[%s503 + $0x33] sm:$0x1]
        %v3795 = vld [vmem:[%s503 + $0x37] sm:$0x1]
        %v3796 = vld [vmem:[%s503 + $0x3b] sm:$0x1]
        %v3797 = vld [vmem:[%s503 + $0x3f] sm:$0x1]
        %v3798 = vld [vmem:[%s503 + $0x43] sm:$0x1]
        %v3799 = vld [vmem:[%s503 + $0x47] sm:$0x1]
        %v3800 = vld [vmem:[%s503 + $0x4b] sm:$0x1]
        %v3801 = vld [vmem:[%s503 + $0x4f] sm:$0x1]
        %v3802 = vld [vmem:[%s503 + $0x53] sm:$0x1]
        %v3803 = vld [vmem:[%s503 + $0x57] sm:$0x1]
        %v3804 = vld [vmem:[%s503 + $0x5b] sm:$0x1]
        %v3805 = vld [vmem:[%s503 + $0x5f] sm:$0x1]
        %v3806 = vld [vmem:[%s503 + $0x63] sm:$0x1]
        %v3807 = vld [vmem:[%s503 + $0x67] sm:$0x1]
        %v3808 = vld [vmem:[%s503 + $0x6b] sm:$0x1]
        %v3809 = vld [vmem:[%s503 + $0x6f] sm:$0x1]
        %v3810 = vld [vmem:[%s503 + $0x73] sm:$0x1]
        %v3811 = vld [vmem:[%s503 + $0x77] sm:$0x1]
        %v3812 = vld [vmem:[%s503 + $0x7b] sm:$0x1]
        %v3813 = vld [vmem:[%s503 + $0x7f] sm:$0x1]
        %v3814 = vld [vmem:[%s511 + $0x3] sm:$0x1]
        %v3815 = vld [vmem:[%s511 + $0x7] sm:$0x1]
        %v3816 = vld [vmem:[%s511 + $0xb] sm:$0x1]
        %v3817 = vld [vmem:[%s511 + $0xf] sm:$0x1]
        %v3818 = vld [vmem:[%s511 + $0x13] sm:$0x1]
        %v3819 = vld [vmem:[%s511 + $0x17] sm:$0x1]
        %v3820 = vld [vmem:[%s511 + $0x1b] sm:$0x1]
        %v3821 = vld [vmem:[%s511 + $0x1f] sm:$0x1]
        %v3822 = vld [vmem:[%s511 + $0x23] sm:$0x1]
        %v3823 = vld [vmem:[%s511 + $0x27] sm:$0x1]
        %v3824 = vld [vmem:[%s511 + $0x2b] sm:$0x1]
        %v3825 = vld [vmem:[%s511 + $0x2f] sm:$0x1]
        %v3826 = vld [vmem:[%s511 + $0x33] sm:$0x1]
        %v3827 = vld [vmem:[%s511 + $0x37] sm:$0x1]
        %v3828 = vld [vmem:[%s511 + $0x3b] sm:$0x1]
        %v3829 = vld [vmem:[%s511 + $0x3f] sm:$0x1]
        %v3830 = vld [vmem:[%s511 + $0x43] sm:$0x1]
        %v3831 = vld [vmem:[%s511 + $0x47] sm:$0x1]
        %v3832 = vld [vmem:[%s511 + $0x4b] sm:$0x1]
        %v3833 = vld [vmem:[%s511 + $0x4f] sm:$0x1]
        %v3834 = vld [vmem:[%s511 + $0x53] sm:$0x1]
        %v3835 = vld [vmem:[%s511 + $0x57] sm:$0x1]
        %v3836 = vld [vmem:[%s511 + $0x5b] sm:$0x1]
        %v3837 = vld [vmem:[%s511 + $0x5f] sm:$0x1]
        %v3838 = vld [vmem:[%s511 + $0x63] sm:$0x1]
        %v3839 = vld [vmem:[%s511 + $0x67] sm:$0x1]
        %v3840 = vld [vmem:[%s511 + $0x6b] sm:$0x1]
        %v3841 = vld [vmem:[%s511 + $0x6f] sm:$0x1]
        %v3842 = vld [vmem:[%s511 + $0x73] sm:$0x1]
        %v3843 = vld [vmem:[%s511 + $0x77] sm:$0x1]
        %v3844 = vld [vmem:[%s511 + $0x7b] sm:$0x1]
        %v3845 = vld [vmem:[%s511 + $0x7f] sm:$0x1]
        %v3878 = vrot.slane %v3751, 7
        %v3879 = vsel %vm702, %v3878, %v3750
        %v3880 = vrot.slane %v3752, 6
        %v3881 = vsel %vm705, %v3880, %v3879
        %v3882 = vrot.slane %v3753, 5
        %v3883 = vsel %vm708, %v3882, %v3881
        %v3884 = vrot.slane %v3754, 4
        %v3885 = vsel %vm711, %v3884, %v3883
        %v3886 = vrot.slane %v3755, 3
        %v3887 = vsel %vm714, %v3886, %v3885
        %v3888 = vrot.slane %v3756, 2
        %v3889 = vsel %vm717, %v3888, %v3887
        %v3890 = vrot.slane %v3757, 1
        %v3891 = vsel %vm720, %v3890, %v3889
        %v3892 = vrot.slane %v3759, 7
        %v3893 = vsel %vm702, %v3892, %v3758
        %v3894 = vrot.slane %v3760, 6
        %v3895 = vsel %vm705, %v3894, %v3893
        %v3896 = vrot.slane %v3761, 5
        %v3897 = vsel %vm708, %v3896, %v3895
        %v3898 = vrot.slane %v3762, 4
        %v3899 = vsel %vm711, %v3898, %v3897
        %v3900 = vrot.slane %v3763, 3
        %v3901 = vsel %vm714, %v3900, %v3899
        %v3902 = vrot.slane %v3764, 2
        %v3903 = vsel %vm717, %v3902, %v3901
        %v3904 = vrot.slane %v3765, 1
        %v3905 = vsel %vm720, %v3904, %v3903
        %v3906 = vrot.slane %v3767, 7
        %v3907 = vsel %vm702, %v3906, %v3766
        %v3908 = vrot.slane %v3768, 6
        %v3909 = vsel %vm705, %v3908, %v3907
        %v3910 = vrot.slane %v3769, 5
        %v3911 = vsel %vm708, %v3910, %v3909
        %v3912 = vrot.slane %v3770, 4
        %v3913 = vsel %vm711, %v3912, %v3911
        %v3914 = vrot.slane %v3771, 3
        %v3915 = vsel %vm714, %v3914, %v3913
        %v3916 = vrot.slane %v3772, 2
        %v3917 = vsel %vm717, %v3916, %v3915
        %v3918 = vrot.slane %v3773, 1
        %v3919 = vsel %vm720, %v3918, %v3917
        %v3920 = vrot.slane %v3775, 7
        %v3921 = vsel %vm702, %v3920, %v3774
        %v3922 = vrot.slane %v3776, 6
        %v3923 = vsel %vm705, %v3922, %v3921
        %v3924 = vrot.slane %v3777, 5
        %v3925 = vsel %vm708, %v3924, %v3923
        %v3926 = vrot.slane %v3778, 4
        %v3927 = vsel %vm711, %v3926, %v3925
        %v3928 = vrot.slane %v3779, 3
        %v3929 = vsel %vm714, %v3928, %v3927
        %v3930 = vrot.slane %v3780, 2
        %v3931 = vsel %vm717, %v3930, %v3929
        %v3932 = vrot.slane %v3781, 1
        %v3933 = vsel %vm720, %v3932, %v3931
        %3938 = vmatpush.msra.mxu0 0.0
        %3939 = vmatpush.msra.mxu0 0.0
        %3940 = vmatpush.msra.mxu0 0.0
        %3941 = vmatpush.msra.mxu0 0.0
        %3942 = vmatpush.msra.mxu0 0.0
        %3943 = vmatpush.msra.mxu0 0.0
        %3944 = vmatpush.msra.mxu0 0.0
        %3945 = vmatpush.msra.mxu0 0.0
        %3946 = vmatpush.msra.mxu0 0.0
        %3947 = vmatpush.msra.mxu0 0.0
        %3948 = vmatpush.msra.mxu0 0.0
        %3949 = vmatpush.msra.mxu0 0.0
        %3950 = vmatpush.msra.mxu0 %v3933
        %3951 = vmatpush.msra.mxu0 %v3919
        %3952 = vmatpush.msra.mxu0 %v3905
        %3953 = vmatpush.msra.mxu0 %v3891
        %3954 = vmatmul.f32.gmra.mxu0 %v770
        %v3955 = vpop.f32.mrf.mxu0
        %v3956 = vadd.f32 %v652, %v3955
        %3957 = vmatmul.f32.gmra.mxu0 %v773
        %v3958 = vpop.f32.mrf.mxu0
        %v3959 = vadd.f32 %v657, %v3958
        %3960 = vmatmul.f32.gmra.mxu0 %v776
        %v3961 = vpop.f32.mrf.mxu0
        %v3962 = vadd.f32 %v662, %v3961
        %3963 = vmatmul.f32.gmra.mxu0 %v779
        %v3964 = vpop.f32.mrf.mxu0
        %v3965 = vadd.f32 %v667, %v3964
        %3966 = vdwg.mxu0
        %v3999 = vrot.slane %v3783, 7
        %v4000 = vsel %vm702, %v3999, %v3782
        %v4001 = vrot.slane %v3784, 6
        %v4002 = vsel %vm705, %v4001, %v4000
        %v4003 = vrot.slane %v3785, 5
        %v4004 = vsel %vm708, %v4003, %v4002
        %v4005 = vrot.slane %v3786, 4
        %v4006 = vsel %vm711, %v4005, %v4004
        %v4007 = vrot.slane %v3787, 3
        %v4008 = vsel %vm714, %v4007, %v4006
        %v4009 = vrot.slane %v3788, 2
        %v4010 = vsel %vm717, %v4009, %v4008
        %v4011 = vrot.slane %v3789, 1
        %v4012 = vsel %vm720, %v4011, %v4010
        %v4013 = vrot.slane %v3791, 7
        %v4014 = vsel %vm702, %v4013, %v3790
        %v4015 = vrot.slane %v3792, 6
        %v4016 = vsel %vm705, %v4015, %v4014
        %v4017 = vrot.slane %v3793, 5
        %v4018 = vsel %vm708, %v4017, %v4016
        %v4019 = vrot.slane %v3794, 4
        %v4020 = vsel %vm711, %v4019, %v4018
        %v4021 = vrot.slane %v3795, 3
        %v4022 = vsel %vm714, %v4021, %v4020
        %v4023 = vrot.slane %v3796, 2
        %v4024 = vsel %vm717, %v4023, %v4022
        %v4025 = vrot.slane %v3797, 1
        %v4026 = vsel %vm720, %v4025, %v4024
        %v4027 = vrot.slane %v3799, 7
        %v4028 = vsel %vm702, %v4027, %v3798
        %v4029 = vrot.slane %v3800, 6
        %v4030 = vsel %vm705, %v4029, %v4028
        %v4031 = vrot.slane %v3801, 5
        %v4032 = vsel %vm708, %v4031, %v4030
        %v4033 = vrot.slane %v3802, 4
        %v4034 = vsel %vm711, %v4033, %v4032
        %v4035 = vrot.slane %v3803, 3
        %v4036 = vsel %vm714, %v4035, %v4034
        %v4037 = vrot.slane %v3804, 2
        %v4038 = vsel %vm717, %v4037, %v4036
        %v4039 = vrot.slane %v3805, 1
        %v4040 = vsel %vm720, %v4039, %v4038
        %v4041 = vrot.slane %v3807, 7
        %v4042 = vsel %vm702, %v4041, %v3806
        %v4043 = vrot.slane %v3808, 6
        %v4044 = vsel %vm705, %v4043, %v4042
        %v4045 = vrot.slane %v3809, 5
        %v4046 = vsel %vm708, %v4045, %v4044
        %v4047 = vrot.slane %v3810, 4
        %v4048 = vsel %vm711, %v4047, %v4046
        %v4049 = vrot.slane %v3811, 3
        %v4050 = vsel %vm714, %v4049, %v4048
        %v4051 = vrot.slane %v3812, 2
        %v4052 = vsel %vm717, %v4051, %v4050
        %v4053 = vrot.slane %v3813, 1
        %v4054 = vsel %vm720, %v4053, %v4052
        %4059 = vmatpush.msra.mxu0 0.0
        %4060 = vmatpush.msra.mxu0 0.0
        %4061 = vmatpush.msra.mxu0 0.0
        %4062 = vmatpush.msra.mxu0 0.0
        %4063 = vmatpush.msra.mxu0 0.0
        %4064 = vmatpush.msra.mxu0 0.0
        %4065 = vmatpush.msra.mxu0 0.0
        %4066 = vmatpush.msra.mxu0 0.0
        %4067 = vmatpush.msra.mxu0 0.0
        %4068 = vmatpush.msra.mxu0 0.0
        %4069 = vmatpush.msra.mxu0 0.0
        %4070 = vmatpush.msra.mxu0 0.0
        %4071 = vmatpush.msra.mxu0 %v4054
        %4072 = vmatpush.msra.mxu0 %v4040
        %4073 = vmatpush.msra.mxu0 %v4026
        %4074 = vmatpush.msra.mxu0 %v4012
        %4075 = vmatmul.f32.gmra.mxu0 %v923
        %v4076 = vpop.f32.mrf.mxu0
        %v4077 = vadd.f32 %v813, %v4076
        %4078 = vmatmul.f32.gmra.mxu0 %v926
        %v4079 = vpop.f32.mrf.mxu0
        %v4080 = vadd.f32 %v818, %v4079
        %4081 = vmatmul.f32.gmra.mxu0 %v929
        %v4082 = vpop.f32.mrf.mxu0
        %v4083 = vadd.f32 %v823, %v4082
        %4084 = vmatmul.f32.gmra.mxu0 %v932
        %v4085 = vpop.f32.mrf.mxu0
        %v4086 = vadd.f32 %v828, %v4085
        %4087 = vdwg.mxu0
        %v4120 = vrot.slane %v3815, 7
        %v4121 = vsel %vm702, %v4120, %v3814
        %v4122 = vrot.slane %v3816, 6
        %v4123 = vsel %vm705, %v4122, %v4121
        %v4124 = vrot.slane %v3817, 5
        %v4125 = vsel %vm708, %v4124, %v4123
        %v4126 = vrot.slane %v3818, 4
        %v4127 = vsel %vm711, %v4126, %v4125
        %v4128 = vrot.slane %v3819, 3
        %v4129 = vsel %vm714, %v4128, %v4127
        %v4130 = vrot.slane %v3820, 2
        %v4131 = vsel %vm717, %v4130, %v4129
        %v4132 = vrot.slane %v3821, 1
        %v4133 = vsel %vm720, %v4132, %v4131
        %v4134 = vrot.slane %v3823, 7
        %v4135 = vsel %vm702, %v4134, %v3822
        %v4136 = vrot.slane %v3824, 6
        %v4137 = vsel %vm705, %v4136, %v4135
        %v4138 = vrot.slane %v3825, 5
        %v4139 = vsel %vm708, %v4138, %v4137
        %v4140 = vrot.slane %v3826, 4
        %v4141 = vsel %vm711, %v4140, %v4139
        %v4142 = vrot.slane %v3827, 3
        %v4143 = vsel %vm714, %v4142, %v4141
        %v4144 = vrot.slane %v3828, 2
        %v4145 = vsel %vm717, %v4144, %v4143
        %v4146 = vrot.slane %v3829, 1
        %v4147 = vsel %vm720, %v4146, %v4145
        %v4148 = vrot.slane %v3831, 7
        %v4149 = vsel %vm702, %v4148, %v3830
        %v4150 = vrot.slane %v3832, 6
        %v4151 = vsel %vm705, %v4150, %v4149
        %v4152 = vrot.slane %v3833, 5
        %v4153 = vsel %vm708, %v4152, %v4151
        %v4154 = vrot.slane %v3834, 4
        %v4155 = vsel %vm711, %v4154, %v4153
        %v4156 = vrot.slane %v3835, 3
        %v4157 = vsel %vm714, %v4156, %v4155
        %v4158 = vrot.slane %v3836, 2
        %v4159 = vsel %vm717, %v4158, %v4157
        %v4160 = vrot.slane %v3837, 1
        %v4161 = vsel %vm720, %v4160, %v4159
        %v4162 = vrot.slane %v3839, 7
        %v4163 = vsel %vm702, %v4162, %v3838
        %v4164 = vrot.slane %v3840, 6
        %v4165 = vsel %vm705, %v4164, %v4163
        %v4166 = vrot.slane %v3841, 5
        %v4167 = vsel %vm708, %v4166, %v4165
        %v4168 = vrot.slane %v3842, 4
        %v4169 = vsel %vm711, %v4168, %v4167
        %v4170 = vrot.slane %v3843, 3
        %v4171 = vsel %vm714, %v4170, %v4169
        %v4172 = vrot.slane %v3844, 2
        %v4173 = vsel %vm717, %v4172, %v4171
        %v4174 = vrot.slane %v3845, 1
        %v4175 = vsel %vm720, %v4174, %v4173
        %4180 = vmatpush.msra.mxu0 0.0
        %4181 = vmatpush.msra.mxu0 0.0
        %4182 = vmatpush.msra.mxu0 0.0
        %4183 = vmatpush.msra.mxu0 0.0
        %4184 = vmatpush.msra.mxu0 0.0
        %4185 = vmatpush.msra.mxu0 0.0
        %4186 = vmatpush.msra.mxu0 0.0
        %4187 = vmatpush.msra.mxu0 0.0
        %4188 = vmatpush.msra.mxu0 0.0
        %4189 = vmatpush.msra.mxu0 0.0
        %4190 = vmatpush.msra.mxu0 0.0
        %4191 = vmatpush.msra.mxu0 0.0
        %4192 = vmatpush.msra.mxu0 %v4175
        %4193 = vmatpush.msra.mxu0 %v4161
        %4194 = vmatpush.msra.mxu0 %v4147
        %4195 = vmatpush.msra.mxu0 %v4133
        %4196 = vmatmul.f32.gmra.mxu0 %v1076
        %v4197 = vpop.f32.mrf.mxu0
        %v4198 = vadd.f32 %v966, %v4197
        %4199 = vmatmul.f32.gmra.mxu0 %v1079
        %v4200 = vpop.f32.mrf.mxu0
        %v4201 = vadd.f32 %v971, %v4200
        %4202 = vmatmul.f32.gmra.mxu0 %v1082
        %v4203 = vpop.f32.mrf.mxu0
        %v4204 = vadd.f32 %v976, %v4203
        %4205 = vmatmul.f32.gmra.mxu0 %v1085
        %v4206 = vpop.f32.mrf.mxu0
        %v4207 = vadd.f32 %v981, %v4206
        %4208 = vdwg.mxu0
        %4209 = vxpose.xlu0.b32.start [1/16] %v3956, 128
        %4210 = vxpose.xlu0.b32.cont [2/16] 0.0, 128
        %4211 = vxpose.xlu0.b32.cont [3/16] 0.0, 128
        %4212 = vxpose.xlu0.b32.cont [4/16] 0.0, 128
        %4213 = vxpose.xlu0.b32.cont [5/16] 0.0, 128
        %4214 = vxpose.xlu0.b32.cont [6/16] 0.0, 128
        %4215 = vxpose.xlu0.b32.cont [7/16] 0.0, 128
        %4216 = vxpose.xlu0.b32.cont [8/16] 0.0, 128
        %4217 = vxpose.xlu0.b32.cont [9/16] 0.0, 128
        %4218 = vxpose.xlu0.b32.cont [10/16] 0.0, 128
        %4219 = vxpose.xlu0.b32.cont [11/16] 0.0, 128
        %4220 = vxpose.xlu0.b32.cont [12/16] 0.0, 128
        %4221 = vxpose.xlu0.b32.cont [13/16] 0.0, 128
        %4222 = vxpose.xlu0.b32.cont [14/16] 0.0, 128
        %4223 = vxpose.xlu0.b32.cont [15/16] 0.0, 128
        %4224 = vxpose.xlu0.b32.end [16/16] 0.0, 128
        %v4225 = vpop.trf.xlu0
        %v4226 = vpop.trf.xlu0
        %v4227 = vpop.trf.xlu0
        %v4228 = vpop.trf.xlu0
        %v4229 = vpop.trf.xlu0
        %v4230 = vpop.trf.xlu0
        %v4231 = vpop.trf.xlu0
        %v4232 = vpop.trf.xlu0
        %v4233 = vpop.trf.xlu0
        %v4234 = vpop.trf.xlu0
        %v4235 = vpop.trf.xlu0
        %v4236 = vpop.trf.xlu0
        %v4237 = vpop.trf.xlu0
        %v4238 = vpop.trf.xlu0
        %v4239 = vpop.trf.xlu0
        %v4240 = vpop.trf.xlu0
        %v4242 = vsel %vm1148, %v4225, 0
        %4244 = vmatpush.msra.mxu0 0.0
        %4245 = vmatpush.msra.mxu0 0.0
        %4246 = vmatpush.msra.mxu0 0.0
        %4247 = vmatpush.msra.mxu0 0.0
        %4248 = vmatpush.msra.mxu0 0.0
        %4249 = vmatpush.msra.mxu0 0.0
        %4250 = vmatpush.msra.mxu0 0.0
        %4251 = vmatpush.msra.mxu0 0.0
        %4252 = vmatpush.msra.mxu0 0.0
        %4253 = vmatpush.msra.mxu0 0.0
        %4254 = vmatpush.msra.mxu0 0.0
        %4255 = vmatpush.msra.mxu0 0.0
        %4256 = vmatpush.msra.mxu0 0.0
        %4257 = vmatpush.msra.mxu0 0.0
        %4258 = vmatpush.msra.mxu0 0.0
        %4259 = vmatpush.msra.mxu0 %v4077
        %4260 = vmatmul.f32.gmra.mxu0 %v4242
        %v4261 = vpop.f32.mrf.mxu0
        %v4262 = vadd.f32 0.0, %v4261
        %4263 = vdwg.mxu0
        %v4264 = vmul.f32 %v4262, 0.35355338
        %v4265 = vsel %vm1148, %v4264, -inf
        %4266 = vmax.xlane.f32.xlu0 %v4265
        %v4267 = vpop.xlane.xlu0 %4266
        %v4268 = vsub.f32 %v4264, %v4267
        %v4269 = vmul.f32 %v4268, 1.442695
        %v4270 = vpow.pop %v4269
        %v4271 = vsel %vm1148, %v4270, 0.0
        %4272 = vadd.xlane.f32.xlu0 %v4271
        %v4273 = vpop.xlane.xlu0 %4272
        %v4274 = vrcp.pop %v4273
        %v4275 = vmul.f32 %v4273, %v4274
        %v4276 = vsub.f32 1.0, %v4275
        %v4277 = vmul.f32 %v4274, %v4276
        %v4278 = vadd.f32 %v4274, %v4277
        %vm4279 = vweird.f32 %v4273
        %vm4280 = vweird.f32 %v4274
        %vm4281 = vmor %vm4279, %vm4280
        %v4282 = vsel %vm4281, %v4274, %v4278
        %v4283 = vand.u32 2147483647, %v4273
        %vm4284 = vcmp.eq.f32.partialorder %v4283, 8.507059e+37
        %v4285 = vand.u32 %v4273, 2147483648
        %v4286 = vor.u32 1.1754944e-38, %v4285
        %v4287 = vsel %vm4284, %v4286, %v4282
        %v4288 = vmul.f32 %v4270, %v4287
        %s4289 = scalar_lea.vmem %s487, 24 [#allocation3]
        %4290 = vst.msk [vmem:[%s4289] sm:$0xff] %vm1148, %v4288
        %v4292 = vsel %vm1148, %v4198, 0
        %v4295 = vsel %vm1148, %v4288, 0
        %4297 = vmatpush.xpose.msra.mxu0 0.0
        %4298 = vmatpush.xpose.msra.mxu0 0.0
        %4299 = vmatpush.xpose.msra.mxu0 0.0
        %4300 = vmatpush.xpose.msra.mxu0 0.0
        %4301 = vmatpush.xpose.msra.mxu0 0.0
        %4302 = vmatpush.xpose.msra.mxu0 0.0
        %4303 = vmatpush.xpose.msra.mxu0 0.0
        %4304 = vmatpush.xpose.msra.mxu0 0.0
        %4305 = vmatpush.xpose.msra.mxu0 0.0
        %4306 = vmatpush.xpose.msra.mxu0 0.0
        %4307 = vmatpush.xpose.msra.mxu0 0.0
        %4308 = vmatpush.xpose.msra.mxu0 0.0
        %4309 = vmatpush.xpose.msra.mxu0 0.0
        %4310 = vmatpush.xpose.msra.mxu0 0.0
        %4311 = vmatpush.xpose.msra.mxu0 0.0
        %4312 = vmatpush.xpose.msra.mxu0 %v4295
        %4313 = vmatmul.f32.gmra.mxu0 %v4292
        %v4314 = vpop.f32.mrf.mxu0
        %v4315 = vadd.f32 0.0, %v4314
        %4316 = vdwg.mxu0
        %4317 = vst.msk [vmem:[#allocation2] sm:$0xff] %vm1148, %v4315
        %4318 = vxpose.xlu0.b32.start [1/16] %v3959, 128
        %4319 = vxpose.xlu0.b32.cont [2/16] 0.0, 128
        %4320 = vxpose.xlu0.b32.cont [3/16] 0.0, 128
        %4321 = vxpose.xlu0.b32.cont [4/16] 0.0, 128
        %4322 = vxpose.xlu0.b32.cont [5/16] 0.0, 128
        %4323 = vxpose.xlu0.b32.cont [6/16] 0.0, 128
        %4324 = vxpose.xlu0.b32.cont [7/16] 0.0, 128
        %4325 = vxpose.xlu0.b32.cont [8/16] 0.0, 128
        %4326 = vxpose.xlu0.b32.cont [9/16] 0.0, 128
        %4327 = vxpose.xlu0.b32.cont [10/16] 0.0, 128
        %4328 = vxpose.xlu0.b32.cont [11/16] 0.0, 128
        %4329 = vxpose.xlu0.b32.cont [12/16] 0.0, 128
        %4330 = vxpose.xlu0.b32.cont [13/16] 0.0, 128
        %4331 = vxpose.xlu0.b32.cont [14/16] 0.0, 128
        %4332 = vxpose.xlu0.b32.cont [15/16] 0.0, 128
        %4333 = vxpose.xlu0.b32.end [16/16] 0.0, 128
        %v4334 = vpop.trf.xlu0
        %v4335 = vpop.trf.xlu0
        %v4336 = vpop.trf.xlu0
        %v4337 = vpop.trf.xlu0
        %v4338 = vpop.trf.xlu0
        %v4339 = vpop.trf.xlu0
        %v4340 = vpop.trf.xlu0
        %v4341 = vpop.trf.xlu0
        %v4342 = vpop.trf.xlu0
        %v4343 = vpop.trf.xlu0
        %v4344 = vpop.trf.xlu0
        %v4345 = vpop.trf.xlu0
        %v4346 = vpop.trf.xlu0
        %v4347 = vpop.trf.xlu0
        %v4348 = vpop.trf.xlu0
        %v4349 = vpop.trf.xlu0
        %v4351 = vsel %vm1148, %v4334, 0
        %4353 = vmatpush.msra.mxu0 0.0
        %4354 = vmatpush.msra.mxu0 0.0
        %4355 = vmatpush.msra.mxu0 0.0
        %4356 = vmatpush.msra.mxu0 0.0
        %4357 = vmatpush.msra.mxu0 0.0
        %4358 = vmatpush.msra.mxu0 0.0
        %4359 = vmatpush.msra.mxu0 0.0
        %4360 = vmatpush.msra.mxu0 0.0
        %4361 = vmatpush.msra.mxu0 0.0
        %4362 = vmatpush.msra.mxu0 0.0
        %4363 = vmatpush.msra.mxu0 0.0
        %4364 = vmatpush.msra.mxu0 0.0
        %4365 = vmatpush.msra.mxu0 0.0
        %4366 = vmatpush.msra.mxu0 0.0
        %4367 = vmatpush.msra.mxu0 0.0
        %4368 = vmatpush.msra.mxu0 %v4080
        %4369 = vmatmul.f32.gmra.mxu0 %v4351
        %v4370 = vpop.f32.mrf.mxu0
        %v4371 = vadd.f32 0.0, %v4370
        %4372 = vdwg.mxu0
        %v4373 = vmul.f32 %v4371, 0.35355338
        %v4374 = vsel %vm1148, %v4373, -inf
        %4375 = vmax.xlane.f32.xlu0 %v4374
        %v4376 = vpop.xlane.xlu0 %4375
        %v4377 = vsub.f32 %v4373, %v4376
        %v4378 = vmul.f32 %v4377, 1.442695
        %v4379 = vpow.pop %v4378
        %v4380 = vsel %vm1148, %v4379, 0.0
        %4381 = vadd.xlane.f32.xlu0 %v4380
        %v4382 = vpop.xlane.xlu0 %4381
        %v4383 = vrcp.pop %v4382
        %v4384 = vmul.f32 %v4382, %v4383
        %v4385 = vsub.f32 1.0, %v4384
        %v4386 = vmul.f32 %v4383, %v4385
        %v4387 = vadd.f32 %v4383, %v4386
        %vm4388 = vweird.f32 %v4382
        %vm4389 = vweird.f32 %v4383
        %vm4390 = vmor %vm4388, %vm4389
        %v4391 = vsel %vm4390, %v4383, %v4387
        %v4392 = vand.u32 2147483647, %v4382
        %vm4393 = vcmp.eq.f32.partialorder %v4392, 8.507059e+37
        %v4394 = vand.u32 %v4382, 2147483648
        %v4395 = vor.u32 1.1754944e-38, %v4394
        %v4396 = vsel %vm4393, %v4395, %v4391
        %v4397 = vmul.f32 %v4379, %v4396
        %s4398 = scalar_lea.vmem %s487, 56 [#allocation3]
        %4399 = vst.msk [vmem:[%s4398] sm:$0xff] %vm1148, %v4397
        %v4401 = vsel %vm1148, %v4201, 0
        %v4404 = vsel %vm1148, %v4397, 0
        %4406 = vmatpush.xpose.msra.mxu0 0.0
        %4407 = vmatpush.xpose.msra.mxu0 0.0
        %4408 = vmatpush.xpose.msra.mxu0 0.0
        %4409 = vmatpush.xpose.msra.mxu0 0.0
        %4410 = vmatpush.xpose.msra.mxu0 0.0
        %4411 = vmatpush.xpose.msra.mxu0 0.0
        %4412 = vmatpush.xpose.msra.mxu0 0.0
        %4413 = vmatpush.xpose.msra.mxu0 0.0
        %4414 = vmatpush.xpose.msra.mxu0 0.0
        %4415 = vmatpush.xpose.msra.mxu0 0.0
        %4416 = vmatpush.xpose.msra.mxu0 0.0
        %4417 = vmatpush.xpose.msra.mxu0 0.0
        %4418 = vmatpush.xpose.msra.mxu0 0.0
        %4419 = vmatpush.xpose.msra.mxu0 0.0
        %4420 = vmatpush.xpose.msra.mxu0 0.0
        %4421 = vmatpush.xpose.msra.mxu0 %v4404
        %4422 = vmatmul.f32.gmra.mxu0 %v4401
        %v4423 = vpop.f32.mrf.mxu0
        %v4424 = vadd.f32 0.0, %v4423
        %4425 = vdwg.mxu0
        %4426 = vst.msk [vmem:[#allocation2 + $0x8] sm:$0xff] %vm1148, %v4424
        %4427 = vxpose.xlu0.b32.start [1/16] %v3962, 128
        %4428 = vxpose.xlu0.b32.cont [2/16] 0.0, 128
        %4429 = vxpose.xlu0.b32.cont [3/16] 0.0, 128
        %4430 = vxpose.xlu0.b32.cont [4/16] 0.0, 128
        %4431 = vxpose.xlu0.b32.cont [5/16] 0.0, 128
        %4432 = vxpose.xlu0.b32.cont [6/16] 0.0, 128
        %4433 = vxpose.xlu0.b32.cont [7/16] 0.0, 128
        %4434 = vxpose.xlu0.b32.cont [8/16] 0.0, 128
        %4435 = vxpose.xlu0.b32.cont [9/16] 0.0, 128
        %4436 = vxpose.xlu0.b32.cont [10/16] 0.0, 128
        %4437 = vxpose.xlu0.b32.cont [11/16] 0.0, 128
        %4438 = vxpose.xlu0.b32.cont [12/16] 0.0, 128
        %4439 = vxpose.xlu0.b32.cont [13/16] 0.0, 128
        %4440 = vxpose.xlu0.b32.cont [14/16] 0.0, 128
        %4441 = vxpose.xlu0.b32.cont [15/16] 0.0, 128
        %4442 = vxpose.xlu0.b32.end [16/16] 0.0, 128
        %v4443 = vpop.trf.xlu0
        %v4444 = vpop.trf.xlu0
        %v4445 = vpop.trf.xlu0
        %v4446 = vpop.trf.xlu0
        %v4447 = vpop.trf.xlu0
        %v4448 = vpop.trf.xlu0
        %v4449 = vpop.trf.xlu0
        %v4450 = vpop.trf.xlu0
        %v4451 = vpop.trf.xlu0
        %v4452 = vpop.trf.xlu0
        %v4453 = vpop.trf.xlu0
        %v4454 = vpop.trf.xlu0
        %v4455 = vpop.trf.xlu0
        %v4456 = vpop.trf.xlu0
        %v4457 = vpop.trf.xlu0
        %v4458 = vpop.trf.xlu0
        %v4460 = vsel %vm1148, %v4443, 0
        %4462 = vmatpush.msra.mxu0 0.0
        %4463 = vmatpush.msra.mxu0 0.0
        %4464 = vmatpush.msra.mxu0 0.0
        %4465 = vmatpush.msra.mxu0 0.0
        %4466 = vmatpush.msra.mxu0 0.0
        %4467 = vmatpush.msra.mxu0 0.0
        %4468 = vmatpush.msra.mxu0 0.0
        %4469 = vmatpush.msra.mxu0 0.0
        %4470 = vmatpush.msra.mxu0 0.0
        %4471 = vmatpush.msra.mxu0 0.0
        %4472 = vmatpush.msra.mxu0 0.0
        %4473 = vmatpush.msra.mxu0 0.0
        %4474 = vmatpush.msra.mxu0 0.0
        %4475 = vmatpush.msra.mxu0 0.0
        %4476 = vmatpush.msra.mxu0 0.0
        %4477 = vmatpush.msra.mxu0 %v4083
        %4478 = vmatmul.f32.gmra.mxu0 %v4460
        %v4479 = vpop.f32.mrf.mxu0
        %v4480 = vadd.f32 0.0, %v4479
        %4481 = vdwg.mxu0
        %v4482 = vmul.f32 %v4480, 0.35355338
        %v4483 = vsel %vm1148, %v4482, -inf
        %4484 = vmax.xlane.f32.xlu0 %v4483
        %v4485 = vpop.xlane.xlu0 %4484
        %v4486 = vsub.f32 %v4482, %v4485
        %v4487 = vmul.f32 %v4486, 1.442695
        %v4488 = vpow.pop %v4487
        %v4489 = vsel %vm1148, %v4488, 0.0
        %4490 = vadd.xlane.f32.xlu0 %v4489
        %v4491 = vpop.xlane.xlu0 %4490
        %v4492 = vrcp.pop %v4491
        %v4493 = vmul.f32 %v4491, %v4492
        %v4494 = vsub.f32 1.0, %v4493
        %v4495 = vmul.f32 %v4492, %v4494
        %v4496 = vadd.f32 %v4492, %v4495
        %vm4497 = vweird.f32 %v4491
        %vm4498 = vweird.f32 %v4492
        %vm4499 = vmor %vm4497, %vm4498
        %v4500 = vsel %vm4499, %v4492, %v4496
        %v4501 = vand.u32 2147483647, %v4491
        %vm4502 = vcmp.eq.f32.partialorder %v4501, 8.507059e+37
        %v4503 = vand.u32 %v4491, 2147483648
        %v4504 = vor.u32 1.1754944e-38, %v4503
        %v4505 = vsel %vm4502, %v4504, %v4500
        %v4506 = vmul.f32 %v4488, %v4505
        %s4507 = scalar_lea.vmem %s487, 88 [#allocation3]
        %4508 = vst.msk [vmem:[%s4507] sm:$0xff] %vm1148, %v4506
        %v4510 = vsel %vm1148, %v4204, 0
        %v4513 = vsel %vm1148, %v4506, 0
        %4515 = vmatpush.xpose.msra.mxu0 0.0
        %4516 = vmatpush.xpose.msra.mxu0 0.0
        %4517 = vmatpush.xpose.msra.mxu0 0.0
        %4518 = vmatpush.xpose.msra.mxu0 0.0
        %4519 = vmatpush.xpose.msra.mxu0 0.0
        %4520 = vmatpush.xpose.msra.mxu0 0.0
        %4521 = vmatpush.xpose.msra.mxu0 0.0
        %4522 = vmatpush.xpose.msra.mxu0 0.0
        %4523 = vmatpush.xpose.msra.mxu0 0.0
        %4524 = vmatpush.xpose.msra.mxu0 0.0
        %4525 = vmatpush.xpose.msra.mxu0 0.0
        %4526 = vmatpush.xpose.msra.mxu0 0.0
        %4527 = vmatpush.xpose.msra.mxu0 0.0
        %4528 = vmatpush.xpose.msra.mxu0 0.0
        %4529 = vmatpush.xpose.msra.mxu0 0.0
        %4530 = vmatpush.xpose.msra.mxu0 %v4513
        %4531 = vmatmul.f32.gmra.mxu0 %v4510
        %v4532 = vpop.f32.mrf.mxu0
        %v4533 = vadd.f32 0.0, %v4532
        %4534 = vdwg.mxu0
        %4535 = vst.msk [vmem:[#allocation2 + $0x10] sm:$0xff] %vm1148, %v4533
        %4536 = vxpose.xlu0.b32.start [1/16] %v3965, 128
        %4537 = vxpose.xlu0.b32.cont [2/16] 0.0, 128
        %4538 = vxpose.xlu0.b32.cont [3/16] 0.0, 128
        %4539 = vxpose.xlu0.b32.cont [4/16] 0.0, 128
        %4540 = vxpose.xlu0.b32.cont [5/16] 0.0, 128
        %4541 = vxpose.xlu0.b32.cont [6/16] 0.0, 128
        %4542 = vxpose.xlu0.b32.cont [7/16] 0.0, 128
        %4543 = vxpose.xlu0.b32.cont [8/16] 0.0, 128
        %4544 = vxpose.xlu0.b32.cont [9/16] 0.0, 128
        %4545 = vxpose.xlu0.b32.cont [10/16] 0.0, 128
        %4546 = vxpose.xlu0.b32.cont [11/16] 0.0, 128
        %4547 = vxpose.xlu0.b32.cont [12/16] 0.0, 128
        %4548 = vxpose.xlu0.b32.cont [13/16] 0.0, 128
        %4549 = vxpose.xlu0.b32.cont [14/16] 0.0, 128
        %4550 = vxpose.xlu0.b32.cont [15/16] 0.0, 128
        %4551 = vxpose.xlu0.b32.end [16/16] 0.0, 128
        %v4552 = vpop.trf.xlu0
        %v4553 = vpop.trf.xlu0
        %v4554 = vpop.trf.xlu0
        %v4555 = vpop.trf.xlu0
        %v4556 = vpop.trf.xlu0
        %v4557 = vpop.trf.xlu0
        %v4558 = vpop.trf.xlu0
        %v4559 = vpop.trf.xlu0
        %v4560 = vpop.trf.xlu0
        %v4561 = vpop.trf.xlu0
        %v4562 = vpop.trf.xlu0
        %v4563 = vpop.trf.xlu0
        %v4564 = vpop.trf.xlu0
        %v4565 = vpop.trf.xlu0
        %v4566 = vpop.trf.xlu0
        %v4567 = vpop.trf.xlu0
        %v4569 = vsel %vm1148, %v4552, 0
        %4571 = vmatpush.msra.mxu0 0.0
        %4572 = vmatpush.msra.mxu0 0.0
        %4573 = vmatpush.msra.mxu0 0.0
        %4574 = vmatpush.msra.mxu0 0.0
        %4575 = vmatpush.msra.mxu0 0.0
        %4576 = vmatpush.msra.mxu0 0.0
        %4577 = vmatpush.msra.mxu0 0.0
        %4578 = vmatpush.msra.mxu0 0.0
        %4579 = vmatpush.msra.mxu0 0.0
        %4580 = vmatpush.msra.mxu0 0.0
        %4581 = vmatpush.msra.mxu0 0.0
        %4582 = vmatpush.msra.mxu0 0.0
        %4583 = vmatpush.msra.mxu0 0.0
        %4584 = vmatpush.msra.mxu0 0.0
        %4585 = vmatpush.msra.mxu0 0.0
        %4586 = vmatpush.msra.mxu0 %v4086
        %4587 = vmatmul.f32.gmra.mxu0 %v4569
        %v4588 = vpop.f32.mrf.mxu0
        %v4589 = vadd.f32 0.0, %v4588
        %4590 = vdwg.mxu0
        %v4591 = vmul.f32 %v4589, 0.35355338
        %v4592 = vsel %vm1148, %v4591, -inf
        %4593 = vmax.xlane.f32.xlu0 %v4592
        %v4594 = vpop.xlane.xlu0 %4593
        %v4595 = vsub.f32 %v4591, %v4594
        %v4596 = vmul.f32 %v4595, 1.442695
        %v4597 = vpow.pop %v4596
        %v4598 = vsel %vm1148, %v4597, 0.0
        %4599 = vadd.xlane.f32.xlu0 %v4598
        %v4600 = vpop.xlane.xlu0 %4599
        %v4601 = vrcp.pop %v4600
        %v4602 = vmul.f32 %v4600, %v4601
        %v4603 = vsub.f32 1.0, %v4602
        %v4604 = vmul.f32 %v4601, %v4603
        %v4605 = vadd.f32 %v4601, %v4604
        %vm4606 = vweird.f32 %v4600
        %vm4607 = vweird.f32 %v4601
        %vm4608 = vmor %vm4606, %vm4607
        %v4609 = vsel %vm4608, %v4601, %v4605
        %v4610 = vand.u32 2147483647, %v4600
        %vm4611 = vcmp.eq.f32.partialorder %v4610, 8.507059e+37
        %v4612 = vand.u32 %v4600, 2147483648
        %v4613 = vor.u32 1.1754944e-38, %v4612
        %v4614 = vsel %vm4611, %v4613, %v4609
        %v4615 = vmul.f32 %v4597, %v4614
        %s4616 = scalar_lea.vmem %s487, 120 [#allocation3]
        %4617 = vst.msk [vmem:[%s4616] sm:$0xff] %vm1148, %v4615
        %v4619 = vsel %vm1148, %v4207, 0
        %v4622 = vsel %vm1148, %v4615, 0
        %4624 = vmatpush.xpose.msra.mxu0 0.0
        %4625 = vmatpush.xpose.msra.mxu0 0.0
        %4626 = vmatpush.xpose.msra.mxu0 0.0
        %4627 = vmatpush.xpose.msra.mxu0 0.0
        %4628 = vmatpush.xpose.msra.mxu0 0.0
        %4629 = vmatpush.xpose.msra.mxu0 0.0
        %4630 = vmatpush.xpose.msra.mxu0 0.0
        %4631 = vmatpush.xpose.msra.mxu0 0.0
        %4632 = vmatpush.xpose.msra.mxu0 0.0
        %4633 = vmatpush.xpose.msra.mxu0 0.0
        %4634 = vmatpush.xpose.msra.mxu0 0.0
        %4635 = vmatpush.xpose.msra.mxu0 0.0
        %4636 = vmatpush.xpose.msra.mxu0 0.0
        %4637 = vmatpush.xpose.msra.mxu0 0.0
        %4638 = vmatpush.xpose.msra.mxu0 0.0
        %4639 = vmatpush.xpose.msra.mxu0 %v4622
        %4640 = vmatmul.f32.gmra.mxu0 %v4619
        %v4641 = vpop.f32.mrf.mxu0
        %v4642 = vadd.f32 0.0, %v4641
        %4643 = vdwg.mxu0
        %4644 = vst.msk [vmem:[#allocation2 + $0x18] sm:$0xff] %vm1148, %v4642
        %v4645 = vld [vmem:[#allocation2] sm:$0xff]
        %v4646 = vld [vmem:[#allocation2 + $0x8] sm:$0xff]
        %v4647 = vld [vmem:[#allocation2 + $0x10] sm:$0xff]
        %v4648 = vld [vmem:[#allocation2 + $0x18] sm:$0xff]
        %4649 = vmatpush.msra.mxu0 0.0
        %4650 = vmatpush.msra.mxu0 0.0
        %4651 = vmatpush.msra.mxu0 0.0
        %4652 = vmatpush.msra.mxu0 0.0
        %4653 = vmatpush.msra.mxu0 0.0
        %4654 = vmatpush.msra.mxu0 0.0
        %4655 = vmatpush.msra.mxu0 0.0
        %4656 = vmatpush.msra.mxu0 0.0
        %4657 = vmatpush.msra.mxu0 0.0
        %4658 = vmatpush.msra.mxu0 0.0
        %4659 = vmatpush.msra.mxu0 0.0
        %4660 = vmatpush.msra.mxu0 0.0
        %4661 = vmatpush.msra.mxu0 %v4648
        %4662 = vmatpush.msra.mxu0 %v4647
        %4663 = vmatpush.msra.mxu0 %v4646
        %4664 = vmatpush.msra.mxu0 %v4645
        %4665 = vmatmul.f32.gmra.mxu0 %v1577
        %v4666 = vpop.f32.mrf.mxu0
        %v4667 = vadd.f32 %v1559, %v4666
        %4668 = vmatmul.f32.gmra.mxu0 %v1580
        %v4669 = vpop.f32.mrf.mxu0
        %v4670 = vadd.f32 %v1564, %v4669
        %4671 = vmatmul.f32.gmra.mxu0 %v1583
        %v4672 = vpop.f32.mrf.mxu0
        %v4673 = vadd.f32 %v1569, %v4672
        %4674 = vmatmul.f32.gmra.mxu0 %v1586
        %v4675 = vpop.f32.mrf.mxu0
        %v4676 = vadd.f32 %v1574, %v4675
        %4677 = vdwg.mxu0
        %v4682 = vrot.slane %v4667, 1
        %v4683 = vrot.slane %v4667, 2
        %v4684 = vrot.slane %v4667, 3
        %v4685 = vrot.slane %v4667, 4
        %v4686 = vrot.slane %v4667, 5
        %v4687 = vrot.slane %v4667, 6
        %v4688 = vrot.slane %v4667, 7
        %v4689 = vrot.slane %v4670, 1
        %v4690 = vrot.slane %v4670, 2
        %v4691 = vrot.slane %v4670, 3
        %v4692 = vrot.slane %v4670, 4
        %v4693 = vrot.slane %v4670, 5
        %v4694 = vrot.slane %v4670, 6
        %v4695 = vrot.slane %v4670, 7
        %v4696 = vrot.slane %v4673, 1
        %v4697 = vrot.slane %v4673, 2
        %v4698 = vrot.slane %v4673, 3
        %v4699 = vrot.slane %v4673, 4
        %v4700 = vrot.slane %v4673, 5
        %v4701 = vrot.slane %v4673, 6
        %v4702 = vrot.slane %v4673, 7
        %v4703 = vrot.slane %v4676, 1
        %v4704 = vrot.slane %v4676, 2
        %v4705 = vrot.slane %v4676, 3
        %v4706 = vrot.slane %v4676, 4
        %v4707 = vrot.slane %v4676, 5
        %v4708 = vrot.slane %v4676, 6
        %v4709 = vrot.slane %v4676, 7
        %4738 = vst.msk [vmem:[%s519 + $0x3] sm:$0x1] %vm1677, %v4667
        %4739 = vst.msk [vmem:[%s519 + $0x7] sm:$0x1] %vm1677, %v4682
        %4740 = vst.msk [vmem:[%s519 + $0xb] sm:$0x1] %vm1677, %v4683
        %4741 = vst.msk [vmem:[%s519 + $0xf] sm:$0x1] %vm1677, %v4684
        %4742 = vst.msk [vmem:[%s519 + $0x13] sm:$0x1] %vm1677, %v4685
        %4743 = vst.msk [vmem:[%s519 + $0x17] sm:$0x1] %vm1677, %v4686
        %4744 = vst.msk [vmem:[%s519 + $0x1b] sm:$0x1] %vm1677, %v4687
        %4745 = vst.msk [vmem:[%s519 + $0x1f] sm:$0x1] %vm1677, %v4688
        %4746 = vst.msk [vmem:[%s519 + $0x23] sm:$0x1] %vm1677, %v4670
        %4747 = vst.msk [vmem:[%s519 + $0x27] sm:$0x1] %vm1677, %v4689
        %4748 = vst.msk [vmem:[%s519 + $0x2b] sm:$0x1] %vm1677, %v4690
        %4749 = vst.msk [vmem:[%s519 + $0x2f] sm:$0x1] %vm1677, %v4691
        %4750 = vst.msk [vmem:[%s519 + $0x33] sm:$0x1] %vm1677, %v4692
        %4751 = vst.msk [vmem:[%s519 + $0x37] sm:$0x1] %vm1677, %v4693
        %4752 = vst.msk [vmem:[%s519 + $0x3b] sm:$0x1] %vm1677, %v4694
        %4753 = vst.msk [vmem:[%s519 + $0x3f] sm:$0x1] %vm1677, %v4695
        %4754 = vst.msk [vmem:[%s519 + $0x43] sm:$0x1] %vm1677, %v4673
        %4755 = vst.msk [vmem:[%s519 + $0x47] sm:$0x1] %vm1677, %v4696
        %4756 = vst.msk [vmem:[%s519 + $0x4b] sm:$0x1] %vm1677, %v4697
        %4757 = vst.msk [vmem:[%s519 + $0x4f] sm:$0x1] %vm1677, %v4698
        %4758 = vst.msk [vmem:[%s519 + $0x53] sm:$0x1] %vm1677, %v4699
        %4759 = vst.msk [vmem:[%s519 + $0x57] sm:$0x1] %vm1677, %v4700
        %4760 = vst.msk [vmem:[%s519 + $0x5b] sm:$0x1] %vm1677, %v4701
        %4761 = vst.msk [vmem:[%s519 + $0x5f] sm:$0x1] %vm1677, %v4702
        %4762 = vst.msk [vmem:[%s519 + $0x63] sm:$0x1] %vm1677, %v4676
        %4763 = vst.msk [vmem:[%s519 + $0x67] sm:$0x1] %vm1677, %v4703
        %4764 = vst.msk [vmem:[%s519 + $0x6b] sm:$0x1] %vm1677, %v4704
        %4765 = vst.msk [vmem:[%s519 + $0x6f] sm:$0x1] %vm1677, %v4705
        %4766 = vst.msk [vmem:[%s519 + $0x73] sm:$0x1] %vm1677, %v4706
        %4767 = vst.msk [vmem:[%s519 + $0x77] sm:$0x1] %vm1677, %v4707
        %4768 = vst.msk [vmem:[%s519 + $0x7b] sm:$0x1] %vm1677, %v4708
        %4769 = vst.msk [vmem:[%s519 + $0x7f] sm:$0x1] %vm1677, %v4709
        %p4770 = scmp.lt.s32.totalorder %s31, 1
        %s4771 = scalar_select %p4770, %s31, 1
        %p4772 = scmp.lt.s32.totalorder %s32, 0
        %s4773 = scalar_select %p4772, %s32, 0
        %s4774 = smul.addr %s4771, 32
        %s4775 = sadd.s32 %s4773, %s4774
        %s4776 = smul.addr %s4775, 4
        %s4777 = scalar_lea.vmem %s11, %s4776
        %s4778 = sand.u32 %s329, 1
        %s4779 = scalar_lea.sflag [#allocation4], %s4778
        %s4780 = sand.u32 %s329, 1
        %s4781 = smul.addr %s4780, 128
        %s4782 = scalar_lea.vmem [#allocation3], %s4781
        // Predicated region
        $region65: #{multihead_attention_forward.1} parent=63 // pred_check
          %p4783 = pneg %p311
        $region66: #{multihead_attention_forward.1} parent=63 // pred_check_branch
          %4785 = sbr.rel (%p4783) target = $region68
        $region67: #{multihead_attention_forward.1} parent=63 // pred_region
          _
        $region68: #{multihead_attention_forward.1} parent=63 // pred_fallthru
          _
        // Predicated region
        $region69: #{multihead_attention_forward.1} parent=63 // pred_check
          %p4786 = pneg %p339
        $region70: #{multihead_attention_forward.1} parent=63 // pred_check_branch
          %4788 = sbr.rel (%p4786) target = $region72
        $region71: #{multihead_attention_forward.1} parent=63 // pred_region
          %s4789 = smul.u32 4, %s32
          %4791 = vsyncadd %s4779, 0
          %s4792 = smul.addr %s31, 16
          %s4793 = sadd.s32 %s4789, %s4792
          %s4794 = smul.addr %s4793, 8
          %s4795 = scalar_lea.hbm %s12, %s4794
          %s4796 = sshll.u32 %s4782, 4
          %s4797 = int_to_ptr.vmem [resolvable:$true] %s4796
          %s4798 = sshll.u32 %s4795, 4
          %s4799 = int_to_ptr.hbm [resolvable:$true] %s4798
          %4804 = dma.vmem_to_hbm [thread:$0]  %s4797, 2048, %s4799, %s4779, 128, 128, 8
        $region72: #{multihead_attention_forward.1} parent=63 // pred_fallthru
          _
      $region64: #{multihead_attention_forward.1} parent=5 // pred_fallthru
        _
      %p4805 = scmp.le.s32.totalorder 2, %s22
      // Predicated region
      $region73: #{multihead_attention_forward.1} parent=5 // pred_check
        %p4806 = pneg %p4805
      $region74: #{multihead_attention_forward.1} parent=5 // pred_check_branch
        %4808 = sbr.rel (%p4806) target = $region76
      $region75: #{multihead_attention_forward.1} parent=5 // pred_region
        %s4809 = ssub.s32 %s22, 2
        // Predicated region
        $region77: #{multihead_attention_forward.1} parent=75 // pred_check
          %p4810 = pneg %p317
        $region78: #{multihead_attention_forward.1} parent=75 // pred_check_branch
          %4812 = sbr.rel (%p4810) target = $region80
        $region79: #{multihead_attention_forward.1} parent=75 // pred_region
          %p4813 = scmp.lt.s32.totalorder %s33, 1
          %s4814 = scalar_select %p4813, %s33, 1
          %p4815 = scmp.lt.s32.totalorder %s34, 0
          %s4816 = scalar_select %p4815, %s34, 0
          %s4817 = smul.addr %s4814, 32
          %s4818 = sadd.s32 %s4816, %s4817
          %s4819 = smul.addr %s4818, 4
          %s4820 = scalar_lea.vmem %s11, %s4819
        $region80: #{multihead_attention_forward.1} parent=75 // pred_fallthru
          _
        // Predicated region
        $region81: #{multihead_attention_forward.1} parent=75 // pred_check
          %p4821 = pneg %p345
        $region82: #{multihead_attention_forward.1} parent=75 // pred_check_branch
          %4823 = sbr.rel (%p4821) target = $region84
        $region83: #{multihead_attention_forward.1} parent=75 // pred_region
          %s4824 = sand.u32 %s330, 1
          %s4825 = scalar_lea.sflag [#allocation4], %s4824
          %s4826 = sand.u32 %s330, 1
          %s4827 = smul.addr %s4826, 128
          %s4828 = scalar_lea.vmem [#allocation3], %s4827
          %4830 = dma.done %s4825, 2048
        $region84: #{multihead_attention_forward.1} parent=75 // pred_fallthru
          _
      $region76: #{multihead_attention_forward.1} parent=5 // pred_fallthru
        _
    $region6: #{multihead_attention_forward.1} parent=1 // loop_footer
      %s26 = sadd.s32 1, %s22
    $region7: #{multihead_attention_forward.1} parent=1 // loop_footer_branch
      %21 = sbr.rel target = $region3
    $region8: #{multihead_attention_forward.1} parent=1 // loop_exit
      _
    %4831 = vsyncpa [#allocation4], 1
    %s4832 = scalar_lea.sflag [#allocation4], 1
    %4833 = vsyncpa %s4832, 1

</llo_original>
